<compile_context>
chip_gen: v7x
topology: tpu7x:2x2x1
jax: 0.10.0
libtpu: 0.0.40
codegen_flags: <defaults>
</compile_context>

<pallas_src>
import functools

import jax
import jax.numpy as jnp
from jax.experimental import pallas as pl
from jax.experimental.pallas import tpu as pltpu


def _window_attention_kernel(x_ref, wqkv_ref, bqkv_ref, wproj_ref, bproj_ref,
                             o_ref, *, num_windows, window_len, num_heads,
                             scale, compute_dtype, approx_recip):
    """One grid step processes `num_windows` windows at once.

    x_ref    : (num_windows*window_len, C)  flattened window tokens (compute dtype)
    wqkv_ref : (3, C, C)   pre-split q/k/v weights, x @ W layout (compute dtype)
    bqkv_ref : (3, 1, C)   pre-split q/k/v biases (f32)
    wproj_ref: (C, C)      output projection weight, x @ W layout (compute dtype)
    bproj_ref: (1, C)      output projection bias (f32)
    o_ref    : (num_windows*window_len, C)
    """
    BN, C = x_ref.shape
    B = num_windows
    N = window_len
    hd = C // num_heads

    x = x_ref[...]                                               # (BN, C)

    # Q/K/V projections: three (BN, C) @ (C, C) MXU matmuls, f32 accumulation.
    q = jnp.dot(x, wqkv_ref[0], preferred_element_type=jnp.float32) + bqkv_ref[0]
    k = jnp.dot(x, wqkv_ref[1], preferred_element_type=jnp.float32) + bqkv_ref[1]
    v = jnp.dot(x, wqkv_ref[2], preferred_element_type=jnp.float32) + bqkv_ref[2]
    q = q * scale                                                # (BN, C) f32

    acc = jnp.zeros((BN, C), dtype=jnp.float32)

    for h in range(num_heads):                                   # static unroll
        lo, hi = h * hd, (h + 1) * hd
        q_h = q[:, lo:hi].reshape(B, N, hd)
        k_h = k[:, lo:hi].reshape(B, N, hd)
        v_h = v[:, lo:hi].reshape(B, N, hd)

        # Batched q @ k^T contracting the last axis of BOTH operands
        # (no explicit transpose of k).
        s = jnp.einsum('bqd,bkd->bqk',
                       q_h.astype(compute_dtype), k_h.astype(compute_dtype),
                       preferred_element_type=jnp.float32)       # (B, N, N) f32

        # Numerically-stable softmax, all in f32.
        s = s - jnp.max(s, axis=-1, keepdims=True)
        p = jnp.exp(s)
        denom = jnp.sum(p, axis=-1, keepdims=True)
        if approx_recip:
            # EUP approximate reciprocal (separate bundle slot) for the bf16 path.
            p = p * pl.reciprocal(denom, approx=True)
        else:
            # Exact divide in the f32 path so the result matches the reference
            # to within matmul rounding.
            p = p / denom

        ctx_h = jnp.einsum('bqk,bkd->bqd',
                           p.astype(compute_dtype), v_h.astype(compute_dtype),
                           preferred_element_type=jnp.float32)   # (B, N, hd)
        ctx_h = ctx_h.reshape(BN, hd)

        # Fold this head straight into the output projection instead of
        # concatenating heads along lanes: sublane-row slices of Wproj at
        # multiples of 8 are free.
        acc = acc + jnp.dot(ctx_h.astype(compute_dtype),
                            wproj_ref[lo:hi, :],
                            preferred_element_type=jnp.float32)

    out = acc + bproj_ref[...]                                   # (BN, C)
    o_ref[...] = out.astype(o_ref.dtype)


def window_attention(x, wqkv, bqkv, wproj, bproj, *, num_heads,
                     windows_per_step=None, compute_dtype=jnp.float32):
    """x: (B_, N, C).  wqkv: (C, 3C), bqkv: (1, 3C), wproj: (C, C), bproj: (1, C),
    all in `x @ W` layout (i.e. transpose of nn.Linear.weight)."""
    B_, N, C = x.shape
    assert C % num_heads == 0
    hd = C // num_heads
    scale = hd ** (-0.5)

    # Default: 2 grid steps so both v7x TensorCores get work; on v5e/v6e the
    # extra step costs ~0.35 us. Set windows_per_step=B_ for a single step.
    if windows_per_step is None:
        windows_per_step = B_ // 2 if (B_ % 2 == 0 and B_ >= 2) else B_
    assert B_ % windows_per_step == 0, "B_ must be divisible by windows_per_step"
    grid = (B_ // windows_per_step,)
    BN = windows_per_step * N

    # Exact softmax divide for f32; EUP approximate reciprocal only when the
    # matmul operands are already low precision (bf16).
    approx_recip = jnp.dtype(compute_dtype) != jnp.dtype(jnp.float32)

    # Pre-split fused qkv weights so the kernel never slices at lane offsets
    # 0 / C / 2C of a fused (., 3C) result.
    wqkv3 = wqkv.reshape(C, 3, C).transpose(1, 0, 2).astype(compute_dtype)   # (3, C, C)
    bqkv3 = bqkv.reshape(1, 3, C).transpose(1, 0, 2).astype(jnp.float32)     # (3, 1, C)
    wproj_in = wproj.astype(compute_dtype)                                   # (C, C)
    bproj_in = bproj.reshape(1, C).astype(jnp.float32)                       # (1, C)

    # Free metadata reshape: windows flattened onto the sublane axis.
    x_in = x.reshape(B_ * N, C).astype(compute_dtype)                        # (B_*N, C)

    kernel = functools.partial(
        _window_attention_kernel,
        num_windows=windows_per_step, window_len=N, num_heads=num_heads,
        scale=scale, compute_dtype=compute_dtype, approx_recip=approx_recip)

    itemsize = jnp.dtype(compute_dtype).itemsize
    flops = (2 * B_ * N * C * 3 * C                      # qkv projections
             + 4 * B_ * num_heads * N * N * hd           # q@k^T and attn@v
             + 2 * B_ * N * C * C)                       # output projection
    bytes_accessed = ((B_ * N * C) * itemsize            # x in
                      + (B_ * N * C) * jnp.dtype(x.dtype).itemsize   # out
                      + (3 * C * C + C * C) * itemsize   # weights
                      + (3 * C + C) * 4)                 # biases (f32)
    cost = pl.CostEstimate(flops=flops,
                           transcendentals=B_ * num_heads * N * N,
                           bytes_accessed=bytes_accessed)

    out2d = pl.pallas_call(
        kernel,
        out_shape=jax.ShapeDtypeStruct((B_ * N, C), x.dtype),
        grid_spec=pltpu.PrefetchScalarGridSpec(
            num_scalar_prefetch=0,
            grid=grid,
            in_specs=[
                pl.BlockSpec((BN, C), lambda b: (b, 0)),        # x slab
                pl.BlockSpec((3, C, C), lambda b: (0, 0, 0)),   # qkv weights
                pl.BlockSpec((3, 1, C), lambda b: (0, 0, 0)),   # qkv biases
                pl.BlockSpec((C, C), lambda b: (0, 0)),         # proj weight
                pl.BlockSpec((1, C), lambda b: (0, 0)),         # proj bias
            ],
            out_specs=pl.BlockSpec((BN, C), lambda b: (b, 0)),
        ),
        compiler_params=pltpu.CompilerParams(
            dimension_semantics=("parallel",)),
        cost_estimate=cost,
    )(x_in, wqkv3, bqkv3, wproj_in, bproj_in)

    return out2d.reshape(B_, N, C)


def reference_window_attention(x, wqkv, bqkv, wproj, bproj, *, num_heads):
    """Pure-JAX reference mirroring the PyTorch forward exactly.

    Matmuls pinned to Precision.HIGHEST so the f32 comparison is not polluted
    by XLA's default (lower-precision) TPU matmul algorithm.
    """
    B_, N, C = x.shape
    head_dim = C // num_heads
    scale = head_dim ** (-0.5)
    hp = jax.lax.Precision.HIGHEST
    qkv = jnp.dot(x, wqkv, precision=hp) + bqkv              # (B_, N, 3C)
    qkv = qkv.reshape(B_, N, 3, num_heads, head_dim).transpose(2, 0, 3, 1, 4)
    q, k, v = qkv[0], qkv[1], qkv[2]                          # (B_, H, N, hd)
    q = q * scale
    attn = jnp.einsum('bhqd,bhkd->bhqk', q, k, precision=hp)
    attn = jax.nn.softmax(attn, axis=-1)
    out = jnp.einsum('bhqk,bhkd->bhqd', attn, v, precision=hp)  # (B_, H, N, hd)
    out = out.transpose(0, 2, 1, 3).reshape(B_, N, C)
    return jnp.dot(out, wproj, precision=hp) + bproj


if __name__ == "__main__":
    # Module config: dim=32, window_size=(4,4) -> N=16, num_heads=4, qkv_bias=True
    dim = 32
    window_size = (4, 4)
    num_heads = 4
    N = window_size[0] * window_size[1]
    B_ = 8                                                   # num_windows * batch

    key = jax.random.PRNGKey(0)
    kx, kw1, kb1, kw2, kb2 = jax.random.split(key, 5)

    x = jax.random.normal(kx, (B_, N, dim), dtype=jnp.float32)
    # nn.Linear(dim, 3*dim): weight (3*dim, dim); stored transposed for x @ W.
    wqkv = jax.random.normal(kw1, (dim, 3 * dim), dtype=jnp.float32) * 0.05
    bqkv = jax.random.normal(kb1, (1, 3 * dim), dtype=jnp.float32) * 0.05
    # nn.Linear(dim, dim): weight (dim, dim), stored transposed.
    wproj = jax.random.normal(kw2, (dim, dim), dtype=jnp.float32) * 0.05
    bproj = jax.random.normal(kb2, (1, dim), dtype=jnp.float32) * 0.05

    ref = reference_window_attention(x, wqkv, bqkv, wproj, bproj,
                                     num_heads=num_heads)

    # f32 matmul path (v5e-friendly default). Tolerance covers MXU f32
    # rounding (O(1e-3)) while still catching logic errors (O(1e-1)).
    out = window_attention(x, wqkv, bqkv, wproj, bproj, num_heads=num_heads)
    out = jax.block_until_ready(out)
    assert out.shape == (B_, N, dim)
    assert jnp.allclose(out, ref, atol=5e-3, rtol=5e-3), "f32 mismatch vs reference"

    # bf16 matmul operands (v6e / v7x MXU path); softmax & accumulation stay f32.
    out_bf16 = window_attention(x, wqkv, bqkv, wproj, bproj,
                                num_heads=num_heads,
                                compute_dtype=jnp.bfloat16)
    out_bf16 = jax.block_until_ready(out_bf16)
    assert out_bf16.shape == (B_, N, dim)
    assert jnp.allclose(out_bf16, ref, atol=5e-2, rtol=5e-2), "bf16 mismatch vs reference"

    print("KERNEL_OK")
</pallas_src>

<mosaic_0001>
module attributes {stable_mosaic.version = 11 : i64} {
  func.func @_window_attention_kernel(%arg0: i32, %arg1: memref<64x32xf32, #tpu.memory_space<vmem>>, %arg2: memref<3x32x32xf32, #tpu.memory_space<vmem>>, %arg3: memref<3x1x32xf32, #tpu.memory_space<vmem>>, %arg4: memref<32x32xf32, #tpu.memory_space<vmem>>, %arg5: memref<1x32xf32, #tpu.memory_space<vmem>>, %arg6: memref<64x32xf32, #tpu.memory_space<vmem>>) attributes {dimension_semantics = [#tpu.dimension_semantics<parallel>], iteration_bounds = array<i64: 2>, scalar_prefetch = 0 : i64, scratch_operands = 0 : i64, tpu.core_type = #tpu.core_type<tc>, window_params = [{transform_indices = @transform_0, window_bounds = array<i64: 64, 32>}, {pipeline_mode = #tpu.pipeline_mode<synchronous>, transform_indices = @transform_1, window_bounds = array<i64: 3, 32, 32>}, {pipeline_mode = #tpu.pipeline_mode<synchronous>, transform_indices = @transform_2, window_bounds = array<i64: 3, 1, 32>}, {pipeline_mode = #tpu.pipeline_mode<synchronous>, transform_indices = @transform_3, window_bounds = array<i64: 32, 32>}, {pipeline_mode = #tpu.pipeline_mode<synchronous>, transform_indices = @transform_4, window_bounds = array<i64: 1, 32>}, {transform_indices = @transform_5, window_bounds = array<i64: 64, 32>}]} {
    %c0 = arith.constant 0 : index
    %c0_0 = arith.constant 0 : index
    %0 = vector.load %arg1[%c0, %c0_0] : memref<64x32xf32, #tpu.memory_space<vmem>>, vector<64x32xf32>
    %c0_1 = arith.constant 0 : index
    %c0_2 = arith.constant 0 : index
    %c0_3 = arith.constant 0 : index
    %1 = vector.load %arg2[%c0_1, %c0_2, %c0_3] : memref<3x32x32xf32, #tpu.memory_space<vmem>>, vector<1x32x32xf32>
    %2 = vector.shape_cast %1 : vector<1x32x32xf32> to vector<32x32xf32>
    %cst = arith.constant dense<0.000000e+00> : vector<64x32xf32>
    %3 = tpu.matmul %0, %2, %cst {dimension_numbers = #tpu.dot_dimension_numbers<[1], [0], [0], [1], [0, 0, 1, 1], [], []>} : vector<64x32xf32>, vector<32x32xf32>, vector<64x32xf32> -> vector<64x32xf32>
    %c0_4 = arith.constant 0 : index
    %c0_5 = arith.constant 0 : index
    %c0_6 = arith.constant 0 : index
    %4 = vector.load %arg3[%c0_4, %c0_5, %c0_6] : memref<3x1x32xf32, #tpu.memory_space<vmem>>, vector<1x1x32xf32>
    %5 = vector.shape_cast %4 : vector<1x1x32xf32> to vector<1x32xf32>
    %6 = vector.broadcast %5 : vector<1x32xf32> to vector<64x32xf32>
    %7 = arith.addf %3, %6 : vector<64x32xf32>
    %c1 = arith.constant 1 : index
    %c0_7 = arith.constant 0 : index
    %c0_8 = arith.constant 0 : index
    %8 = vector.load %arg2[%c1, %c0_7, %c0_8] : memref<3x32x32xf32, #tpu.memory_space<vmem>>, vector<1x32x32xf32>
    %9 = vector.shape_cast %8 : vector<1x32x32xf32> to vector<32x32xf32>
    %cst_9 = arith.constant dense<0.000000e+00> : vector<64x32xf32>
    %10 = tpu.matmul %0, %9, %cst_9 {dimension_numbers = #tpu.dot_dimension_numbers<[1], [0], [0], [1], [0, 0, 1, 1], [], []>} : vector<64x32xf32>, vector<32x32xf32>, vector<64x32xf32> -> vector<64x32xf32>
    %c1_10 = arith.constant 1 : index
    %c0_11 = arith.constant 0 : index
    %c0_12 = arith.constant 0 : index
    %11 = vector.load %arg3[%c1_10, %c0_11, %c0_12] : memref<3x1x32xf32, #tpu.memory_space<vmem>>, vector<1x1x32xf32>
    %12 = vector.shape_cast %11 : vector<1x1x32xf32> to vector<1x32xf32>
    %13 = vector.broadcast %12 : vector<1x32xf32> to vector<64x32xf32>
    %14 = arith.addf %10, %13 : vector<64x32xf32>
    %c2 = arith.constant 2 : index
    %c0_13 = arith.constant 0 : index
    %c0_14 = arith.constant 0 : index
    %15 = vector.load %arg2[%c2, %c0_13, %c0_14] : memref<3x32x32xf32, #tpu.memory_space<vmem>>, vector<1x32x32xf32>
    %16 = vector.shape_cast %15 : vector<1x32x32xf32> to vector<32x32xf32>
    %cst_15 = arith.constant dense<0.000000e+00> : vector<64x32xf32>
    %17 = tpu.matmul %0, %16, %cst_15 {dimension_numbers = #tpu.dot_dimension_numbers<[1], [0], [0], [1], [0, 0, 1, 1], [], []>} : vector<64x32xf32>, vector<32x32xf32>, vector<64x32xf32> -> vector<64x32xf32>
    %c2_16 = arith.constant 2 : index
    %c0_17 = arith.constant 0 : index
    %c0_18 = arith.constant 0 : index
    %18 = vector.load %arg3[%c2_16, %c0_17, %c0_18] : memref<3x1x32xf32, #tpu.memory_space<vmem>>, vector<1x1x32xf32>
    %19 = vector.shape_cast %18 : vector<1x1x32xf32> to vector<1x32xf32>
    %20 = vector.broadcast %19 : vector<1x32xf32> to vector<64x32xf32>
    %21 = arith.addf %17, %20 : vector<64x32xf32>
    %cst_19 = arith.constant 0.353553385 : f32
    %22 = vector.broadcast %cst_19 : f32 to vector<64x32xf32>
    %23 = arith.mulf %7, %22 : vector<64x32xf32>
    %cst_20 = arith.constant 0.000000e+00 : f32
    %24 = vector.broadcast %cst_20 : f32 to vector<64x32xf32>
    %25 = vector.extract_strided_slice %23 {offsets = [0, 0], sizes = [64, 8], strides = [1, 1]} : vector<64x32xf32> to vector<64x8xf32>
    %26 = vector.shape_cast %25 : vector<64x8xf32> to vector<4x16x8xf32>
    %27 = vector.extract_strided_slice %14 {offsets = [0, 0], sizes = [64, 8], strides = [1, 1]} : vector<64x32xf32> to vector<64x8xf32>
    %28 = vector.shape_cast %27 : vector<64x8xf32> to vector<4x16x8xf32>
    %29 = vector.extract_strided_slice %21 {offsets = [0, 0], sizes = [64, 8], strides = [1, 1]} : vector<64x32xf32> to vector<64x8xf32>
    %30 = vector.shape_cast %29 : vector<64x8xf32> to vector<4x16x8xf32>
    "tpu.trace_start"() <{level = 10 : i32, message = "bqd,bkd->bqk"}> : () -> ()
    %cst_21 = arith.constant dense<0.000000e+00> : vector<4x16x16xf32>
    %31 = tpu.matmul %26, %28, %cst_21 {dimension_numbers = #tpu.dot_dimension_numbers<[2], [2], [1], [1], [0, 0, 0, 1, 1, 1], [0], [0]>} : vector<4x16x8xf32>, vector<4x16x8xf32>, vector<4x16x16xf32> -> vector<4x16x16xf32>
    "tpu.trace_stop"() : () -> ()
    %cst_22 = arith.constant dense<0xFF800000> : vector<4x16xf32>
    %32 = vector.multi_reduction <maximumf>, %31, %cst_22 [2] : vector<4x16x16xf32> to vector<4x16xf32>
    %33 = vector.shape_cast %32 : vector<4x16xf32> to vector<4x16x1xf32>
    %34 = vector.broadcast %33 : vector<4x16x1xf32> to vector<4x16x16xf32>
    %35 = arith.subf %31, %34 : vector<4x16x16xf32>
    %36 = math.exp %35 : vector<4x16x16xf32>
    %cst_23 = arith.constant dense<0.000000e+00> : vector<4x16xf32>
    %37 = vector.multi_reduction <add>, %36, %cst_23 [2] : vector<4x16x16xf32> to vector<4x16xf32>
    %38 = vector.shape_cast %37 : vector<4x16xf32> to vector<4x16x1xf32>
    %39 = vector.broadcast %38 : vector<4x16x1xf32> to vector<4x16x16xf32>
    %40 = arith.divf %36, %39 : vector<4x16x16xf32>
    "tpu.trace_start"() <{level = 10 : i32, message = "bqk,bkd->bqd"}> : () -> ()
    %cst_24 = arith.constant dense<0.000000e+00> : vector<4x16x8xf32>
    %41 = tpu.matmul %40, %30, %cst_24 {dimension_numbers = #tpu.dot_dimension_numbers<[2], [1], [1], [2], [0, 0, 0, 1, 1, 2], [0], [0]>} : vector<4x16x16xf32>, vector<4x16x8xf32>, vector<4x16x8xf32> -> vector<4x16x8xf32>
    "tpu.trace_stop"() : () -> ()
    %42 = vector.shape_cast %41 : vector<4x16x8xf32> to vector<64x8xf32>
    %c0_25 = arith.constant 0 : index
    %c0_26 = arith.constant 0 : index
    %43 = vector.load %arg4[%c0_25, %c0_26] : memref<32x32xf32, #tpu.memory_space<vmem>>, vector<8x32xf32>
    %cst_27 = arith.constant dense<0.000000e+00> : vector<64x32xf32>
    %44 = tpu.matmul %42, %43, %cst_27 {dimension_numbers = #tpu.dot_dimension_numbers<[1], [0], [0], [1], [0, 0, 1, 1], [], []>} : vector<64x8xf32>, vector<8x32xf32>, vector<64x32xf32> -> vector<64x32xf32>
    %45 = arith.addf %24, %44 : vector<64x32xf32>
    %46 = vector.extract_strided_slice %23 {offsets = [0, 8], sizes = [64, 8], strides = [1, 1]} : vector<64x32xf32> to vector<64x8xf32>
    %47 = vector.shape_cast %46 : vector<64x8xf32> to vector<4x16x8xf32>
    %48 = vector.extract_strided_slice %14 {offsets = [0, 8], sizes = [64, 8], strides = [1, 1]} : vector<64x32xf32> to vector<64x8xf32>
    %49 = vector.shape_cast %48 : vector<64x8xf32> to vector<4x16x8xf32>
    %50 = vector.extract_strided_slice %21 {offsets = [0, 8], sizes = [64, 8], strides = [1, 1]} : vector<64x32xf32> to vector<64x8xf32>
    %51 = vector.shape_cast %50 : vector<64x8xf32> to vector<4x16x8xf32>
    "tpu.trace_start"() <{level = 10 : i32, message = "bqd,bkd->bqk"}> : () -> ()
    %cst_28 = arith.constant dense<0.000000e+00> : vector<4x16x16xf32>
    %52 = tpu.matmul %47, %49, %cst_28 {dimension_numbers = #tpu.dot_dimension_numbers<[2], [2], [1], [1], [0, 0, 0, 1, 1, 1], [0], [0]>} : vector<4x16x8xf32>, vector<4x16x8xf32>, vector<4x16x16xf32> -> vector<4x16x16xf32>
    "tpu.trace_stop"() : () -> ()
    %cst_29 = arith.constant dense<0xFF800000> : vector<4x16xf32>
    %53 = vector.multi_reduction <maximumf>, %52, %cst_29 [2] : vector<4x16x16xf32> to vector<4x16xf32>
    %54 = vector.shape_cast %53 : vector<4x16xf32> to vector<4x16x1xf32>
    %55 = vector.broadcast %54 : vector<4x16x1xf32> to vector<4x16x16xf32>
    %56 = arith.subf %52, %55 : vector<4x16x16xf32>
    %57 = math.exp %56 : vector<4x16x16xf32>
    %cst_30 = arith.constant dense<0.000000e+00> : vector<4x16xf32>
    %58 = vector.multi_reduction <add>, %57, %cst_30 [2] : vector<4x16x16xf32> to vector<4x16xf32>
    %59 = vector.shape_cast %58 : vector<4x16xf32> to vector<4x16x1xf32>
    %60 = vector.broadcast %59 : vector<4x16x1xf32> to vector<4x16x16xf32>
    %61 = arith.divf %57, %60 : vector<4x16x16xf32>
    "tpu.trace_start"() <{level = 10 : i32, message = "bqk,bkd->bqd"}> : () -> ()
    %cst_31 = arith.constant dense<0.000000e+00> : vector<4x16x8xf32>
    %62 = tpu.matmul %61, %51, %cst_31 {dimension_numbers = #tpu.dot_dimension_numbers<[2], [1], [1], [2], [0, 0, 0, 1, 1, 2], [0], [0]>} : vector<4x16x16xf32>, vector<4x16x8xf32>, vector<4x16x8xf32> -> vector<4x16x8xf32>
    "tpu.trace_stop"() : () -> ()
    %63 = vector.shape_cast %62 : vector<4x16x8xf32> to vector<64x8xf32>
    %c8 = arith.constant 8 : index
    %c0_32 = arith.constant 0 : index
    %64 = vector.load %arg4[%c8, %c0_32] : memref<32x32xf32, #tpu.memory_space<vmem>>, vector<8x32xf32>
    %cst_33 = arith.constant dense<0.000000e+00> : vector<64x32xf32>
    %65 = tpu.matmul %63, %64, %cst_33 {dimension_numbers = #tpu.dot_dimension_numbers<[1], [0], [0], [1], [0, 0, 1, 1], [], []>} : vector<64x8xf32>, vector<8x32xf32>, vector<64x32xf32> -> vector<64x32xf32>
    %66 = arith.addf %45, %65 : vector<64x32xf32>
    %67 = vector.extract_strided_slice %23 {offsets = [0, 16], sizes = [64, 8], strides = [1, 1]} : vector<64x32xf32> to vector<64x8xf32>
    %68 = vector.shape_cast %67 : vector<64x8xf32> to vector<4x16x8xf32>
    %69 = vector.extract_strided_slice %14 {offsets = [0, 16], sizes = [64, 8], strides = [1, 1]} : vector<64x32xf32> to vector<64x8xf32>
    %70 = vector.shape_cast %69 : vector<64x8xf32> to vector<4x16x8xf32>
    %71 = vector.extract_strided_slice %21 {offsets = [0, 16], sizes = [64, 8], strides = [1, 1]} : vector<64x32xf32> to vector<64x8xf32>
    %72 = vector.shape_cast %71 : vector<64x8xf32> to vector<4x16x8xf32>
    "tpu.trace_start"() <{level = 10 : i32, message = "bqd,bkd->bqk"}> : () -> ()
    %cst_34 = arith.constant dense<0.000000e+00> : vector<4x16x16xf32>
    %73 = tpu.matmul %68, %70, %cst_34 {dimension_numbers = #tpu.dot_dimension_numbers<[2], [2], [1], [1], [0, 0, 0, 1, 1, 1], [0], [0]>} : vector<4x16x8xf32>, vector<4x16x8xf32>, vector<4x16x16xf32> -> vector<4x16x16xf32>
    "tpu.trace_stop"() : () -> ()
    %cst_35 = arith.constant dense<0xFF800000> : vector<4x16xf32>
    %74 = vector.multi_reduction <maximumf>, %73, %cst_35 [2] : vector<4x16x16xf32> to vector<4x16xf32>
    %75 = vector.shape_cast %74 : vector<4x16xf32> to vector<4x16x1xf32>
    %76 = vector.broadcast %75 : vector<4x16x1xf32> to vector<4x16x16xf32>
    %77 = arith.subf %73, %76 : vector<4x16x16xf32>
    %78 = math.exp %77 : vector<4x16x16xf32>
    %cst_36 = arith.constant dense<0.000000e+00> : vector<4x16xf32>
    %79 = vector.multi_reduction <add>, %78, %cst_36 [2] : vector<4x16x16xf32> to vector<4x16xf32>
    %80 = vector.shape_cast %79 : vector<4x16xf32> to vector<4x16x1xf32>
    %81 = vector.broadcast %80 : vector<4x16x1xf32> to vector<4x16x16xf32>
    %82 = arith.divf %78, %81 : vector<4x16x16xf32>
    "tpu.trace_start"() <{level = 10 : i32, message = "bqk,bkd->bqd"}> : () -> ()
    %cst_37 = arith.constant dense<0.000000e+00> : vector<4x16x8xf32>
    %83 = tpu.matmul %82, %72, %cst_37 {dimension_numbers = #tpu.dot_dimension_numbers<[2], [1], [1], [2], [0, 0, 0, 1, 1, 2], [0], [0]>} : vector<4x16x16xf32>, vector<4x16x8xf32>, vector<4x16x8xf32> -> vector<4x16x8xf32>
    "tpu.trace_stop"() : () -> ()
    %84 = vector.shape_cast %83 : vector<4x16x8xf32> to vector<64x8xf32>
    %c16 = arith.constant 16 : index
    %c0_38 = arith.constant 0 : index
    %85 = vector.load %arg4[%c16, %c0_38] : memref<32x32xf32, #tpu.memory_space<vmem>>, vector<8x32xf32>
    %cst_39 = arith.constant dense<0.000000e+00> : vector<64x32xf32>
    %86 = tpu.matmul %84, %85, %cst_39 {dimension_numbers = #tpu.dot_dimension_numbers<[1], [0], [0], [1], [0, 0, 1, 1], [], []>} : vector<64x8xf32>, vector<8x32xf32>, vector<64x32xf32> -> vector<64x32xf32>
    %87 = arith.addf %66, %86 : vector<64x32xf32>
    %88 = vector.extract_strided_slice %23 {offsets = [0, 24], sizes = [64, 8], strides = [1, 1]} : vector<64x32xf32> to vector<64x8xf32>
    %89 = vector.shape_cast %88 : vector<64x8xf32> to vector<4x16x8xf32>
    %90 = vector.extract_strided_slice %14 {offsets = [0, 24], sizes = [64, 8], strides = [1, 1]} : vector<64x32xf32> to vector<64x8xf32>
    %91 = vector.shape_cast %90 : vector<64x8xf32> to vector<4x16x8xf32>
    %92 = vector.extract_strided_slice %21 {offsets = [0, 24], sizes = [64, 8], strides = [1, 1]} : vector<64x32xf32> to vector<64x8xf32>
    %93 = vector.shape_cast %92 : vector<64x8xf32> to vector<4x16x8xf32>
    "tpu.trace_start"() <{level = 10 : i32, message = "bqd,bkd->bqk"}> : () -> ()
    %cst_40 = arith.constant dense<0.000000e+00> : vector<4x16x16xf32>
    %94 = tpu.matmul %89, %91, %cst_40 {dimension_numbers = #tpu.dot_dimension_numbers<[2], [2], [1], [1], [0, 0, 0, 1, 1, 1], [0], [0]>} : vector<4x16x8xf32>, vector<4x16x8xf32>, vector<4x16x16xf32> -> vector<4x16x16xf32>
    "tpu.trace_stop"() : () -> ()
    %cst_41 = arith.constant dense<0xFF800000> : vector<4x16xf32>
    %95 = vector.multi_reduction <maximumf>, %94, %cst_41 [2] : vector<4x16x16xf32> to vector<4x16xf32>
    %96 = vector.shape_cast %95 : vector<4x16xf32> to vector<4x16x1xf32>
    %97 = vector.broadcast %96 : vector<4x16x1xf32> to vector<4x16x16xf32>
    %98 = arith.subf %94, %97 : vector<4x16x16xf32>
    %99 = math.exp %98 : vector<4x16x16xf32>
    %cst_42 = arith.constant dense<0.000000e+00> : vector<4x16xf32>
    %100 = vector.multi_reduction <add>, %99, %cst_42 [2] : vector<4x16x16xf32> to vector<4x16xf32>
    %101 = vector.shape_cast %100 : vector<4x16xf32> to vector<4x16x1xf32>
    %102 = vector.broadcast %101 : vector<4x16x1xf32> to vector<4x16x16xf32>
    %103 = arith.divf %99, %102 : vector<4x16x16xf32>
    "tpu.trace_start"() <{level = 10 : i32, message = "bqk,bkd->bqd"}> : () -> ()
    %cst_43 = arith.constant dense<0.000000e+00> : vector<4x16x8xf32>
    %104 = tpu.matmul %103, %93, %cst_43 {dimension_numbers = #tpu.dot_dimension_numbers<[2], [1], [1], [2], [0, 0, 0, 1, 1, 2], [0], [0]>} : vector<4x16x16xf32>, vector<4x16x8xf32>, vector<4x16x8xf32> -> vector<4x16x8xf32>
    "tpu.trace_stop"() : () -> ()
    %105 = vector.shape_cast %104 : vector<4x16x8xf32> to vector<64x8xf32>
    %c24 = arith.constant 24 : index
    %c0_44 = arith.constant 0 : index
    %106 = vector.load %arg4[%c24, %c0_44] : memref<32x32xf32, #tpu.memory_space<vmem>>, vector<8x32xf32>
    %cst_45 = arith.constant dense<0.000000e+00> : vector<64x32xf32>
    %107 = tpu.matmul %105, %106, %cst_45 {dimension_numbers = #tpu.dot_dimension_numbers<[1], [0], [0], [1], [0, 0, 1, 1], [], []>} : vector<64x8xf32>, vector<8x32xf32>, vector<64x32xf32> -> vector<64x32xf32>
    %108 = arith.addf %87, %107 : vector<64x32xf32>
    %c0_46 = arith.constant 0 : index
    %c0_47 = arith.constant 0 : index
    %109 = vector.load %arg5[%c0_46, %c0_47] : memref<1x32xf32, #tpu.memory_space<vmem>>, vector<1x32xf32>
    %110 = vector.broadcast %109 : vector<1x32xf32> to vector<64x32xf32>
    %111 = arith.addf %108, %110 : vector<64x32xf32>
    %c0_48 = arith.constant 0 : index
    %c0_49 = arith.constant 0 : index
    %112 = vector.load %arg6[%c0_48, %c0_49] : memref<64x32xf32, #tpu.memory_space<vmem>>, vector<64x32xf32>
    tpu.vector_store %arg6[%c0_48, %c0_49], %111 {strides = array<i32>} : memref<64x32xf32, #tpu.memory_space<vmem>>, vector<64x32xf32>,
    return
  }
  func.func @transform_0(%arg0: i32) -> (i32, i32) {
    %c0_i32 = arith.constant 0 : i32
    %c0_i32_0 = arith.constant 0 : i32
    return %arg0, %c0_i32 : i32, i32
  }
  func.func @transform_1(%arg0: i32) -> (i32, i32, i32) {
    %c0_i32 = arith.constant 0 : i32
    %c0_i32_0 = arith.constant 0 : i32
    %c0_i32_1 = arith.constant 0 : i32
    %c0_i32_2 = arith.constant 0 : i32
    return %c0_i32, %c0_i32_0, %c0_i32_1 : i32, i32, i32
  }
  func.func @transform_2(%arg0: i32) -> (i32, i32, i32) {
    %c0_i32 = arith.constant 0 : i32
    %c0_i32_0 = arith.constant 0 : i32
    %c0_i32_1 = arith.constant 0 : i32
    %c0_i32_2 = arith.constant 0 : i32
    return %c0_i32, %c0_i32_0, %c0_i32_1 : i32, i32, i32
  }
  func.func @transform_3(%arg0: i32) -> (i32, i32) {
    %c0_i32 = arith.constant 0 : i32
    %c0_i32_0 = arith.constant 0 : i32
    %c0_i32_1 = arith.constant 0 : i32
    return %c0_i32, %c0_i32_0 : i32, i32
  }
  func.func @transform_4(%arg0: i32) -> (i32, i32) {
    %c0_i32 = arith.constant 0 : i32
    %c0_i32_0 = arith.constant 0 : i32
    %c0_i32_1 = arith.constant 0 : i32
    return %c0_i32, %c0_i32_0 : i32, i32
  }
  func.func @transform_5(%arg0: i32) -> (i32, i32) {
    %c0_i32 = arith.constant 0 : i32
    %c0_i32_0 = arith.constant 0 : i32
    return %arg0, %c0_i32 : i32, i32
  }
}

</mosaic_0001>

<llo_original>
// kernel: tpu_custom_call.1
$region0: #{tpu_custom_call.1}
  #allocation0 [shape = 'u32[]', space=smem, size = 0x4, offset = 0x4, fixed_abs, tag = 'smem constant byte address 0x4 - core index']
  #allocation1 [shape = 'u32[144,128]{1,0:T(1,128)}', space=vmem, size = 0x12000, scoped, tag = 'internal scratch']
  %s0 = inlined_call_operand.vmem [shape: f32[128,32], index: 0, kind: input, shape index: {}]
  %s1 = inlined_call_operand.vmem [shape: f32[3,32,32], index: 1, kind: input, shape index: {}]
  %s2 = inlined_call_operand.vmem [shape: f32[3,1,32], index: 2, kind: input, shape index: {}]
  %s3 = inlined_call_operand.vmem [shape: f32[32,32], index: 3, kind: input, shape index: {}]
  %s4 = inlined_call_operand.vmem [shape: f32[1,32], index: 4, kind: input, shape index: {}]
  %s5 = inlined_call_operand.vmem [shape: f32[128,32], index: 5, kind: output, shape index: {}]
  %s6 = sld [smem:[#allocation0]]
  $region53: #{tpu_custom_call.1} parent=0
    _
  %s8 = ssub.s32 1, %s6
  %s9 = scalar_select 0, %s8, %s6
  loop: start=0, step=1, limit=4
  $region2: #{tpu_custom_call.1} parent=0 // loop_pre_header
    _
  $region3: #{tpu_custom_call.1} parent=0 // loop_header
    %s11 = sphi 0, %s15
    %p12 = scmp.ge.s32.totalorder %s11, 4
    %s21 = sphi 0, %s23
    %s24 = sphi 0, %s21
    %s25 = sphi 0, %s24
    %s41 = sphi 0, %s25
    %s45 = sphi 0, %s45
    %s47 = sphi 0, %s45
    %s48 = sphi 0, %s47
    %s62 = sphi 0, %s48
    %s66 = sphi 0, %s66
    %s68 = sphi 0, %s66
    %s69 = sphi 0, %s68
    %s83 = sphi 0, %s69
    %s87 = sphi 0, %s87
    %s89 = sphi 0, %s87
    %s90 = sphi 0, %s89
    %s104 = sphi 0, %s90
    %s108 = sphi 0, %s108
    %s110 = sphi 0, %s108
    %s111 = sphi 0, %s110
    %s125 = sphi 0, %s111
    %s131 = sphi 0, %s133
    %s134 = sphi 0, %s131
    %s135 = sphi 0, %s134
    %s151 = sphi 0, %s135
  $region4: #{tpu_custom_call.1} parent=0 // loop_header_branch
    %14 = sbr.rel (%p12) target = $region8
  $region5: #{tpu_custom_call.1} parent=0 // loop_body
    %s16 = ssub.s32 %s11, 1
    %s17 = ssub.s32 %s11, 2
    %s18 = sadd.s32 %s11, 1
    %s19 = ssub.s32 %s11, %s18
    %p20 = scmp.eq.s32.totalorder %s19, 0
    %s22 = sadd.s32 %s21, 1
    %s23 = scalar_select %p20, %s21, %s22
    %p26 = pneg %p20
    %p27 = scmp.eq.s32.totalorder %s11, 1
    %p28 = por %p26, %p27
    %p29 = scmp.ne.s32.totalorder %s21, %s24
    %p30 = scmp.eq.s32.totalorder %s11, 0
    %p31 = por %p29, %p30
    %p32 = scmp.ne.s32.totalorder %s21, %s24
    %p33 = scmp.eq.s32.totalorder %s16, 1
    %p34 = por %p32, %p33
    %p35 = scmp.ne.s32.totalorder %s24, %s25
    %p36 = scmp.eq.s32.totalorder %s16, 0
    %p37 = por %p35, %p36
    %p38 = scmp.ne.s32.totalorder %s24, %s25
    %p39 = scmp.eq.s32.totalorder %s17, 1
    %p40 = por %p38, %p39
    %p42 = scmp.ne.s32.totalorder %s25, %s41
    %p43 = scmp.eq.s32.totalorder %s17, 0
    %p44 = por %p42, %p43
    %s46 = sadd.s32 %s45, 1
    %p49 = scmp.eq.s32.totalorder %s11, 1
    %p50 = scmp.ne.s32.totalorder %s45, %s47
    %p51 = scmp.eq.s32.totalorder %s11, 0
    %p52 = por %p50, %p51
    %p53 = scmp.ne.s32.totalorder %s45, %s47
    %p54 = scmp.eq.s32.totalorder %s16, 1
    %p55 = por %p53, %p54
    %p56 = scmp.ne.s32.totalorder %s47, %s48
    %p57 = scmp.eq.s32.totalorder %s16, 0
    %p58 = por %p56, %p57
    %p59 = scmp.ne.s32.totalorder %s47, %s48
    %p60 = scmp.eq.s32.totalorder %s17, 1
    %p61 = por %p59, %p60
    %p63 = scmp.ne.s32.totalorder %s48, %s62
    %p64 = scmp.eq.s32.totalorder %s17, 0
    %p65 = por %p63, %p64
    %s67 = sadd.s32 %s66, 1
    %p70 = scmp.eq.s32.totalorder %s11, 1
    %p71 = scmp.ne.s32.totalorder %s66, %s68
    %p72 = scmp.eq.s32.totalorder %s11, 0
    %p73 = por %p71, %p72
    %p74 = scmp.ne.s32.totalorder %s66, %s68
    %p75 = scmp.eq.s32.totalorder %s16, 1
    %p76 = por %p74, %p75
    %p77 = scmp.ne.s32.totalorder %s68, %s69
    %p78 = scmp.eq.s32.totalorder %s16, 0
    %p79 = por %p77, %p78
    %p80 = scmp.ne.s32.totalorder %s68, %s69
    %p81 = scmp.eq.s32.totalorder %s17, 1
    %p82 = por %p80, %p81
    %p84 = scmp.ne.s32.totalorder %s69, %s83
    %p85 = scmp.eq.s32.totalorder %s17, 0
    %p86 = por %p84, %p85
    %s88 = sadd.s32 %s87, 1
    %p91 = scmp.eq.s32.totalorder %s11, 1
    %p92 = scmp.ne.s32.totalorder %s87, %s89
    %p93 = scmp.eq.s32.totalorder %s11, 0
    %p94 = por %p92, %p93
    %p95 = scmp.ne.s32.totalorder %s87, %s89
    %p96 = scmp.eq.s32.totalorder %s16, 1
    %p97 = por %p95, %p96
    %p98 = scmp.ne.s32.totalorder %s89, %s90
    %p99 = scmp.eq.s32.totalorder %s16, 0
    %p100 = por %p98, %p99
    %p101 = scmp.ne.s32.totalorder %s89, %s90
    %p102 = scmp.eq.s32.totalorder %s17, 1
    %p103 = por %p101, %p102
    %p105 = scmp.ne.s32.totalorder %s90, %s104
    %p106 = scmp.eq.s32.totalorder %s17, 0
    %p107 = por %p105, %p106
    %s109 = sadd.s32 %s108, 1
    %p112 = scmp.eq.s32.totalorder %s11, 1
    %p113 = scmp.ne.s32.totalorder %s108, %s110
    %p114 = scmp.eq.s32.totalorder %s11, 0
    %p115 = por %p113, %p114
    %p116 = scmp.ne.s32.totalorder %s108, %s110
    %p117 = scmp.eq.s32.totalorder %s16, 1
    %p118 = por %p116, %p117
    %p119 = scmp.ne.s32.totalorder %s110, %s111
    %p120 = scmp.eq.s32.totalorder %s16, 0
    %p121 = por %p119, %p120
    %p122 = scmp.ne.s32.totalorder %s110, %s111
    %p123 = scmp.eq.s32.totalorder %s17, 1
    %p124 = por %p122, %p123
    %p126 = scmp.ne.s32.totalorder %s111, %s125
    %p127 = scmp.eq.s32.totalorder %s17, 0
    %p128 = por %p126, %p127
    %s129 = ssub.s32 %s11, %s18
    %p130 = scmp.eq.s32.totalorder %s129, 0
    %s132 = sadd.s32 %s131, 1
    %s133 = scalar_select %p130, %s131, %s132
    %p136 = pneg %p130
    %p137 = scmp.eq.s32.totalorder %s11, 1
    %p138 = por %p136, %p137
    %p139 = scmp.ne.s32.totalorder %s131, %s134
    %p140 = scmp.eq.s32.totalorder %s11, 0
    %p141 = por %p139, %p140
    %p142 = scmp.ne.s32.totalorder %s131, %s134
    %p143 = scmp.eq.s32.totalorder %s16, 1
    %p144 = por %p142, %p143
    %p145 = scmp.ne.s32.totalorder %s134, %s135
    %p146 = scmp.eq.s32.totalorder %s16, 0
    %p147 = por %p145, %p146
    %p148 = scmp.ne.s32.totalorder %s134, %s135
    %p149 = scmp.eq.s32.totalorder %s17, 1
    %p150 = por %p148, %p149
    %p152 = scmp.ne.s32.totalorder %s135, %s151
    %p153 = scmp.eq.s32.totalorder %s17, 0
    %p154 = por %p152, %p153
    %p155 = scmp.le.s32.totalorder 1, %s11
    %p156 = scmp.lt.s32.totalorder %s11, 3
    %p157 = pnand %p155, %p156
    %p158 = pneg %p157
    // Predicated region
    $region9: #{tpu_custom_call.1} parent=5 // pred_check
      _
    $region10: #{tpu_custom_call.1} parent=5 // pred_check_branch
      %160 = sbr.rel (%p157) target = $region12
    $region11: #{tpu_custom_call.1} parent=5 // pred_region
      %s161 = ssub.s32 %s11, 1
      // Predicated region
      $region13: #{tpu_custom_call.1} parent=11 // pred_check
        %p162 = pneg %p58
      $region14: #{tpu_custom_call.1} parent=11 // pred_check_branch
        %164 = sbr.rel (%p162) target = $region16
      $region15: #{tpu_custom_call.1} parent=11 // pred_region
        _
      $region16: #{tpu_custom_call.1} parent=11 // pred_fallthru
        _
      // Predicated region
      $region17: #{tpu_custom_call.1} parent=11 // pred_check
        %p165 = pneg %p79
      $region18: #{tpu_custom_call.1} parent=11 // pred_check_branch
        %167 = sbr.rel (%p165) target = $region20
      $region19: #{tpu_custom_call.1} parent=11 // pred_region
        _
      $region20: #{tpu_custom_call.1} parent=11 // pred_fallthru
        _
      // Predicated region
      $region21: #{tpu_custom_call.1} parent=11 // pred_check
        %p168 = pneg %p100
      $region22: #{tpu_custom_call.1} parent=11 // pred_check_branch
        %170 = sbr.rel (%p168) target = $region24
      $region23: #{tpu_custom_call.1} parent=11 // pred_region
        _
      $region24: #{tpu_custom_call.1} parent=11 // pred_fallthru
        _
      // Predicated region
      $region25: #{tpu_custom_call.1} parent=11 // pred_check
        %p171 = pneg %p121
      $region26: #{tpu_custom_call.1} parent=11 // pred_check_branch
        %173 = sbr.rel (%p171) target = $region28
      $region27: #{tpu_custom_call.1} parent=11 // pred_region
        _
      $region28: #{tpu_custom_call.1} parent=11 // pred_fallthru
        _
    $region12: #{tpu_custom_call.1} parent=5 // pred_fallthru
      _
    %p174 = scmp.lt.s32.totalorder %s11, 2
    // Predicated region
    $region29: #{tpu_custom_call.1} parent=5 // pred_check
      %p175 = pneg %p174
    $region30: #{tpu_custom_call.1} parent=5 // pred_check_branch
      %177 = sbr.rel (%p175) target = $region32
    $region31: #{tpu_custom_call.1} parent=5 // pred_region
      // Predicated region
      $region33: #{tpu_custom_call.1} parent=31 // pred_check
        %p178 = pneg %p31
      $region34: #{tpu_custom_call.1} parent=31 // pred_check_branch
        %180 = sbr.rel (%p178) target = $region36
      $region35: #{tpu_custom_call.1} parent=31 // pred_region
        %s181 = smul.u32 8, %s11
        %p182 = scmp.lt.s32.totalorder %s181, 15
        %s183 = scalar_select %p182, %s181, 15
        %s184 = smul.addr %s183, 8
        %s185 = scalar_lea.vmem %s0, %s184
        %s186 = smul.u32 8, %s11
      $region36: #{tpu_custom_call.1} parent=31 // pred_fallthru
        _
    $region32: #{tpu_custom_call.1} parent=5 // pred_fallthru
      _
    %p187 = scmp.le.s32.totalorder 1, %s11
    %p188 = scmp.lt.s32.totalorder %s11, 3
    %p189 = pnand %p187, %p188
    %p190 = pneg %p189
    // Predicated region
    $region37: #{tpu_custom_call.1} parent=5 // pred_check
      _
    $region38: #{tpu_custom_call.1} parent=5 // pred_check_branch
      %192 = sbr.rel (%p189) target = $region40
    $region39: #{tpu_custom_call.1} parent=5 // pred_region
      %s193 = ssub.s32 %s11, 1
      %s194 = smul.u32 8, %s16
      %p195 = scmp.lt.s32.totalorder %s194, 15
      %s196 = scalar_select %p195, %s194, 15
      %s197 = smul.addr %s196, 8
      %s198 = scalar_lea.vmem %s0, %s197
      %p199 = pneg %p37
      %p200 = pneg %p34
      %p201 = pneg %p58
      %p202 = pneg %p55
      %p203 = pneg %p79
      %p204 = pneg %p76
      %p205 = pneg %p100
      %p206 = pneg %p97
      %p207 = pneg %p121
      %p208 = pneg %p118
      %p209 = pneg %p147
      %p210 = pneg %p144
      %s211 = smul.u32 8, %s16
      %p212 = scmp.lt.s32.totalorder %s211, 15
      %s213 = scalar_select %p212, %s211, 15
      %s214 = smul.addr %s213, 8
      %s215 = scalar_lea.vmem %s5, %s214
      %s216 = smul.u32 8, %s16
      %p217 = scmp.lt.s32.totalorder %s216, 15
      %s218 = scalar_select %p217, %s216, 15
      %s219 = smul.addr %s218, 8
      %s220 = scalar_lea.vmem %s0, %s219
      %s221 = smul.u32 8, %s16
      %s222 = smul.u32 8, %s16
      %p223 = scmp.lt.s32.totalorder %s222, 15
      %s224 = scalar_select %p223, %s222, 15
      %s225 = smul.addr %s224, 8
      %s226 = scalar_lea.vmem %s5, %s225
      %s227 = smul.u32 8, %s16
      %v228 = vld [vmem:[%s220] sm:$0xff]
      %v229 = vld [vmem:[%s220 + $0x8] sm:$0xff]
      %v230 = vld [vmem:[%s220 + $0x10] sm:$0xff]
      %v231 = vld [vmem:[%s220 + $0x18] sm:$0xff]
      %v232 = vld [vmem:[%s220 + $0x20] sm:$0xff]
      %v233 = vld [vmem:[%s220 + $0x28] sm:$0xff]
      %v234 = vld [vmem:[%s220 + $0x30] sm:$0xff]
      %v235 = vld [vmem:[%s220 + $0x38] sm:$0xff]
      %v236 = vld [vmem:[%s1] sm:$0xff]
      %v237 = vld [vmem:[%s1 + $0x8] sm:$0xff]
      %v238 = vld [vmem:[%s1 + $0x10] sm:$0xff]
      %v239 = vld [vmem:[%s1 + $0x18] sm:$0xff]
      %v240 = vld [vmem:[%s2] sm:$0x1]
      %v242 = vlaneseq
      %v243 = vshrl.u32 %v242, 7
      %v244 = vsub.s32 0, %v243
      %v245 = vrot.slane %v240, %v244
      %vm247 = vcmask 261120
      %v249 = vsel %vm247, %v228, 0
      %v252 = vsel %vm247, %v229, 0
      %v255 = vsel %vm247, %v230, 0
      %v258 = vsel %vm247, %v231, 0
      %v261 = vsel %vm247, %v232, 0
      %v264 = vsel %vm247, %v233, 0
      %v267 = vsel %vm247, %v234, 0
      %v270 = vsel %vm247, %v235, 0
      %272 = vmatprep.subr.mxu0 0.0
      %273 = vmatpush1.msra.mxu0 %v236
      %274 = vmatprep.subr.mxu0 0.0
      %275 = vmatpush1.msra.mxu0 %v237
      %276 = vmatprep.subr.mxu0 0.0
      %277 = vmatpush1.msra.mxu0 %v238
      %278 = vmatprep.subr.mxu0 0.0
      %279 = vmatpush1.msra.mxu0 %v239
      %280 = vmatprep.subr.mxu0 0.0
      %281 = vmatpush1.msra.mxu0 0.0
      %282 = vmatprep.subr.mxu0 0.0
      %283 = vmatpush1.msra.mxu0 0.0
      %284 = vmatprep.subr.mxu0 0.0
      %285 = vmatpush1.msra.mxu0 0.0
      %286 = vmatprep.subr.mxu0 0.0
      %287 = vmatpush1.msra.mxu0 0.0
      %288 = vmatprep.subr.mxu0 0.0
      %289 = vmatpush1.msra.mxu0 0.0
      %290 = vmatprep.subr.mxu0 0.0
      %291 = vmatpush1.msra.mxu0 0.0
      %292 = vmatprep.subr.mxu0 0.0
      %293 = vmatpush1.msra.mxu0 0.0
      %294 = vmatprep.subr.mxu0 0.0
      %295 = vmatpush1.msra.mxu0 0.0
      %296 = vmatprep.subr.mxu0 0.0
      %297 = vmatpush1.msra.mxu0 0.0
      %298 = vmatprep.subr.mxu0 0.0
      %299 = vmatpush1.msra.mxu0 0.0
      %300 = vmatprep.subr.mxu0 0.0
      %301 = vmatpush1.msra.mxu0 0.0
      %302 = vmatprep.subr.mxu0 0.0
      %303 = vmatpush1.msra.mxu0 0.0
      %304 = vmatprep.subr.mxu0 0.0
      %305 = vmatpush1.msra.mxu0 0.0
      %306 = vmatprep.subr.mxu0 0.0
      %307 = vmatpush1.msra.mxu0 0.0
      %308 = vmatprep.subr.mxu0 0.0
      %309 = vmatpush1.msra.mxu0 0.0
      %310 = vmatprep.subr.mxu0 0.0
      %311 = vmatpush1.msra.mxu0 0.0
      %312 = vmatprep.subr.mxu0 0.0
      %313 = vmatpush1.msra.mxu0 0.0
      %314 = vmatprep.subr.mxu0 0.0
      %315 = vmatpush1.msra.mxu0 0.0
      %316 = vmatprep.subr.mxu0 0.0
      %317 = vmatpush1.msra.mxu0 0.0
      %318 = vmatprep.subr.mxu0 0.0
      %319 = vmatpush1.msra.mxu0 0.0
      %320 = vmatprep.subr.mxu0 0.0
      %321 = vmatpush1.msra.mxu0 0.0
      %322 = vmatprep.subr.mxu0 0.0
      %323 = vmatpush1.msra.mxu0 0.0
      %324 = vmatprep.subr.mxu0 0.0
      %325 = vmatpush1.msra.mxu0 0.0
      %326 = vmatprep.subr.mxu0 0.0
      %327 = vmatpush1.msra.mxu0 0.0
      %328 = vmatprep.subr.mxu0 0.0
      %329 = vmatpush1.msra.mxu0 0.0
      %330 = vmatprep.subr.mxu0 0.0
      %331 = vmatpush1.msra.mxu0 0.0
      %332 = vmatprep.subr.mxu0 0.0
      %333 = vmatpush1.msra.mxu0 0.0
      %334 = vmatprep.subr.mxu0 0.0
      %335 = vmatpush1.msra.mxu0 0.0
      %336 = vmatprep.mubr.f32.mxu0 0.0
      %337 = vmatmul.mubr.f32.gmra.mrb[0].mxu0 %v249
      %v338 = vpop.f32.mrb[0].mxu0
      %v339 = vadd.f32 %v245, %v338
      %v340 = vpop.f32.mrb[0].mxu0
      %341 = vmatprep.mubr.f32.mxu0 0.0
      %342 = vmatmul.mubr.f32.gmra.mrb[0].mxu0 %v252
      %v343 = vpop.f32.mrb[0].mxu0
      %v344 = vadd.f32 %v245, %v343
      %v345 = vpop.f32.mrb[0].mxu0
      %346 = vmatprep.mubr.f32.mxu0 0.0
      %347 = vmatmul.mubr.f32.gmra.mrb[0].mxu0 %v255
      %v348 = vpop.f32.mrb[0].mxu0
      %v349 = vadd.f32 %v245, %v348
      %v350 = vpop.f32.mrb[0].mxu0
      %351 = vmatprep.mubr.f32.mxu0 0.0
      %352 = vmatmul.mubr.f32.gmra.mrb[0].mxu0 %v258
      %v353 = vpop.f32.mrb[0].mxu0
      %v354 = vadd.f32 %v245, %v353
      %v355 = vpop.f32.mrb[0].mxu0
      %356 = vmatprep.mubr.f32.mxu0 0.0
      %357 = vmatmul.mubr.f32.gmra.mrb[0].mxu0 %v261
      %v358 = vpop.f32.mrb[0].mxu0
      %v359 = vadd.f32 %v245, %v358
      %v360 = vpop.f32.mrb[0].mxu0
      %361 = vmatprep.mubr.f32.mxu0 0.0
      %362 = vmatmul.mubr.f32.gmra.mrb[0].mxu0 %v264
      %v363 = vpop.f32.mrb[0].mxu0
      %v364 = vadd.f32 %v245, %v363
      %v365 = vpop.f32.mrb[0].mxu0
      %366 = vmatprep.mubr.f32.mxu0 0.0
      %367 = vmatmul.mubr.f32.gmra.mrb[0].mxu0 %v267
      %v368 = vpop.f32.mrb[0].mxu0
      %v369 = vadd.f32 %v245, %v368
      %v370 = vpop.f32.mrb[0].mxu0
      %371 = vmatprep.mubr.f32.mxu0 0.0
      %372 = vmatmul.mubr.f32.gmra.mrb[0].mxu0 %v270
      %v373 = vpop.f32.mrb[0].mxu0
      %v374 = vadd.f32 %v245, %v373
      %v375 = vpop.f32.mrb[0].mxu0
      %376 = vdwg.mxu0
      %s377 = scalar_lea.vmem %s1, 32
      %v378 = vld [vmem:[%s377] sm:$0xff]
      %v379 = vld [vmem:[%s377 + $0x8] sm:$0xff]
      %v380 = vld [vmem:[%s377 + $0x10] sm:$0xff]
      %v381 = vld [vmem:[%s377 + $0x18] sm:$0xff]
      %s382 = scalar_lea.vmem %s2, 1
      %v383 = vld [vmem:[%s382] sm:$0x1]
      %v385 = vlaneseq
      %v386 = vshrl.u32 %v385, 7
      %v387 = vsub.s32 0, %v386
      %v388 = vrot.slane %v383, %v387
      %390 = vmatprep.subr.mxu0 0.0
      %391 = vmatpush1.msra.mxu0 %v378
      %392 = vmatprep.subr.mxu0 0.0
      %393 = vmatpush1.msra.mxu0 %v379
      %394 = vmatprep.subr.mxu0 0.0
      %395 = vmatpush1.msra.mxu0 %v380
      %396 = vmatprep.subr.mxu0 0.0
      %397 = vmatpush1.msra.mxu0 %v381
      %398 = vmatprep.subr.mxu0 0.0
      %399 = vmatpush1.msra.mxu0 0.0
      %400 = vmatprep.subr.mxu0 0.0
      %401 = vmatpush1.msra.mxu0 0.0
      %402 = vmatprep.subr.mxu0 0.0
      %403 = vmatpush1.msra.mxu0 0.0
      %404 = vmatprep.subr.mxu0 0.0
      %405 = vmatpush1.msra.mxu0 0.0
      %406 = vmatprep.subr.mxu0 0.0
      %407 = vmatpush1.msra.mxu0 0.0
      %408 = vmatprep.subr.mxu0 0.0
      %409 = vmatpush1.msra.mxu0 0.0
      %410 = vmatprep.subr.mxu0 0.0
      %411 = vmatpush1.msra.mxu0 0.0
      %412 = vmatprep.subr.mxu0 0.0
      %413 = vmatpush1.msra.mxu0 0.0
      %414 = vmatprep.subr.mxu0 0.0
      %415 = vmatpush1.msra.mxu0 0.0
      %416 = vmatprep.subr.mxu0 0.0
      %417 = vmatpush1.msra.mxu0 0.0
      %418 = vmatprep.subr.mxu0 0.0
      %419 = vmatpush1.msra.mxu0 0.0
      %420 = vmatprep.subr.mxu0 0.0
      %421 = vmatpush1.msra.mxu0 0.0
      %422 = vmatprep.subr.mxu0 0.0
      %423 = vmatpush1.msra.mxu0 0.0
      %424 = vmatprep.subr.mxu0 0.0
      %425 = vmatpush1.msra.mxu0 0.0
      %426 = vmatprep.subr.mxu0 0.0
      %427 = vmatpush1.msra.mxu0 0.0
      %428 = vmatprep.subr.mxu0 0.0
      %429 = vmatpush1.msra.mxu0 0.0
      %430 = vmatprep.subr.mxu0 0.0
      %431 = vmatpush1.msra.mxu0 0.0
      %432 = vmatprep.subr.mxu0 0.0
      %433 = vmatpush1.msra.mxu0 0.0
      %434 = vmatprep.subr.mxu0 0.0
      %435 = vmatpush1.msra.mxu0 0.0
      %436 = vmatprep.subr.mxu0 0.0
      %437 = vmatpush1.msra.mxu0 0.0
      %438 = vmatprep.subr.mxu0 0.0
      %439 = vmatpush1.msra.mxu0 0.0
      %440 = vmatprep.subr.mxu0 0.0
      %441 = vmatpush1.msra.mxu0 0.0
      %442 = vmatprep.subr.mxu0 0.0
      %443 = vmatpush1.msra.mxu0 0.0
      %444 = vmatprep.subr.mxu0 0.0
      %445 = vmatpush1.msra.mxu0 0.0
      %446 = vmatprep.subr.mxu0 0.0
      %447 = vmatpush1.msra.mxu0 0.0
      %448 = vmatprep.subr.mxu0 0.0
      %449 = vmatpush1.msra.mxu0 0.0
      %450 = vmatprep.subr.mxu0 0.0
      %451 = vmatpush1.msra.mxu0 0.0
      %452 = vmatprep.subr.mxu0 0.0
      %453 = vmatpush1.msra.mxu0 0.0
      %454 = vmatprep.mubr.f32.mxu0 0.0
      %455 = vmatmul.mubr.f32.gmra.mrb[0].mxu0 %v249
      %v456 = vpop.f32.mrb[0].mxu0
      %v457 = vadd.f32 %v388, %v456
      %v458 = vpop.f32.mrb[0].mxu0
      %459 = vmatprep.mubr.f32.mxu0 0.0
      %460 = vmatmul.mubr.f32.gmra.mrb[0].mxu0 %v252
      %v461 = vpop.f32.mrb[0].mxu0
      %v462 = vadd.f32 %v388, %v461
      %v463 = vpop.f32.mrb[0].mxu0
      %464 = vmatprep.mubr.f32.mxu0 0.0
      %465 = vmatmul.mubr.f32.gmra.mrb[0].mxu0 %v255
      %v466 = vpop.f32.mrb[0].mxu0
      %v467 = vadd.f32 %v388, %v466
      %v468 = vpop.f32.mrb[0].mxu0
      %469 = vmatprep.mubr.f32.mxu0 0.0
      %470 = vmatmul.mubr.f32.gmra.mrb[0].mxu0 %v258
      %v471 = vpop.f32.mrb[0].mxu0
      %v472 = vadd.f32 %v388, %v471
      %v473 = vpop.f32.mrb[0].mxu0
      %474 = vmatprep.mubr.f32.mxu0 0.0
      %475 = vmatmul.mubr.f32.gmra.mrb[0].mxu0 %v261
      %v476 = vpop.f32.mrb[0].mxu0
      %v477 = vadd.f32 %v388, %v476
      %v478 = vpop.f32.mrb[0].mxu0
      %479 = vmatprep.mubr.f32.mxu0 0.0
      %480 = vmatmul.mubr.f32.gmra.mrb[0].mxu0 %v264
      %v481 = vpop.f32.mrb[0].mxu0
      %v482 = vadd.f32 %v388, %v481
      %v483 = vpop.f32.mrb[0].mxu0
      %484 = vmatprep.mubr.f32.mxu0 0.0
      %485 = vmatmul.mubr.f32.gmra.mrb[0].mxu0 %v267
      %v486 = vpop.f32.mrb[0].mxu0
      %v487 = vadd.f32 %v388, %v486
      %v488 = vpop.f32.mrb[0].mxu0
      %489 = vmatprep.mubr.f32.mxu0 0.0
      %490 = vmatmul.mubr.f32.gmra.mrb[0].mxu0 %v270
      %v491 = vpop.f32.mrb[0].mxu0
      %v492 = vadd.f32 %v388, %v491
      %v493 = vpop.f32.mrb[0].mxu0
      %494 = vdwg.mxu0
      %s495 = scalar_lea.vmem %s1, 64
      %v496 = vld [vmem:[%s495] sm:$0xff]
      %v497 = vld [vmem:[%s495 + $0x8] sm:$0xff]
      %v498 = vld [vmem:[%s495 + $0x10] sm:$0xff]
      %v499 = vld [vmem:[%s495 + $0x18] sm:$0xff]
      %s500 = scalar_lea.vmem %s2, 2
      %v501 = vld [vmem:[%s500] sm:$0x1]
      %v503 = vlaneseq
      %v504 = vshrl.u32 %v503, 7
      %v505 = vsub.s32 0, %v504
      %v506 = vrot.slane %v501, %v505
      %508 = vmatprep.subr.mxu0 0.0
      %509 = vmatpush1.msra.mxu0 %v496
      %510 = vmatprep.subr.mxu0 0.0
      %511 = vmatpush1.msra.mxu0 %v497
      %512 = vmatprep.subr.mxu0 0.0
      %513 = vmatpush1.msra.mxu0 %v498
      %514 = vmatprep.subr.mxu0 0.0
      %515 = vmatpush1.msra.mxu0 %v499
      %516 = vmatprep.subr.mxu0 0.0
      %517 = vmatpush1.msra.mxu0 0.0
      %518 = vmatprep.subr.mxu0 0.0
      %519 = vmatpush1.msra.mxu0 0.0
      %520 = vmatprep.subr.mxu0 0.0
      %521 = vmatpush1.msra.mxu0 0.0
      %522 = vmatprep.subr.mxu0 0.0
      %523 = vmatpush1.msra.mxu0 0.0
      %524 = vmatprep.subr.mxu0 0.0
      %525 = vmatpush1.msra.mxu0 0.0
      %526 = vmatprep.subr.mxu0 0.0
      %527 = vmatpush1.msra.mxu0 0.0
      %528 = vmatprep.subr.mxu0 0.0
      %529 = vmatpush1.msra.mxu0 0.0
      %530 = vmatprep.subr.mxu0 0.0
      %531 = vmatpush1.msra.mxu0 0.0
      %532 = vmatprep.subr.mxu0 0.0
      %533 = vmatpush1.msra.mxu0 0.0
      %534 = vmatprep.subr.mxu0 0.0
      %535 = vmatpush1.msra.mxu0 0.0
      %536 = vmatprep.subr.mxu0 0.0
      %537 = vmatpush1.msra.mxu0 0.0
      %538 = vmatprep.subr.mxu0 0.0
      %539 = vmatpush1.msra.mxu0 0.0
      %540 = vmatprep.subr.mxu0 0.0
      %541 = vmatpush1.msra.mxu0 0.0
      %542 = vmatprep.subr.mxu0 0.0
      %543 = vmatpush1.msra.mxu0 0.0
      %544 = vmatprep.subr.mxu0 0.0
      %545 = vmatpush1.msra.mxu0 0.0
      %546 = vmatprep.subr.mxu0 0.0
      %547 = vmatpush1.msra.mxu0 0.0
      %548 = vmatprep.subr.mxu0 0.0
      %549 = vmatpush1.msra.mxu0 0.0
      %550 = vmatprep.subr.mxu0 0.0
      %551 = vmatpush1.msra.mxu0 0.0
      %552 = vmatprep.subr.mxu0 0.0
      %553 = vmatpush1.msra.mxu0 0.0
      %554 = vmatprep.subr.mxu0 0.0
      %555 = vmatpush1.msra.mxu0 0.0
      %556 = vmatprep.subr.mxu0 0.0
      %557 = vmatpush1.msra.mxu0 0.0
      %558 = vmatprep.subr.mxu0 0.0
      %559 = vmatpush1.msra.mxu0 0.0
      %560 = vmatprep.subr.mxu0 0.0
      %561 = vmatpush1.msra.mxu0 0.0
      %562 = vmatprep.subr.mxu0 0.0
      %563 = vmatpush1.msra.mxu0 0.0
      %564 = vmatprep.subr.mxu0 0.0
      %565 = vmatpush1.msra.mxu0 0.0
      %566 = vmatprep.subr.mxu0 0.0
      %567 = vmatpush1.msra.mxu0 0.0
      %568 = vmatprep.subr.mxu0 0.0
      %569 = vmatpush1.msra.mxu0 0.0
      %570 = vmatprep.subr.mxu0 0.0
      %571 = vmatpush1.msra.mxu0 0.0
      %572 = vmatprep.mubr.f32.mxu0 0.0
      %573 = vmatmul.mubr.f32.gmra.mrb[0].mxu0 %v249
      %v574 = vpop.f32.mrb[0].mxu0
      %v575 = vadd.f32 %v506, %v574
      %v576 = vpop.f32.mrb[0].mxu0
      %577 = vmatprep.mubr.f32.mxu0 0.0
      %578 = vmatmul.mubr.f32.gmra.mrb[0].mxu0 %v252
      %v579 = vpop.f32.mrb[0].mxu0
      %v580 = vadd.f32 %v506, %v579
      %v581 = vpop.f32.mrb[0].mxu0
      %582 = vmatprep.mubr.f32.mxu0 0.0
      %583 = vmatmul.mubr.f32.gmra.mrb[0].mxu0 %v255
      %v584 = vpop.f32.mrb[0].mxu0
      %v585 = vadd.f32 %v506, %v584
      %v586 = vpop.f32.mrb[0].mxu0
      %587 = vmatprep.mubr.f32.mxu0 0.0
      %588 = vmatmul.mubr.f32.gmra.mrb[0].mxu0 %v258
      %v589 = vpop.f32.mrb[0].mxu0
      %v590 = vadd.f32 %v506, %v589
      %v591 = vpop.f32.mrb[0].mxu0
      %592 = vmatprep.mubr.f32.mxu0 0.0
      %593 = vmatmul.mubr.f32.gmra.mrb[0].mxu0 %v261
      %v594 = vpop.f32.mrb[0].mxu0
      %v595 = vadd.f32 %v506, %v594
      %v596 = vpop.f32.mrb[0].mxu0
      %597 = vmatprep.mubr.f32.mxu0 0.0
      %598 = vmatmul.mubr.f32.gmra.mrb[0].mxu0 %v264
      %v599 = vpop.f32.mrb[0].mxu0
      %v600 = vadd.f32 %v506, %v599
      %v601 = vpop.f32.mrb[0].mxu0
      %602 = vmatprep.mubr.f32.mxu0 0.0
      %603 = vmatmul.mubr.f32.gmra.mrb[0].mxu0 %v267
      %v604 = vpop.f32.mrb[0].mxu0
      %v605 = vadd.f32 %v506, %v604
      %v606 = vpop.f32.mrb[0].mxu0
      %607 = vmatprep.mubr.f32.mxu0 0.0
      %608 = vmatmul.mubr.f32.gmra.mrb[0].mxu0 %v270
      %v609 = vpop.f32.mrb[0].mxu0
      %v610 = vadd.f32 %v506, %v609
      %v611 = vpop.f32.mrb[0].mxu0
      %612 = vdwg.mxu0
      %v613 = vmul.f32 %v339, 0.35355338
      %v614 = vmul.f32 %v344, 0.35355338
      %v615 = vmul.f32 %v349, 0.35355338
      %v616 = vmul.f32 %v354, 0.35355338
      %v617 = vmul.f32 %v359, 0.35355338
      %v618 = vmul.f32 %v364, 0.35355338
      %v619 = vmul.f32 %v369, 0.35355338
      %v620 = vmul.f32 %v374, 0.35355338
      %vm621 = vcmask 64512
      %v623 = vsel %vm621, %v613, 0
      %v626 = vsel %vm621, %v614, 0
      %v629 = vsel %vm621, %v457, 0
      %v632 = vsel %vm621, %v462, 0
      %634 = vmatprep.subr.mxu0 0.0
      %635 = vmatpush1.xpose.msra.mxu0 %v629
      %636 = vmatprep.subr.mxu0 0.0
      %637 = vmatpush1.xpose.msra.mxu0 %v632
      %638 = vmatprep.subr.mxu0 0.0
      %639 = vmatpush1.xpose.msra.mxu0 0.0
      %640 = vmatprep.subr.mxu0 0.0
      %641 = vmatpush1.xpose.msra.mxu0 0.0
      %642 = vmatprep.subr.mxu0 0.0
      %643 = vmatpush1.xpose.msra.mxu0 0.0
      %644 = vmatprep.subr.mxu0 0.0
      %645 = vmatpush1.xpose.msra.mxu0 0.0
      %646 = vmatprep.subr.mxu0 0.0
      %647 = vmatpush1.xpose.msra.mxu0 0.0
      %648 = vmatprep.subr.mxu0 0.0
      %649 = vmatpush1.xpose.msra.mxu0 0.0
      %650 = vmatprep.subr.mxu0 0.0
      %651 = vmatpush1.xpose.msra.mxu0 0.0
      %652 = vmatprep.subr.mxu0 0.0
      %653 = vmatpush1.xpose.msra.mxu0 0.0
      %654 = vmatprep.subr.mxu0 0.0
      %655 = vmatpush1.xpose.msra.mxu0 0.0
      %656 = vmatprep.subr.mxu0 0.0
      %657 = vmatpush1.xpose.msra.mxu0 0.0
      %658 = vmatprep.subr.mxu0 0.0
      %659 = vmatpush1.xpose.msra.mxu0 0.0
      %660 = vmatprep.subr.mxu0 0.0
      %661 = vmatpush1.xpose.msra.mxu0 0.0
      %662 = vmatprep.subr.mxu0 0.0
      %663 = vmatpush1.xpose.msra.mxu0 0.0
      %664 = vmatprep.subr.mxu0 0.0
      %665 = vmatpush1.xpose.msra.mxu0 0.0
      %666 = vmatprep.subr.mxu0 0.0
      %667 = vmatpush1.xpose.msra.mxu0 0.0
      %668 = vmatprep.subr.mxu0 0.0
      %669 = vmatpush1.xpose.msra.mxu0 0.0
      %670 = vmatprep.subr.mxu0 0.0
      %671 = vmatpush1.xpose.msra.mxu0 0.0
      %672 = vmatprep.subr.mxu0 0.0
      %673 = vmatpush1.xpose.msra.mxu0 0.0
      %674 = vmatprep.subr.mxu0 0.0
      %675 = vmatpush1.xpose.msra.mxu0 0.0
      %676 = vmatprep.subr.mxu0 0.0
      %677 = vmatpush1.xpose.msra.mxu0 0.0
      %678 = vmatprep.subr.mxu0 0.0
      %679 = vmatpush1.xpose.msra.mxu0 0.0
      %680 = vmatprep.subr.mxu0 0.0
      %681 = vmatpush1.xpose.msra.mxu0 0.0
      %682 = vmatprep.subr.mxu0 0.0
      %683 = vmatpush1.xpose.msra.mxu0 0.0
      %684 = vmatprep.subr.mxu0 0.0
      %685 = vmatpush1.xpose.msra.mxu0 0.0
      %686 = vmatprep.subr.mxu0 0.0
      %687 = vmatpush1.xpose.msra.mxu0 0.0
      %688 = vmatprep.subr.mxu0 0.0
      %689 = vmatpush1.xpose.msra.mxu0 0.0
      %690 = vmatprep.subr.mxu0 0.0
      %691 = vmatpush1.xpose.msra.mxu0 0.0
      %692 = vmatprep.subr.mxu0 0.0
      %693 = vmatpush1.xpose.msra.mxu0 0.0
      %694 = vmatprep.subr.mxu0 0.0
      %695 = vmatpush1.xpose.msra.mxu0 0.0
      %696 = vmatprep.subr.mxu0 0.0
      %697 = vmatpush1.xpose.msra.mxu0 0.0
      %698 = vmatprep.mubr.f32.mxu0 0.0
      %699 = vmatmul.mubr.f32.gmra.mrb[0].mxu0 %v623
      %v700 = vpop.f32.mrb[0].mxu0
      %v701 = vadd.f32 0.0, %v700
      %v702 = vpop.f32.mrb[0].mxu0
      %703 = vmatprep.mubr.f32.mxu0 0.0
      %704 = vmatmul.mubr.f32.gmra.mrb[0].mxu0 %v626
      %v705 = vpop.f32.mrb[0].mxu0
      %v706 = vadd.f32 0.0, %v705
      %v707 = vpop.f32.mrb[0].mxu0
      %708 = vdwg.mxu0
      %v710 = vsel %vm621, %v615, 0
      %v713 = vsel %vm621, %v616, 0
      %v716 = vsel %vm621, %v467, 0
      %v719 = vsel %vm621, %v472, 0
      %721 = vmatprep.subr.mxu0 0.0
      %722 = vmatpush1.xpose.msra.mxu0 %v716
      %723 = vmatprep.subr.mxu0 0.0
      %724 = vmatpush1.xpose.msra.mxu0 %v719
      %725 = vmatprep.subr.mxu0 0.0
      %726 = vmatpush1.xpose.msra.mxu0 0.0
      %727 = vmatprep.subr.mxu0 0.0
      %728 = vmatpush1.xpose.msra.mxu0 0.0
      %729 = vmatprep.subr.mxu0 0.0
      %730 = vmatpush1.xpose.msra.mxu0 0.0
      %731 = vmatprep.subr.mxu0 0.0
      %732 = vmatpush1.xpose.msra.mxu0 0.0
      %733 = vmatprep.subr.mxu0 0.0
      %734 = vmatpush1.xpose.msra.mxu0 0.0
      %735 = vmatprep.subr.mxu0 0.0
      %736 = vmatpush1.xpose.msra.mxu0 0.0
      %737 = vmatprep.subr.mxu0 0.0
      %738 = vmatpush1.xpose.msra.mxu0 0.0
      %739 = vmatprep.subr.mxu0 0.0
      %740 = vmatpush1.xpose.msra.mxu0 0.0
      %741 = vmatprep.subr.mxu0 0.0
      %742 = vmatpush1.xpose.msra.mxu0 0.0
      %743 = vmatprep.subr.mxu0 0.0
      %744 = vmatpush1.xpose.msra.mxu0 0.0
      %745 = vmatprep.subr.mxu0 0.0
      %746 = vmatpush1.xpose.msra.mxu0 0.0
      %747 = vmatprep.subr.mxu0 0.0
      %748 = vmatpush1.xpose.msra.mxu0 0.0
      %749 = vmatprep.subr.mxu0 0.0
      %750 = vmatpush1.xpose.msra.mxu0 0.0
      %751 = vmatprep.subr.mxu0 0.0
      %752 = vmatpush1.xpose.msra.mxu0 0.0
      %753 = vmatprep.subr.mxu0 0.0
      %754 = vmatpush1.xpose.msra.mxu0 0.0
      %755 = vmatprep.subr.mxu0 0.0
      %756 = vmatpush1.xpose.msra.mxu0 0.0
      %757 = vmatprep.subr.mxu0 0.0
      %758 = vmatpush1.xpose.msra.mxu0 0.0
      %759 = vmatprep.subr.mxu0 0.0
      %760 = vmatpush1.xpose.msra.mxu0 0.0
      %761 = vmatprep.subr.mxu0 0.0
      %762 = vmatpush1.xpose.msra.mxu0 0.0
      %763 = vmatprep.subr.mxu0 0.0
      %764 = vmatpush1.xpose.msra.mxu0 0.0
      %765 = vmatprep.subr.mxu0 0.0
      %766 = vmatpush1.xpose.msra.mxu0 0.0
      %767 = vmatprep.subr.mxu0 0.0
      %768 = vmatpush1.xpose.msra.mxu0 0.0
      %769 = vmatprep.subr.mxu0 0.0
      %770 = vmatpush1.xpose.msra.mxu0 0.0
      %771 = vmatprep.subr.mxu0 0.0
      %772 = vmatpush1.xpose.msra.mxu0 0.0
      %773 = vmatprep.subr.mxu0 0.0
      %774 = vmatpush1.xpose.msra.mxu0 0.0
      %775 = vmatprep.subr.mxu0 0.0
      %776 = vmatpush1.xpose.msra.mxu0 0.0
      %777 = vmatprep.subr.mxu0 0.0
      %778 = vmatpush1.xpose.msra.mxu0 0.0
      %779 = vmatprep.subr.mxu0 0.0
      %780 = vmatpush1.xpose.msra.mxu0 0.0
      %781 = vmatprep.subr.mxu0 0.0
      %782 = vmatpush1.xpose.msra.mxu0 0.0
      %783 = vmatprep.subr.mxu0 0.0
      %784 = vmatpush1.xpose.msra.mxu0 0.0
      %785 = vmatprep.mubr.f32.mxu0 0.0
      %786 = vmatmul.mubr.f32.gmra.mrb[0].mxu0 %v710
      %v787 = vpop.f32.mrb[0].mxu0
      %v788 = vadd.f32 0.0, %v787
      %v789 = vpop.f32.mrb[0].mxu0
      %790 = vmatprep.mubr.f32.mxu0 0.0
      %791 = vmatmul.mubr.f32.gmra.mrb[0].mxu0 %v713
      %v792 = vpop.f32.mrb[0].mxu0
      %v793 = vadd.f32 0.0, %v792
      %v794 = vpop.f32.mrb[0].mxu0
      %795 = vdwg.mxu0
      %v797 = vsel %vm621, %v617, 0
      %v800 = vsel %vm621, %v618, 0
      %v803 = vsel %vm621, %v477, 0
      %v806 = vsel %vm621, %v482, 0
      %808 = vmatprep.subr.mxu0 0.0
      %809 = vmatpush1.xpose.msra.mxu0 %v803
      %810 = vmatprep.subr.mxu0 0.0
      %811 = vmatpush1.xpose.msra.mxu0 %v806
      %812 = vmatprep.subr.mxu0 0.0
      %813 = vmatpush1.xpose.msra.mxu0 0.0
      %814 = vmatprep.subr.mxu0 0.0
      %815 = vmatpush1.xpose.msra.mxu0 0.0
      %816 = vmatprep.subr.mxu0 0.0
      %817 = vmatpush1.xpose.msra.mxu0 0.0
      %818 = vmatprep.subr.mxu0 0.0
      %819 = vmatpush1.xpose.msra.mxu0 0.0
      %820 = vmatprep.subr.mxu0 0.0
      %821 = vmatpush1.xpose.msra.mxu0 0.0
      %822 = vmatprep.subr.mxu0 0.0
      %823 = vmatpush1.xpose.msra.mxu0 0.0
      %824 = vmatprep.subr.mxu0 0.0
      %825 = vmatpush1.xpose.msra.mxu0 0.0
      %826 = vmatprep.subr.mxu0 0.0
      %827 = vmatpush1.xpose.msra.mxu0 0.0
      %828 = vmatprep.subr.mxu0 0.0
      %829 = vmatpush1.xpose.msra.mxu0 0.0
      %830 = vmatprep.subr.mxu0 0.0
      %831 = vmatpush1.xpose.msra.mxu0 0.0
      %832 = vmatprep.subr.mxu0 0.0
      %833 = vmatpush1.xpose.msra.mxu0 0.0
      %834 = vmatprep.subr.mxu0 0.0
      %835 = vmatpush1.xpose.msra.mxu0 0.0
      %836 = vmatprep.subr.mxu0 0.0
      %837 = vmatpush1.xpose.msra.mxu0 0.0
      %838 = vmatprep.subr.mxu0 0.0
      %839 = vmatpush1.xpose.msra.mxu0 0.0
      %840 = vmatprep.subr.mxu0 0.0
      %841 = vmatpush1.xpose.msra.mxu0 0.0
      %842 = vmatprep.subr.mxu0 0.0
      %843 = vmatpush1.xpose.msra.mxu0 0.0
      %844 = vmatprep.subr.mxu0 0.0
      %845 = vmatpush1.xpose.msra.mxu0 0.0
      %846 = vmatprep.subr.mxu0 0.0
      %847 = vmatpush1.xpose.msra.mxu0 0.0
      %848 = vmatprep.subr.mxu0 0.0
      %849 = vmatpush1.xpose.msra.mxu0 0.0
      %850 = vmatprep.subr.mxu0 0.0
      %851 = vmatpush1.xpose.msra.mxu0 0.0
      %852 = vmatprep.subr.mxu0 0.0
      %853 = vmatpush1.xpose.msra.mxu0 0.0
      %854 = vmatprep.subr.mxu0 0.0
      %855 = vmatpush1.xpose.msra.mxu0 0.0
      %856 = vmatprep.subr.mxu0 0.0
      %857 = vmatpush1.xpose.msra.mxu0 0.0
      %858 = vmatprep.subr.mxu0 0.0
      %859 = vmatpush1.xpose.msra.mxu0 0.0
      %860 = vmatprep.subr.mxu0 0.0
      %861 = vmatpush1.xpose.msra.mxu0 0.0
      %862 = vmatprep.subr.mxu0 0.0
      %863 = vmatpush1.xpose.msra.mxu0 0.0
      %864 = vmatprep.subr.mxu0 0.0
      %865 = vmatpush1.xpose.msra.mxu0 0.0
      %866 = vmatprep.subr.mxu0 0.0
      %867 = vmatpush1.xpose.msra.mxu0 0.0
      %868 = vmatprep.subr.mxu0 0.0
      %869 = vmatpush1.xpose.msra.mxu0 0.0
      %870 = vmatprep.subr.mxu0 0.0
      %871 = vmatpush1.xpose.msra.mxu0 0.0
      %872 = vmatprep.mubr.f32.mxu0 0.0
      %873 = vmatmul.mubr.f32.gmra.mrb[0].mxu0 %v797
      %v874 = vpop.f32.mrb[0].mxu0
      %v875 = vadd.f32 0.0, %v874
      %v876 = vpop.f32.mrb[0].mxu0
      %877 = vmatprep.mubr.f32.mxu0 0.0
      %878 = vmatmul.mubr.f32.gmra.mrb[0].mxu0 %v800
      %v879 = vpop.f32.mrb[0].mxu0
      %v880 = vadd.f32 0.0, %v879
      %v881 = vpop.f32.mrb[0].mxu0
      %882 = vdwg.mxu0
      %v884 = vsel %vm621, %v619, 0
      %v887 = vsel %vm621, %v620, 0
      %v890 = vsel %vm621, %v487, 0
      %v893 = vsel %vm621, %v492, 0
      %895 = vmatprep.subr.mxu0 0.0
      %896 = vmatpush1.xpose.msra.mxu0 %v890
      %897 = vmatprep.subr.mxu0 0.0
      %898 = vmatpush1.xpose.msra.mxu0 %v893
      %899 = vmatprep.subr.mxu0 0.0
      %900 = vmatpush1.xpose.msra.mxu0 0.0
      %901 = vmatprep.subr.mxu0 0.0
      %902 = vmatpush1.xpose.msra.mxu0 0.0
      %903 = vmatprep.subr.mxu0 0.0
      %904 = vmatpush1.xpose.msra.mxu0 0.0
      %905 = vmatprep.subr.mxu0 0.0
      %906 = vmatpush1.xpose.msra.mxu0 0.0
      %907 = vmatprep.subr.mxu0 0.0
      %908 = vmatpush1.xpose.msra.mxu0 0.0
      %909 = vmatprep.subr.mxu0 0.0
      %910 = vmatpush1.xpose.msra.mxu0 0.0
      %911 = vmatprep.subr.mxu0 0.0
      %912 = vmatpush1.xpose.msra.mxu0 0.0
      %913 = vmatprep.subr.mxu0 0.0
      %914 = vmatpush1.xpose.msra.mxu0 0.0
      %915 = vmatprep.subr.mxu0 0.0
      %916 = vmatpush1.xpose.msra.mxu0 0.0
      %917 = vmatprep.subr.mxu0 0.0
      %918 = vmatpush1.xpose.msra.mxu0 0.0
      %919 = vmatprep.subr.mxu0 0.0
      %920 = vmatpush1.xpose.msra.mxu0 0.0
      %921 = vmatprep.subr.mxu0 0.0
      %922 = vmatpush1.xpose.msra.mxu0 0.0
      %923 = vmatprep.subr.mxu0 0.0
      %924 = vmatpush1.xpose.msra.mxu0 0.0
      %925 = vmatprep.subr.mxu0 0.0
      %926 = vmatpush1.xpose.msra.mxu0 0.0
      %927 = vmatprep.subr.mxu0 0.0
      %928 = vmatpush1.xpose.msra.mxu0 0.0
      %929 = vmatprep.subr.mxu0 0.0
      %930 = vmatpush1.xpose.msra.mxu0 0.0
      %931 = vmatprep.subr.mxu0 0.0
      %932 = vmatpush1.xpose.msra.mxu0 0.0
      %933 = vmatprep.subr.mxu0 0.0
      %934 = vmatpush1.xpose.msra.mxu0 0.0
      %935 = vmatprep.subr.mxu0 0.0
      %936 = vmatpush1.xpose.msra.mxu0 0.0
      %937 = vmatprep.subr.mxu0 0.0
      %938 = vmatpush1.xpose.msra.mxu0 0.0
      %939 = vmatprep.subr.mxu0 0.0
      %940 = vmatpush1.xpose.msra.mxu0 0.0
      %941 = vmatprep.subr.mxu0 0.0
      %942 = vmatpush1.xpose.msra.mxu0 0.0
      %943 = vmatprep.subr.mxu0 0.0
      %944 = vmatpush1.xpose.msra.mxu0 0.0
      %945 = vmatprep.subr.mxu0 0.0
      %946 = vmatpush1.xpose.msra.mxu0 0.0
      %947 = vmatprep.subr.mxu0 0.0
      %948 = vmatpush1.xpose.msra.mxu0 0.0
      %949 = vmatprep.subr.mxu0 0.0
      %950 = vmatpush1.xpose.msra.mxu0 0.0
      %951 = vmatprep.subr.mxu0 0.0
      %952 = vmatpush1.xpose.msra.mxu0 0.0
      %953 = vmatprep.subr.mxu0 0.0
      %954 = vmatpush1.xpose.msra.mxu0 0.0
      %955 = vmatprep.subr.mxu0 0.0
      %956 = vmatpush1.xpose.msra.mxu0 0.0
      %957 = vmatprep.subr.mxu0 0.0
      %958 = vmatpush1.xpose.msra.mxu0 0.0
      %959 = vmatprep.mubr.f32.mxu0 0.0
      %960 = vmatmul.mubr.f32.gmra.mrb[0].mxu0 %v884
      %v961 = vpop.f32.mrb[0].mxu0
      %v962 = vadd.f32 0.0, %v961
      %v963 = vpop.f32.mrb[0].mxu0
      %964 = vmatprep.mubr.f32.mxu0 0.0
      %965 = vmatmul.mubr.f32.gmra.mrb[0].mxu0 %v887
      %v966 = vpop.f32.mrb[0].mxu0
      %v967 = vadd.f32 0.0, %v966
      %v968 = vpop.f32.mrb[0].mxu0
      %969 = vdwg.mxu0
      %vm970 = vcmask 130048
      %v971 = vsel %vm970, %v701, -inf
      %972 = vmax.xlane.f32.xlu0 %v971
      %v973 = vpop.xlane.xlu0 %972
      %v974 = vsel %vm970, %v706, -inf
      %975 = vmax.xlane.f32.xlu0 %v974
      %v976 = vpop.xlane.xlu0 %975
      %v977 = vsel %vm970, %v788, -inf
      %978 = vmax.xlane.f32.xlu0 %v977
      %v979 = vpop.xlane.xlu0 %978
      %v980 = vsel %vm970, %v793, -inf
      %981 = vmax.xlane.f32.xlu0 %v980
      %v982 = vpop.xlane.xlu0 %981
      %v983 = vsel %vm970, %v875, -inf
      %984 = vmax.xlane.f32.xlu0 %v983
      %v985 = vpop.xlane.xlu0 %984
      %v986 = vsel %vm970, %v880, -inf
      %987 = vmax.xlane.f32.xlu0 %v986
      %v988 = vpop.xlane.xlu0 %987
      %v989 = vsel %vm970, %v962, -inf
      %990 = vmax.xlane.f32.xlu0 %v989
      %v991 = vpop.xlane.xlu0 %990
      %v992 = vsel %vm970, %v967, -inf
      %993 = vmax.xlane.f32.xlu0 %v992
      %v994 = vpop.xlane.xlu0 %993
      %v995 = vsub.f32 %v701, %v973
      %v996 = vsub.f32 %v706, %v976
      %v997 = vsub.f32 %v788, %v979
      %v998 = vsub.f32 %v793, %v982
      %v999 = vsub.f32 %v875, %v985
      %v1000 = vsub.f32 %v880, %v988
      %v1001 = vsub.f32 %v962, %v991
      %v1002 = vsub.f32 %v967, %v994
      %v1003 = vmul.f32 %v995, 1.442695
      %v1004 = vpow.pop %v1003
      %v1005 = vmul.f32 %v996, 1.442695
      %v1006 = vpow.pop %v1005
      %v1007 = vmul.f32 %v997, 1.442695
      %v1008 = vpow.pop %v1007
      %v1009 = vmul.f32 %v998, 1.442695
      %v1010 = vpow.pop %v1009
      %v1011 = vmul.f32 %v999, 1.442695
      %v1012 = vpow.pop %v1011
      %v1013 = vmul.f32 %v1000, 1.442695
      %v1014 = vpow.pop %v1013
      %v1015 = vmul.f32 %v1001, 1.442695
      %v1016 = vpow.pop %v1015
      %v1017 = vmul.f32 %v1002, 1.442695
      %v1018 = vpow.pop %v1017
      %v1019 = vsel %vm970, %v1004, 0.0
      %1020 = vadd.xlane.f32.xlu0 %v1019
      %v1021 = vpop.xlane.xlu0 %1020
      %v1022 = vsel %vm970, %v1006, 0.0
      %1023 = vadd.xlane.f32.xlu0 %v1022
      %v1024 = vpop.xlane.xlu0 %1023
      %v1025 = vsel %vm970, %v1008, 0.0
      %1026 = vadd.xlane.f32.xlu0 %v1025
      %v1027 = vpop.xlane.xlu0 %1026
      %v1028 = vsel %vm970, %v1010, 0.0
      %1029 = vadd.xlane.f32.xlu0 %v1028
      %v1030 = vpop.xlane.xlu0 %1029
      %v1031 = vsel %vm970, %v1012, 0.0
      %1032 = vadd.xlane.f32.xlu0 %v1031
      %v1033 = vpop.xlane.xlu0 %1032
      %v1034 = vsel %vm970, %v1014, 0.0
      %1035 = vadd.xlane.f32.xlu0 %v1034
      %v1036 = vpop.xlane.xlu0 %1035
      %v1037 = vsel %vm970, %v1016, 0.0
      %1038 = vadd.xlane.f32.xlu0 %v1037
      %v1039 = vpop.xlane.xlu0 %1038
      %v1040 = vsel %vm970, %v1018, 0.0
      %1041 = vadd.xlane.f32.xlu0 %v1040
      %v1042 = vpop.xlane.xlu0 %1041
      %v1043 = vrcp.pop %v1021
      %v1044 = vmul.f32 %v1004, %v1043
      %v1045 = vrcp.pop %v1024
      %v1046 = vmul.f32 %v1006, %v1045
      %v1047 = vrcp.pop %v1027
      %v1048 = vmul.f32 %v1008, %v1047
      %v1049 = vrcp.pop %v1030
      %v1050 = vmul.f32 %v1010, %v1049
      %v1051 = vrcp.pop %v1033
      %v1052 = vmul.f32 %v1012, %v1051
      %v1053 = vrcp.pop %v1036
      %v1054 = vmul.f32 %v1014, %v1053
      %v1055 = vrcp.pop %v1039
      %v1056 = vmul.f32 %v1016, %v1055
      %v1057 = vrcp.pop %v1042
      %v1058 = vmul.f32 %v1018, %v1057
      %v1060 = vsel %vm970, %v1044, 0
      %v1063 = vsel %vm970, %v1046, 0
      %1065 = vmatprep.subr.mxu0 0.0
      %1066 = vmatpush1.msra.mxu0 %v575
      %1067 = vmatprep.subr.mxu0 0.0
      %1068 = vmatpush1.msra.mxu0 %v580
      %1069 = vmatprep.subr.mxu0 0.0
      %1070 = vmatpush1.msra.mxu0 0.0
      %1071 = vmatprep.subr.mxu0 0.0
      %1072 = vmatpush1.msra.mxu0 0.0
      %1073 = vmatprep.subr.mxu0 0.0
      %1074 = vmatpush1.msra.mxu0 0.0
      %1075 = vmatprep.subr.mxu0 0.0
      %1076 = vmatpush1.msra.mxu0 0.0
      %1077 = vmatprep.subr.mxu0 0.0
      %1078 = vmatpush1.msra.mxu0 0.0
      %1079 = vmatprep.subr.mxu0 0.0
      %1080 = vmatpush1.msra.mxu0 0.0
      %1081 = vmatprep.subr.mxu0 0.0
      %1082 = vmatpush1.msra.mxu0 0.0
      %1083 = vmatprep.subr.mxu0 0.0
      %1084 = vmatpush1.msra.mxu0 0.0
      %1085 = vmatprep.subr.mxu0 0.0
      %1086 = vmatpush1.msra.mxu0 0.0
      %1087 = vmatprep.subr.mxu0 0.0
      %1088 = vmatpush1.msra.mxu0 0.0
      %1089 = vmatprep.subr.mxu0 0.0
      %1090 = vmatpush1.msra.mxu0 0.0
      %1091 = vmatprep.subr.mxu0 0.0
      %1092 = vmatpush1.msra.mxu0 0.0
      %1093 = vmatprep.subr.mxu0 0.0
      %1094 = vmatpush1.msra.mxu0 0.0
      %1095 = vmatprep.subr.mxu0 0.0
      %1096 = vmatpush1.msra.mxu0 0.0
      %1097 = vmatprep.subr.mxu0 0.0
      %1098 = vmatpush1.msra.mxu0 0.0
      %1099 = vmatprep.subr.mxu0 0.0
      %1100 = vmatpush1.msra.mxu0 0.0
      %1101 = vmatprep.subr.mxu0 0.0
      %1102 = vmatpush1.msra.mxu0 0.0
      %1103 = vmatprep.subr.mxu0 0.0
      %1104 = vmatpush1.msra.mxu0 0.0
      %1105 = vmatprep.subr.mxu0 0.0
      %1106 = vmatpush1.msra.mxu0 0.0
      %1107 = vmatprep.subr.mxu0 0.0
      %1108 = vmatpush1.msra.mxu0 0.0
      %1109 = vmatprep.subr.mxu0 0.0
      %1110 = vmatpush1.msra.mxu0 0.0
      %1111 = vmatprep.subr.mxu0 0.0
      %1112 = vmatpush1.msra.mxu0 0.0
      %1113 = vmatprep.subr.mxu0 0.0
      %1114 = vmatpush1.msra.mxu0 0.0
      %1115 = vmatprep.subr.mxu0 0.0
      %1116 = vmatpush1.msra.mxu0 0.0
      %1117 = vmatprep.subr.mxu0 0.0
      %1118 = vmatpush1.msra.mxu0 0.0
      %1119 = vmatprep.subr.mxu0 0.0
      %1120 = vmatpush1.msra.mxu0 0.0
      %1121 = vmatprep.subr.mxu0 0.0
      %1122 = vmatpush1.msra.mxu0 0.0
      %1123 = vmatprep.subr.mxu0 0.0
      %1124 = vmatpush1.msra.mxu0 0.0
      %1125 = vmatprep.subr.mxu0 0.0
      %1126 = vmatpush1.msra.mxu0 0.0
      %1127 = vmatprep.subr.mxu0 0.0
      %1128 = vmatpush1.msra.mxu0 0.0
      %1129 = vmatprep.mubr.f32.mxu0 0.0
      %1130 = vmatmul.mubr.f32.gmra.mrb[0].mxu0 %v1060
      %v1131 = vpop.f32.mrb[0].mxu0
      %v1132 = vadd.f32 0.0, %v1131
      %v1133 = vpop.f32.mrb[0].mxu0
      %1134 = vmatprep.mubr.f32.mxu0 0.0
      %1135 = vmatmul.mubr.f32.gmra.mrb[0].mxu0 %v1063
      %v1136 = vpop.f32.mrb[0].mxu0
      %v1137 = vadd.f32 0.0, %v1136
      %v1138 = vpop.f32.mrb[0].mxu0
      %1139 = vdwg.mxu0
      %v1141 = vsel %vm970, %v1048, 0
      %v1144 = vsel %vm970, %v1050, 0
      %1146 = vmatprep.subr.mxu0 0.0
      %1147 = vmatpush1.msra.mxu0 %v585
      %1148 = vmatprep.subr.mxu0 0.0
      %1149 = vmatpush1.msra.mxu0 %v590
      %1150 = vmatprep.subr.mxu0 0.0
      %1151 = vmatpush1.msra.mxu0 0.0
      %1152 = vmatprep.subr.mxu0 0.0
      %1153 = vmatpush1.msra.mxu0 0.0
      %1154 = vmatprep.subr.mxu0 0.0
      %1155 = vmatpush1.msra.mxu0 0.0
      %1156 = vmatprep.subr.mxu0 0.0
      %1157 = vmatpush1.msra.mxu0 0.0
      %1158 = vmatprep.subr.mxu0 0.0
      %1159 = vmatpush1.msra.mxu0 0.0
      %1160 = vmatprep.subr.mxu0 0.0
      %1161 = vmatpush1.msra.mxu0 0.0
      %1162 = vmatprep.subr.mxu0 0.0
      %1163 = vmatpush1.msra.mxu0 0.0
      %1164 = vmatprep.subr.mxu0 0.0
      %1165 = vmatpush1.msra.mxu0 0.0
      %1166 = vmatprep.subr.mxu0 0.0
      %1167 = vmatpush1.msra.mxu0 0.0
      %1168 = vmatprep.subr.mxu0 0.0
      %1169 = vmatpush1.msra.mxu0 0.0
      %1170 = vmatprep.subr.mxu0 0.0
      %1171 = vmatpush1.msra.mxu0 0.0
      %1172 = vmatprep.subr.mxu0 0.0
      %1173 = vmatpush1.msra.mxu0 0.0
      %1174 = vmatprep.subr.mxu0 0.0
      %1175 = vmatpush1.msra.mxu0 0.0
      %1176 = vmatprep.subr.mxu0 0.0
      %1177 = vmatpush1.msra.mxu0 0.0
      %1178 = vmatprep.subr.mxu0 0.0
      %1179 = vmatpush1.msra.mxu0 0.0
      %1180 = vmatprep.subr.mxu0 0.0
      %1181 = vmatpush1.msra.mxu0 0.0
      %1182 = vmatprep.subr.mxu0 0.0
      %1183 = vmatpush1.msra.mxu0 0.0
      %1184 = vmatprep.subr.mxu0 0.0
      %1185 = vmatpush1.msra.mxu0 0.0
      %1186 = vmatprep.subr.mxu0 0.0
      %1187 = vmatpush1.msra.mxu0 0.0
      %1188 = vmatprep.subr.mxu0 0.0
      %1189 = vmatpush1.msra.mxu0 0.0
      %1190 = vmatprep.subr.mxu0 0.0
      %1191 = vmatpush1.msra.mxu0 0.0
      %1192 = vmatprep.subr.mxu0 0.0
      %1193 = vmatpush1.msra.mxu0 0.0
      %1194 = vmatprep.subr.mxu0 0.0
      %1195 = vmatpush1.msra.mxu0 0.0
      %1196 = vmatprep.subr.mxu0 0.0
      %1197 = vmatpush1.msra.mxu0 0.0
      %1198 = vmatprep.subr.mxu0 0.0
      %1199 = vmatpush1.msra.mxu0 0.0
      %1200 = vmatprep.subr.mxu0 0.0
      %1201 = vmatpush1.msra.mxu0 0.0
      %1202 = vmatprep.subr.mxu0 0.0
      %1203 = vmatpush1.msra.mxu0 0.0
      %1204 = vmatprep.subr.mxu0 0.0
      %1205 = vmatpush1.msra.mxu0 0.0
      %1206 = vmatprep.subr.mxu0 0.0
      %1207 = vmatpush1.msra.mxu0 0.0
      %1208 = vmatprep.subr.mxu0 0.0
      %1209 = vmatpush1.msra.mxu0 0.0
      %1210 = vmatprep.mubr.f32.mxu0 0.0
      %1211 = vmatmul.mubr.f32.gmra.mrb[0].mxu0 %v1141
      %v1212 = vpop.f32.mrb[0].mxu0
      %v1213 = vadd.f32 0.0, %v1212
      %v1214 = vpop.f32.mrb[0].mxu0
      %1215 = vmatprep.mubr.f32.mxu0 0.0
      %1216 = vmatmul.mubr.f32.gmra.mrb[0].mxu0 %v1144
      %v1217 = vpop.f32.mrb[0].mxu0
      %v1218 = vadd.f32 0.0, %v1217
      %v1219 = vpop.f32.mrb[0].mxu0
      %1220 = vdwg.mxu0
      %v1222 = vsel %vm970, %v1052, 0
      %v1225 = vsel %vm970, %v1054, 0
      %1227 = vmatprep.subr.mxu0 0.0
      %1228 = vmatpush1.msra.mxu0 %v595
      %1229 = vmatprep.subr.mxu0 0.0
      %1230 = vmatpush1.msra.mxu0 %v600
      %1231 = vmatprep.subr.mxu0 0.0
      %1232 = vmatpush1.msra.mxu0 0.0
      %1233 = vmatprep.subr.mxu0 0.0
      %1234 = vmatpush1.msra.mxu0 0.0
      %1235 = vmatprep.subr.mxu0 0.0
      %1236 = vmatpush1.msra.mxu0 0.0
      %1237 = vmatprep.subr.mxu0 0.0
      %1238 = vmatpush1.msra.mxu0 0.0
      %1239 = vmatprep.subr.mxu0 0.0
      %1240 = vmatpush1.msra.mxu0 0.0
      %1241 = vmatprep.subr.mxu0 0.0
      %1242 = vmatpush1.msra.mxu0 0.0
      %1243 = vmatprep.subr.mxu0 0.0
      %1244 = vmatpush1.msra.mxu0 0.0
      %1245 = vmatprep.subr.mxu0 0.0
      %1246 = vmatpush1.msra.mxu0 0.0
      %1247 = vmatprep.subr.mxu0 0.0
      %1248 = vmatpush1.msra.mxu0 0.0
      %1249 = vmatprep.subr.mxu0 0.0
      %1250 = vmatpush1.msra.mxu0 0.0
      %1251 = vmatprep.subr.mxu0 0.0
      %1252 = vmatpush1.msra.mxu0 0.0
      %1253 = vmatprep.subr.mxu0 0.0
      %1254 = vmatpush1.msra.mxu0 0.0
      %1255 = vmatprep.subr.mxu0 0.0
      %1256 = vmatpush1.msra.mxu0 0.0
      %1257 = vmatprep.subr.mxu0 0.0
      %1258 = vmatpush1.msra.mxu0 0.0
      %1259 = vmatprep.subr.mxu0 0.0
      %1260 = vmatpush1.msra.mxu0 0.0
      %1261 = vmatprep.subr.mxu0 0.0
      %1262 = vmatpush1.msra.mxu0 0.0
      %1263 = vmatprep.subr.mxu0 0.0
      %1264 = vmatpush1.msra.mxu0 0.0
      %1265 = vmatprep.subr.mxu0 0.0
      %1266 = vmatpush1.msra.mxu0 0.0
      %1267 = vmatprep.subr.mxu0 0.0
      %1268 = vmatpush1.msra.mxu0 0.0
      %1269 = vmatprep.subr.mxu0 0.0
      %1270 = vmatpush1.msra.mxu0 0.0
      %1271 = vmatprep.subr.mxu0 0.0
      %1272 = vmatpush1.msra.mxu0 0.0
      %1273 = vmatprep.subr.mxu0 0.0
      %1274 = vmatpush1.msra.mxu0 0.0
      %1275 = vmatprep.subr.mxu0 0.0
      %1276 = vmatpush1.msra.mxu0 0.0
      %1277 = vmatprep.subr.mxu0 0.0
      %1278 = vmatpush1.msra.mxu0 0.0
      %1279 = vmatprep.subr.mxu0 0.0
      %1280 = vmatpush1.msra.mxu0 0.0
      %1281 = vmatprep.subr.mxu0 0.0
      %1282 = vmatpush1.msra.mxu0 0.0
      %1283 = vmatprep.subr.mxu0 0.0
      %1284 = vmatpush1.msra.mxu0 0.0
      %1285 = vmatprep.subr.mxu0 0.0
      %1286 = vmatpush1.msra.mxu0 0.0
      %1287 = vmatprep.subr.mxu0 0.0
      %1288 = vmatpush1.msra.mxu0 0.0
      %1289 = vmatprep.subr.mxu0 0.0
      %1290 = vmatpush1.msra.mxu0 0.0
      %1291 = vmatprep.mubr.f32.mxu0 0.0
      %1292 = vmatmul.mubr.f32.gmra.mrb[0].mxu0 %v1222
      %v1293 = vpop.f32.mrb[0].mxu0
      %v1294 = vadd.f32 0.0, %v1293
      %v1295 = vpop.f32.mrb[0].mxu0
      %1296 = vmatprep.mubr.f32.mxu0 0.0
      %1297 = vmatmul.mubr.f32.gmra.mrb[0].mxu0 %v1225
      %v1298 = vpop.f32.mrb[0].mxu0
      %v1299 = vadd.f32 0.0, %v1298
      %v1300 = vpop.f32.mrb[0].mxu0
      %1301 = vdwg.mxu0
      %v1303 = vsel %vm970, %v1056, 0
      %v1306 = vsel %vm970, %v1058, 0
      %1308 = vmatprep.subr.mxu0 0.0
      %1309 = vmatpush1.msra.mxu0 %v605
      %1310 = vmatprep.subr.mxu0 0.0
      %1311 = vmatpush1.msra.mxu0 %v610
      %1312 = vmatprep.subr.mxu0 0.0
      %1313 = vmatpush1.msra.mxu0 0.0
      %1314 = vmatprep.subr.mxu0 0.0
      %1315 = vmatpush1.msra.mxu0 0.0
      %1316 = vmatprep.subr.mxu0 0.0
      %1317 = vmatpush1.msra.mxu0 0.0
      %1318 = vmatprep.subr.mxu0 0.0
      %1319 = vmatpush1.msra.mxu0 0.0
      %1320 = vmatprep.subr.mxu0 0.0
      %1321 = vmatpush1.msra.mxu0 0.0
      %1322 = vmatprep.subr.mxu0 0.0
      %1323 = vmatpush1.msra.mxu0 0.0
      %1324 = vmatprep.subr.mxu0 0.0
      %1325 = vmatpush1.msra.mxu0 0.0
      %1326 = vmatprep.subr.mxu0 0.0
      %1327 = vmatpush1.msra.mxu0 0.0
      %1328 = vmatprep.subr.mxu0 0.0
      %1329 = vmatpush1.msra.mxu0 0.0
      %1330 = vmatprep.subr.mxu0 0.0
      %1331 = vmatpush1.msra.mxu0 0.0
      %1332 = vmatprep.subr.mxu0 0.0
      %1333 = vmatpush1.msra.mxu0 0.0
      %1334 = vmatprep.subr.mxu0 0.0
      %1335 = vmatpush1.msra.mxu0 0.0
      %1336 = vmatprep.subr.mxu0 0.0
      %1337 = vmatpush1.msra.mxu0 0.0
      %1338 = vmatprep.subr.mxu0 0.0
      %1339 = vmatpush1.msra.mxu0 0.0
      %1340 = vmatprep.subr.mxu0 0.0
      %1341 = vmatpush1.msra.mxu0 0.0
      %1342 = vmatprep.subr.mxu0 0.0
      %1343 = vmatpush1.msra.mxu0 0.0
      %1344 = vmatprep.subr.mxu0 0.0
      %1345 = vmatpush1.msra.mxu0 0.0
      %1346 = vmatprep.subr.mxu0 0.0
      %1347 = vmatpush1.msra.mxu0 0.0
      %1348 = vmatprep.subr.mxu0 0.0
      %1349 = vmatpush1.msra.mxu0 0.0
      %1350 = vmatprep.subr.mxu0 0.0
      %1351 = vmatpush1.msra.mxu0 0.0
      %1352 = vmatprep.subr.mxu0 0.0
      %1353 = vmatpush1.msra.mxu0 0.0
      %1354 = vmatprep.subr.mxu0 0.0
      %1355 = vmatpush1.msra.mxu0 0.0
      %1356 = vmatprep.subr.mxu0 0.0
      %1357 = vmatpush1.msra.mxu0 0.0
      %1358 = vmatprep.subr.mxu0 0.0
      %1359 = vmatpush1.msra.mxu0 0.0
      %1360 = vmatprep.subr.mxu0 0.0
      %1361 = vmatpush1.msra.mxu0 0.0
      %1362 = vmatprep.subr.mxu0 0.0
      %1363 = vmatpush1.msra.mxu0 0.0
      %1364 = vmatprep.subr.mxu0 0.0
      %1365 = vmatpush1.msra.mxu0 0.0
      %1366 = vmatprep.subr.mxu0 0.0
      %1367 = vmatpush1.msra.mxu0 0.0
      %1368 = vmatprep.subr.mxu0 0.0
      %1369 = vmatpush1.msra.mxu0 0.0
      %1370 = vmatprep.subr.mxu0 0.0
      %1371 = vmatpush1.msra.mxu0 0.0
      %1372 = vmatprep.mubr.f32.mxu0 0.0
      %1373 = vmatmul.mubr.f32.gmra.mrb[0].mxu0 %v1303
      %v1374 = vpop.f32.mrb[0].mxu0
      %v1375 = vadd.f32 0.0, %v1374
      %v1376 = vpop.f32.mrb[0].mxu0
      %1377 = vmatprep.mubr.f32.mxu0 0.0
      %1378 = vmatmul.mubr.f32.gmra.mrb[0].mxu0 %v1306
      %v1379 = vpop.f32.mrb[0].mxu0
      %v1380 = vadd.f32 0.0, %v1379
      %v1381 = vpop.f32.mrb[0].mxu0
      %1382 = vdwg.mxu0
      %v1383 = vld [vmem:[%s3] sm:$0xff]
      %1384 = vrot.lane.b32.xlu0 %v613, 120
      %v1385 = vpop.permute.xlu0 %1384
      %1386 = vrot.lane.b32.xlu0 %v614, 120
      %v1387 = vpop.permute.xlu0 %1386
      %1388 = vrot.lane.b32.xlu0 %v457, 120
      %v1389 = vpop.permute.xlu0 %1388
      %1390 = vrot.lane.b32.xlu0 %v462, 120
      %v1391 = vpop.permute.xlu0 %1390
      %v1392 = vsel %vm621, %v1385, 0
      %v1394 = vsel %vm621, %v1387, 0
      %v1396 = vsel %vm621, %v1389, 0
      %v1398 = vsel %vm621, %v1391, 0
      %1400 = vmatprep.subr.mxu0 0.0
      %1401 = vmatpush1.xpose.msra.mxu0 %v1396
      %1402 = vmatprep.subr.mxu0 0.0
      %1403 = vmatpush1.xpose.msra.mxu0 %v1398
      %1404 = vmatprep.subr.mxu0 0.0
      %1405 = vmatpush1.xpose.msra.mxu0 0.0
      %1406 = vmatprep.subr.mxu0 0.0
      %1407 = vmatpush1.xpose.msra.mxu0 0.0
      %1408 = vmatprep.subr.mxu0 0.0
      %1409 = vmatpush1.xpose.msra.mxu0 0.0
      %1410 = vmatprep.subr.mxu0 0.0
      %1411 = vmatpush1.xpose.msra.mxu0 0.0
      %1412 = vmatprep.subr.mxu0 0.0
      %1413 = vmatpush1.xpose.msra.mxu0 0.0
      %1414 = vmatprep.subr.mxu0 0.0
      %1415 = vmatpush1.xpose.msra.mxu0 0.0
      %1416 = vmatprep.subr.mxu0 0.0
      %1417 = vmatpush1.xpose.msra.mxu0 0.0
      %1418 = vmatprep.subr.mxu0 0.0
      %1419 = vmatpush1.xpose.msra.mxu0 0.0
      %1420 = vmatprep.subr.mxu0 0.0
      %1421 = vmatpush1.xpose.msra.mxu0 0.0
      %1422 = vmatprep.subr.mxu0 0.0
      %1423 = vmatpush1.xpose.msra.mxu0 0.0
      %1424 = vmatprep.subr.mxu0 0.0
      %1425 = vmatpush1.xpose.msra.mxu0 0.0
      %1426 = vmatprep.subr.mxu0 0.0
      %1427 = vmatpush1.xpose.msra.mxu0 0.0
      %1428 = vmatprep.subr.mxu0 0.0
      %1429 = vmatpush1.xpose.msra.mxu0 0.0
      %1430 = vmatprep.subr.mxu0 0.0
      %1431 = vmatpush1.xpose.msra.mxu0 0.0
      %1432 = vmatprep.subr.mxu0 0.0
      %1433 = vmatpush1.xpose.msra.mxu0 0.0
      %1434 = vmatprep.subr.mxu0 0.0
      %1435 = vmatpush1.xpose.msra.mxu0 0.0
      %1436 = vmatprep.subr.mxu0 0.0
      %1437 = vmatpush1.xpose.msra.mxu0 0.0
      %1438 = vmatprep.subr.mxu0 0.0
      %1439 = vmatpush1.xpose.msra.mxu0 0.0
      %1440 = vmatprep.subr.mxu0 0.0
      %1441 = vmatpush1.xpose.msra.mxu0 0.0
      %1442 = vmatprep.subr.mxu0 0.0
      %1443 = vmatpush1.xpose.msra.mxu0 0.0
      %1444 = vmatprep.subr.mxu0 0.0
      %1445 = vmatpush1.xpose.msra.mxu0 0.0
      %1446 = vmatprep.subr.mxu0 0.0
      %1447 = vmatpush1.xpose.msra.mxu0 0.0
      %1448 = vmatprep.subr.mxu0 0.0
      %1449 = vmatpush1.xpose.msra.mxu0 0.0
      %1450 = vmatprep.subr.mxu0 0.0
      %1451 = vmatpush1.xpose.msra.mxu0 0.0
      %1452 = vmatprep.subr.mxu0 0.0
      %1453 = vmatpush1.xpose.msra.mxu0 0.0
      %1454 = vmatprep.subr.mxu0 0.0
      %1455 = vmatpush1.xpose.msra.mxu0 0.0
      %1456 = vmatprep.subr.mxu0 0.0
      %1457 = vmatpush1.xpose.msra.mxu0 0.0
      %1458 = vmatprep.subr.mxu0 0.0
      %1459 = vmatpush1.xpose.msra.mxu0 0.0
      %1460 = vmatprep.subr.mxu0 0.0
      %1461 = vmatpush1.xpose.msra.mxu0 0.0
      %1462 = vmatprep.subr.mxu0 0.0
      %1463 = vmatpush1.xpose.msra.mxu0 0.0
      %1464 = vmatprep.mubr.f32.mxu0 0.0
      %1465 = vmatmul.mubr.f32.gmra.mrb[0].mxu0 %v1392
      %v1466 = vpop.f32.mrb[0].mxu0
      %v1467 = vadd.f32 0.0, %v1466
      %v1468 = vpop.f32.mrb[0].mxu0
      %1469 = vmatprep.mubr.f32.mxu0 0.0
      %1470 = vmatmul.mubr.f32.gmra.mrb[0].mxu0 %v1394
      %v1471 = vpop.f32.mrb[0].mxu0
      %v1472 = vadd.f32 0.0, %v1471
      %v1473 = vpop.f32.mrb[0].mxu0
      %1474 = vdwg.mxu0
      %1475 = vrot.lane.b32.xlu0 %v615, 120
      %v1476 = vpop.permute.xlu0 %1475
      %1477 = vrot.lane.b32.xlu0 %v616, 120
      %v1478 = vpop.permute.xlu0 %1477
      %1479 = vrot.lane.b32.xlu0 %v467, 120
      %v1480 = vpop.permute.xlu0 %1479
      %1481 = vrot.lane.b32.xlu0 %v472, 120
      %v1482 = vpop.permute.xlu0 %1481
      %v1483 = vsel %vm621, %v1476, 0
      %v1485 = vsel %vm621, %v1478, 0
      %v1487 = vsel %vm621, %v1480, 0
      %v1489 = vsel %vm621, %v1482, 0
      %1491 = vmatprep.subr.mxu0 0.0
      %1492 = vmatpush1.xpose.msra.mxu0 %v1487
      %1493 = vmatprep.subr.mxu0 0.0
      %1494 = vmatpush1.xpose.msra.mxu0 %v1489
      %1495 = vmatprep.subr.mxu0 0.0
      %1496 = vmatpush1.xpose.msra.mxu0 0.0
      %1497 = vmatprep.subr.mxu0 0.0
      %1498 = vmatpush1.xpose.msra.mxu0 0.0
      %1499 = vmatprep.subr.mxu0 0.0
      %1500 = vmatpush1.xpose.msra.mxu0 0.0
      %1501 = vmatprep.subr.mxu0 0.0
      %1502 = vmatpush1.xpose.msra.mxu0 0.0
      %1503 = vmatprep.subr.mxu0 0.0
      %1504 = vmatpush1.xpose.msra.mxu0 0.0
      %1505 = vmatprep.subr.mxu0 0.0
      %1506 = vmatpush1.xpose.msra.mxu0 0.0
      %1507 = vmatprep.subr.mxu0 0.0
      %1508 = vmatpush1.xpose.msra.mxu0 0.0
      %1509 = vmatprep.subr.mxu0 0.0
      %1510 = vmatpush1.xpose.msra.mxu0 0.0
      %1511 = vmatprep.subr.mxu0 0.0
      %1512 = vmatpush1.xpose.msra.mxu0 0.0
      %1513 = vmatprep.subr.mxu0 0.0
      %1514 = vmatpush1.xpose.msra.mxu0 0.0
      %1515 = vmatprep.subr.mxu0 0.0
      %1516 = vmatpush1.xpose.msra.mxu0 0.0
      %1517 = vmatprep.subr.mxu0 0.0
      %1518 = vmatpush1.xpose.msra.mxu0 0.0
      %1519 = vmatprep.subr.mxu0 0.0
      %1520 = vmatpush1.xpose.msra.mxu0 0.0
      %1521 = vmatprep.subr.mxu0 0.0
      %1522 = vmatpush1.xpose.msra.mxu0 0.0
      %1523 = vmatprep.subr.mxu0 0.0
      %1524 = vmatpush1.xpose.msra.mxu0 0.0
      %1525 = vmatprep.subr.mxu0 0.0
      %1526 = vmatpush1.xpose.msra.mxu0 0.0
      %1527 = vmatprep.subr.mxu0 0.0
      %1528 = vmatpush1.xpose.msra.mxu0 0.0
      %1529 = vmatprep.subr.mxu0 0.0
      %1530 = vmatpush1.xpose.msra.mxu0 0.0
      %1531 = vmatprep.subr.mxu0 0.0
      %1532 = vmatpush1.xpose.msra.mxu0 0.0
      %1533 = vmatprep.subr.mxu0 0.0
      %1534 = vmatpush1.xpose.msra.mxu0 0.0
      %1535 = vmatprep.subr.mxu0 0.0
      %1536 = vmatpush1.xpose.msra.mxu0 0.0
      %1537 = vmatprep.subr.mxu0 0.0
      %1538 = vmatpush1.xpose.msra.mxu0 0.0
      %1539 = vmatprep.subr.mxu0 0.0
      %1540 = vmatpush1.xpose.msra.mxu0 0.0
      %1541 = vmatprep.subr.mxu0 0.0
      %1542 = vmatpush1.xpose.msra.mxu0 0.0
      %1543 = vmatprep.subr.mxu0 0.0
      %1544 = vmatpush1.xpose.msra.mxu0 0.0
      %1545 = vmatprep.subr.mxu0 0.0
      %1546 = vmatpush1.xpose.msra.mxu0 0.0
      %1547 = vmatprep.subr.mxu0 0.0
      %1548 = vmatpush1.xpose.msra.mxu0 0.0
      %1549 = vmatprep.subr.mxu0 0.0
      %1550 = vmatpush1.xpose.msra.mxu0 0.0
      %1551 = vmatprep.subr.mxu0 0.0
      %1552 = vmatpush1.xpose.msra.mxu0 0.0
      %1553 = vmatprep.subr.mxu0 0.0
      %1554 = vmatpush1.xpose.msra.mxu0 0.0
      %1555 = vmatprep.mubr.f32.mxu0 0.0
      %1556 = vmatmul.mubr.f32.gmra.mrb[0].mxu0 %v1483
      %v1557 = vpop.f32.mrb[0].mxu0
      %v1558 = vadd.f32 0.0, %v1557
      %v1559 = vpop.f32.mrb[0].mxu0
      %1560 = vmatprep.mubr.f32.mxu0 0.0
      %1561 = vmatmul.mubr.f32.gmra.mrb[0].mxu0 %v1485
      %v1562 = vpop.f32.mrb[0].mxu0
      %v1563 = vadd.f32 0.0, %v1562
      %v1564 = vpop.f32.mrb[0].mxu0
      %1565 = vdwg.mxu0
      %1566 = vrot.lane.b32.xlu0 %v617, 120
      %v1567 = vpop.permute.xlu0 %1566
      %1568 = vrot.lane.b32.xlu0 %v618, 120
      %v1569 = vpop.permute.xlu0 %1568
      %1570 = vrot.lane.b32.xlu0 %v477, 120
      %v1571 = vpop.permute.xlu0 %1570
      %1572 = vrot.lane.b32.xlu0 %v482, 120
      %v1573 = vpop.permute.xlu0 %1572
      %v1574 = vsel %vm621, %v1567, 0
      %v1576 = vsel %vm621, %v1569, 0
      %v1578 = vsel %vm621, %v1571, 0
      %v1580 = vsel %vm621, %v1573, 0
      %1582 = vmatprep.subr.mxu0 0.0
      %1583 = vmatpush1.xpose.msra.mxu0 %v1578
      %1584 = vmatprep.subr.mxu0 0.0
      %1585 = vmatpush1.xpose.msra.mxu0 %v1580
      %1586 = vmatprep.subr.mxu0 0.0
      %1587 = vmatpush1.xpose.msra.mxu0 0.0
      %1588 = vmatprep.subr.mxu0 0.0
      %1589 = vmatpush1.xpose.msra.mxu0 0.0
      %1590 = vmatprep.subr.mxu0 0.0
      %1591 = vmatpush1.xpose.msra.mxu0 0.0
      %1592 = vmatprep.subr.mxu0 0.0
      %1593 = vmatpush1.xpose.msra.mxu0 0.0
      %1594 = vmatprep.subr.mxu0 0.0
      %1595 = vmatpush1.xpose.msra.mxu0 0.0
      %1596 = vmatprep.subr.mxu0 0.0
      %1597 = vmatpush1.xpose.msra.mxu0 0.0
      %1598 = vmatprep.subr.mxu0 0.0
      %1599 = vmatpush1.xpose.msra.mxu0 0.0
      %1600 = vmatprep.subr.mxu0 0.0
      %1601 = vmatpush1.xpose.msra.mxu0 0.0
      %1602 = vmatprep.subr.mxu0 0.0
      %1603 = vmatpush1.xpose.msra.mxu0 0.0
      %1604 = vmatprep.subr.mxu0 0.0
      %1605 = vmatpush1.xpose.msra.mxu0 0.0
      %1606 = vmatprep.subr.mxu0 0.0
      %1607 = vmatpush1.xpose.msra.mxu0 0.0
      %1608 = vmatprep.subr.mxu0 0.0
      %1609 = vmatpush1.xpose.msra.mxu0 0.0
      %1610 = vmatprep.subr.mxu0 0.0
      %1611 = vmatpush1.xpose.msra.mxu0 0.0
      %1612 = vmatprep.subr.mxu0 0.0
      %1613 = vmatpush1.xpose.msra.mxu0 0.0
      %1614 = vmatprep.subr.mxu0 0.0
      %1615 = vmatpush1.xpose.msra.mxu0 0.0
      %1616 = vmatprep.subr.mxu0 0.0
      %1617 = vmatpush1.xpose.msra.mxu0 0.0
      %1618 = vmatprep.subr.mxu0 0.0
      %1619 = vmatpush1.xpose.msra.mxu0 0.0
      %1620 = vmatprep.subr.mxu0 0.0
      %1621 = vmatpush1.xpose.msra.mxu0 0.0
      %1622 = vmatprep.subr.mxu0 0.0
      %1623 = vmatpush1.xpose.msra.mxu0 0.0
      %1624 = vmatprep.subr.mxu0 0.0
      %1625 = vmatpush1.xpose.msra.mxu0 0.0
      %1626 = vmatprep.subr.mxu0 0.0
      %1627 = vmatpush1.xpose.msra.mxu0 0.0
      %1628 = vmatprep.subr.mxu0 0.0
      %1629 = vmatpush1.xpose.msra.mxu0 0.0
      %1630 = vmatprep.subr.mxu0 0.0
      %1631 = vmatpush1.xpose.msra.mxu0 0.0
      %1632 = vmatprep.subr.mxu0 0.0
      %1633 = vmatpush1.xpose.msra.mxu0 0.0
      %1634 = vmatprep.subr.mxu0 0.0
      %1635 = vmatpush1.xpose.msra.mxu0 0.0
      %1636 = vmatprep.subr.mxu0 0.0
      %1637 = vmatpush1.xpose.msra.mxu0 0.0
      %1638 = vmatprep.subr.mxu0 0.0
      %1639 = vmatpush1.xpose.msra.mxu0 0.0
      %1640 = vmatprep.subr.mxu0 0.0
      %1641 = vmatpush1.xpose.msra.mxu0 0.0
      %1642 = vmatprep.subr.mxu0 0.0
      %1643 = vmatpush1.xpose.msra.mxu0 0.0
      %1644 = vmatprep.subr.mxu0 0.0
      %1645 = vmatpush1.xpose.msra.mxu0 0.0
      %1646 = vmatprep.mubr.f32.mxu0 0.0
      %1647 = vmatmul.mubr.f32.gmra.mrb[0].mxu0 %v1574
      %v1648 = vpop.f32.mrb[0].mxu0
      %v1649 = vadd.f32 0.0, %v1648
      %v1650 = vpop.f32.mrb[0].mxu0
      %1651 = vmatprep.mubr.f32.mxu0 0.0
      %1652 = vmatmul.mubr.f32.gmra.mrb[0].mxu0 %v1576
      %v1653 = vpop.f32.mrb[0].mxu0
      %v1654 = vadd.f32 0.0, %v1653
      %v1655 = vpop.f32.mrb[0].mxu0
      %1656 = vdwg.mxu0
      %1657 = vrot.lane.b32.xlu0 %v619, 120
      %v1658 = vpop.permute.xlu0 %1657
      %1659 = vrot.lane.b32.xlu0 %v620, 120
      %v1660 = vpop.permute.xlu0 %1659
      %1661 = vrot.lane.b32.xlu0 %v487, 120
      %v1662 = vpop.permute.xlu0 %1661
      %1663 = vrot.lane.b32.xlu0 %v492, 120
      %v1664 = vpop.permute.xlu0 %1663
      %v1665 = vsel %vm621, %v1658, 0
      %v1667 = vsel %vm621, %v1660, 0
      %v1669 = vsel %vm621, %v1662, 0
      %v1671 = vsel %vm621, %v1664, 0
      %1673 = vmatprep.subr.mxu0 0.0
      %1674 = vmatpush1.xpose.msra.mxu0 %v1669
      %1675 = vmatprep.subr.mxu0 0.0
      %1676 = vmatpush1.xpose.msra.mxu0 %v1671
      %1677 = vmatprep.subr.mxu0 0.0
      %1678 = vmatpush1.xpose.msra.mxu0 0.0
      %1679 = vmatprep.subr.mxu0 0.0
      %1680 = vmatpush1.xpose.msra.mxu0 0.0
      %1681 = vmatprep.subr.mxu0 0.0
      %1682 = vmatpush1.xpose.msra.mxu0 0.0
      %1683 = vmatprep.subr.mxu0 0.0
      %1684 = vmatpush1.xpose.msra.mxu0 0.0
      %1685 = vmatprep.subr.mxu0 0.0
      %1686 = vmatpush1.xpose.msra.mxu0 0.0
      %1687 = vmatprep.subr.mxu0 0.0
      %1688 = vmatpush1.xpose.msra.mxu0 0.0
      %1689 = vmatprep.subr.mxu0 0.0
      %1690 = vmatpush1.xpose.msra.mxu0 0.0
      %1691 = vmatprep.subr.mxu0 0.0
      %1692 = vmatpush1.xpose.msra.mxu0 0.0
      %1693 = vmatprep.subr.mxu0 0.0
      %1694 = vmatpush1.xpose.msra.mxu0 0.0
      %1695 = vmatprep.subr.mxu0 0.0
      %1696 = vmatpush1.xpose.msra.mxu0 0.0
      %1697 = vmatprep.subr.mxu0 0.0
      %1698 = vmatpush1.xpose.msra.mxu0 0.0
      %1699 = vmatprep.subr.mxu0 0.0
      %1700 = vmatpush1.xpose.msra.mxu0 0.0
      %1701 = vmatprep.subr.mxu0 0.0
      %1702 = vmatpush1.xpose.msra.mxu0 0.0
      %1703 = vmatprep.subr.mxu0 0.0
      %1704 = vmatpush1.xpose.msra.mxu0 0.0
      %1705 = vmatprep.subr.mxu0 0.0
      %1706 = vmatpush1.xpose.msra.mxu0 0.0
      %1707 = vmatprep.subr.mxu0 0.0
      %1708 = vmatpush1.xpose.msra.mxu0 0.0
      %1709 = vmatprep.subr.mxu0 0.0
      %1710 = vmatpush1.xpose.msra.mxu0 0.0
      %1711 = vmatprep.subr.mxu0 0.0
      %1712 = vmatpush1.xpose.msra.mxu0 0.0
      %1713 = vmatprep.subr.mxu0 0.0
      %1714 = vmatpush1.xpose.msra.mxu0 0.0
      %1715 = vmatprep.subr.mxu0 0.0
      %1716 = vmatpush1.xpose.msra.mxu0 0.0
      %1717 = vmatprep.subr.mxu0 0.0
      %1718 = vmatpush1.xpose.msra.mxu0 0.0
      %1719 = vmatprep.subr.mxu0 0.0
      %1720 = vmatpush1.xpose.msra.mxu0 0.0
      %1721 = vmatprep.subr.mxu0 0.0
      %1722 = vmatpush1.xpose.msra.mxu0 0.0
      %1723 = vmatprep.subr.mxu0 0.0
      %1724 = vmatpush1.xpose.msra.mxu0 0.0
      %1725 = vmatprep.subr.mxu0 0.0
      %1726 = vmatpush1.xpose.msra.mxu0 0.0
      %1727 = vmatprep.subr.mxu0 0.0
      %1728 = vmatpush1.xpose.msra.mxu0 0.0
      %1729 = vmatprep.subr.mxu0 0.0
      %1730 = vmatpush1.xpose.msra.mxu0 0.0
      %1731 = vmatprep.subr.mxu0 0.0
      %1732 = vmatpush1.xpose.msra.mxu0 0.0
      %1733 = vmatprep.subr.mxu0 0.0
      %1734 = vmatpush1.xpose.msra.mxu0 0.0
      %1735 = vmatprep.subr.mxu0 0.0
      %1736 = vmatpush1.xpose.msra.mxu0 0.0
      %1737 = vmatprep.mubr.f32.mxu0 0.0
      %1738 = vmatmul.mubr.f32.gmra.mrb[0].mxu0 %v1665
      %v1739 = vpop.f32.mrb[0].mxu0
      %v1740 = vadd.f32 0.0, %v1739
      %v1741 = vpop.f32.mrb[0].mxu0
      %1742 = vmatprep.mubr.f32.mxu0 0.0
      %1743 = vmatmul.mubr.f32.gmra.mrb[0].mxu0 %v1667
      %v1744 = vpop.f32.mrb[0].mxu0
      %v1745 = vadd.f32 0.0, %v1744
      %v1746 = vpop.f32.mrb[0].mxu0
      %1747 = vdwg.mxu0
      %v1748 = vsel %vm970, %v1467, -inf
      %1749 = vmax.xlane.f32.xlu0 %v1748
      %v1750 = vpop.xlane.xlu0 %1749
      %v1751 = vsel %vm970, %v1472, -inf
      %1752 = vmax.xlane.f32.xlu0 %v1751
      %v1753 = vpop.xlane.xlu0 %1752
      %v1754 = vsel %vm970, %v1558, -inf
      %1755 = vmax.xlane.f32.xlu0 %v1754
      %v1756 = vpop.xlane.xlu0 %1755
      %v1757 = vsel %vm970, %v1563, -inf
      %1758 = vmax.xlane.f32.xlu0 %v1757
      %v1759 = vpop.xlane.xlu0 %1758
      %v1760 = vsel %vm970, %v1649, -inf
      %1761 = vmax.xlane.f32.xlu0 %v1760
      %v1762 = vpop.xlane.xlu0 %1761
      %v1763 = vsel %vm970, %v1654, -inf
      %1764 = vmax.xlane.f32.xlu0 %v1763
      %v1765 = vpop.xlane.xlu0 %1764
      %v1766 = vsel %vm970, %v1740, -inf
      %1767 = vmax.xlane.f32.xlu0 %v1766
      %v1768 = vpop.xlane.xlu0 %1767
      %v1769 = vsel %vm970, %v1745, -inf
      %1770 = vmax.xlane.f32.xlu0 %v1769
      %v1771 = vpop.xlane.xlu0 %1770
      %v1772 = vsub.f32 %v1467, %v1750
      %v1773 = vsub.f32 %v1472, %v1753
      %v1774 = vsub.f32 %v1558, %v1756
      %v1775 = vsub.f32 %v1563, %v1759
      %v1776 = vsub.f32 %v1649, %v1762
      %v1777 = vsub.f32 %v1654, %v1765
      %v1778 = vsub.f32 %v1740, %v1768
      %v1779 = vsub.f32 %v1745, %v1771
      %v1780 = vmul.f32 %v1772, 1.442695
      %v1781 = vpow.pop %v1780
      %v1782 = vmul.f32 %v1773, 1.442695
      %v1783 = vpow.pop %v1782
      %v1784 = vmul.f32 %v1774, 1.442695
      %v1785 = vpow.pop %v1784
      %v1786 = vmul.f32 %v1775, 1.442695
      %v1787 = vpow.pop %v1786
      %v1788 = vmul.f32 %v1776, 1.442695
      %v1789 = vpow.pop %v1788
      %v1790 = vmul.f32 %v1777, 1.442695
      %v1791 = vpow.pop %v1790
      %v1792 = vmul.f32 %v1778, 1.442695
      %v1793 = vpow.pop %v1792
      %v1794 = vmul.f32 %v1779, 1.442695
      %v1795 = vpow.pop %v1794
      %v1796 = vsel %vm970, %v1781, 0.0
      %1797 = vadd.xlane.f32.xlu0 %v1796
      %v1798 = vpop.xlane.xlu0 %1797
      %v1799 = vsel %vm970, %v1783, 0.0
      %1800 = vadd.xlane.f32.xlu0 %v1799
      %v1801 = vpop.xlane.xlu0 %1800
      %v1802 = vsel %vm970, %v1785, 0.0
      %1803 = vadd.xlane.f32.xlu0 %v1802
      %v1804 = vpop.xlane.xlu0 %1803
      %v1805 = vsel %vm970, %v1787, 0.0
      %1806 = vadd.xlane.f32.xlu0 %v1805
      %v1807 = vpop.xlane.xlu0 %1806
      %v1808 = vsel %vm970, %v1789, 0.0
      %1809 = vadd.xlane.f32.xlu0 %v1808
      %v1810 = vpop.xlane.xlu0 %1809
      %v1811 = vsel %vm970, %v1791, 0.0
      %1812 = vadd.xlane.f32.xlu0 %v1811
      %v1813 = vpop.xlane.xlu0 %1812
      %v1814 = vsel %vm970, %v1793, 0.0
      %1815 = vadd.xlane.f32.xlu0 %v1814
      %v1816 = vpop.xlane.xlu0 %1815
      %v1817 = vsel %vm970, %v1795, 0.0
      %1818 = vadd.xlane.f32.xlu0 %v1817
      %v1819 = vpop.xlane.xlu0 %1818
      %v1820 = vrcp.pop %v1798
      %v1821 = vmul.f32 %v1781, %v1820
      %v1822 = vrcp.pop %v1801
      %v1823 = vmul.f32 %v1783, %v1822
      %v1824 = vrcp.pop %v1804
      %v1825 = vmul.f32 %v1785, %v1824
      %v1826 = vrcp.pop %v1807
      %v1827 = vmul.f32 %v1787, %v1826
      %v1828 = vrcp.pop %v1810
      %v1829 = vmul.f32 %v1789, %v1828
      %v1830 = vrcp.pop %v1813
      %v1831 = vmul.f32 %v1791, %v1830
      %v1832 = vrcp.pop %v1816
      %v1833 = vmul.f32 %v1793, %v1832
      %v1834 = vrcp.pop %v1819
      %v1835 = vmul.f32 %v1795, %v1834
      %1838 = vrot.lane.b32.xlu0 %v575, 120
      %v1839 = vpop.permute.xlu0 %1838
      %1840 = vrot.lane.b32.xlu0 %v580, 120
      %v1841 = vpop.permute.xlu0 %1840
      %v1845 = vsel %vm970, %v1821, 0
      %v1848 = vsel %vm970, %v1823, 0
      %1850 = vmatprep.subr.mxu0 0.0
      %1851 = vmatpush1.msra.mxu0 %v1839
      %1852 = vmatprep.subr.mxu0 0.0
      %1853 = vmatpush1.msra.mxu0 %v1841
      %1854 = vmatprep.subr.mxu0 0.0
      %1855 = vmatpush1.msra.mxu0 0.0
      %1856 = vmatprep.subr.mxu0 0.0
      %1857 = vmatpush1.msra.mxu0 0.0
      %1858 = vmatprep.subr.mxu0 0.0
      %1859 = vmatpush1.msra.mxu0 0.0
      %1860 = vmatprep.subr.mxu0 0.0
      %1861 = vmatpush1.msra.mxu0 0.0
      %1862 = vmatprep.subr.mxu0 0.0
      %1863 = vmatpush1.msra.mxu0 0.0
      %1864 = vmatprep.subr.mxu0 0.0
      %1865 = vmatpush1.msra.mxu0 0.0
      %1866 = vmatprep.subr.mxu0 0.0
      %1867 = vmatpush1.msra.mxu0 0.0
      %1868 = vmatprep.subr.mxu0 0.0
      %1869 = vmatpush1.msra.mxu0 0.0
      %1870 = vmatprep.subr.mxu0 0.0
      %1871 = vmatpush1.msra.mxu0 0.0
      %1872 = vmatprep.subr.mxu0 0.0
      %1873 = vmatpush1.msra.mxu0 0.0
      %1874 = vmatprep.subr.mxu0 0.0
      %1875 = vmatpush1.msra.mxu0 0.0
      %1876 = vmatprep.subr.mxu0 0.0
      %1877 = vmatpush1.msra.mxu0 0.0
      %1878 = vmatprep.subr.mxu0 0.0
      %1879 = vmatpush1.msra.mxu0 0.0
      %1880 = vmatprep.subr.mxu0 0.0
      %1881 = vmatpush1.msra.mxu0 0.0
      %1882 = vmatprep.subr.mxu0 0.0
      %1883 = vmatpush1.msra.mxu0 0.0
      %1884 = vmatprep.subr.mxu0 0.0
      %1885 = vmatpush1.msra.mxu0 0.0
      %1886 = vmatprep.subr.mxu0 0.0
      %1887 = vmatpush1.msra.mxu0 0.0
      %1888 = vmatprep.subr.mxu0 0.0
      %1889 = vmatpush1.msra.mxu0 0.0
      %1890 = vmatprep.subr.mxu0 0.0
      %1891 = vmatpush1.msra.mxu0 0.0
      %1892 = vmatprep.subr.mxu0 0.0
      %1893 = vmatpush1.msra.mxu0 0.0
      %1894 = vmatprep.subr.mxu0 0.0
      %1895 = vmatpush1.msra.mxu0 0.0
      %1896 = vmatprep.subr.mxu0 0.0
      %1897 = vmatpush1.msra.mxu0 0.0
      %1898 = vmatprep.subr.mxu0 0.0
      %1899 = vmatpush1.msra.mxu0 0.0
      %1900 = vmatprep.subr.mxu0 0.0
      %1901 = vmatpush1.msra.mxu0 0.0
      %1902 = vmatprep.subr.mxu0 0.0
      %1903 = vmatpush1.msra.mxu0 0.0
      %1904 = vmatprep.subr.mxu0 0.0
      %1905 = vmatpush1.msra.mxu0 0.0
      %1906 = vmatprep.subr.mxu0 0.0
      %1907 = vmatpush1.msra.mxu0 0.0
      %1908 = vmatprep.subr.mxu0 0.0
      %1909 = vmatpush1.msra.mxu0 0.0
      %1910 = vmatprep.subr.mxu0 0.0
      %1911 = vmatpush1.msra.mxu0 0.0
      %1912 = vmatprep.subr.mxu0 0.0
      %1913 = vmatpush1.msra.mxu0 0.0
      %1914 = vmatprep.mubr.f32.mxu0 0.0
      %1915 = vmatmul.mubr.f32.gmra.mrb[0].mxu0 %v1845
      %v1916 = vpop.f32.mrb[0].mxu0
      %v1917 = vadd.f32 0.0, %v1916
      %v1918 = vpop.f32.mrb[0].mxu0
      %1919 = vmatprep.mubr.f32.mxu0 0.0
      %1920 = vmatmul.mubr.f32.gmra.mrb[0].mxu0 %v1848
      %v1921 = vpop.f32.mrb[0].mxu0
      %v1922 = vadd.f32 0.0, %v1921
      %v1923 = vpop.f32.mrb[0].mxu0
      %1924 = vdwg.mxu0
      %1927 = vrot.lane.b32.xlu0 %v585, 120
      %v1928 = vpop.permute.xlu0 %1927
      %1929 = vrot.lane.b32.xlu0 %v590, 120
      %v1930 = vpop.permute.xlu0 %1929
      %v1934 = vsel %vm970, %v1825, 0
      %v1937 = vsel %vm970, %v1827, 0
      %1939 = vmatprep.subr.mxu0 0.0
      %1940 = vmatpush1.msra.mxu0 %v1928
      %1941 = vmatprep.subr.mxu0 0.0
      %1942 = vmatpush1.msra.mxu0 %v1930
      %1943 = vmatprep.subr.mxu0 0.0
      %1944 = vmatpush1.msra.mxu0 0.0
      %1945 = vmatprep.subr.mxu0 0.0
      %1946 = vmatpush1.msra.mxu0 0.0
      %1947 = vmatprep.subr.mxu0 0.0
      %1948 = vmatpush1.msra.mxu0 0.0
      %1949 = vmatprep.subr.mxu0 0.0
      %1950 = vmatpush1.msra.mxu0 0.0
      %1951 = vmatprep.subr.mxu0 0.0
      %1952 = vmatpush1.msra.mxu0 0.0
      %1953 = vmatprep.subr.mxu0 0.0
      %1954 = vmatpush1.msra.mxu0 0.0
      %1955 = vmatprep.subr.mxu0 0.0
      %1956 = vmatpush1.msra.mxu0 0.0
      %1957 = vmatprep.subr.mxu0 0.0
      %1958 = vmatpush1.msra.mxu0 0.0
      %1959 = vmatprep.subr.mxu0 0.0
      %1960 = vmatpush1.msra.mxu0 0.0
      %1961 = vmatprep.subr.mxu0 0.0
      %1962 = vmatpush1.msra.mxu0 0.0
      %1963 = vmatprep.subr.mxu0 0.0
      %1964 = vmatpush1.msra.mxu0 0.0
      %1965 = vmatprep.subr.mxu0 0.0
      %1966 = vmatpush1.msra.mxu0 0.0
      %1967 = vmatprep.subr.mxu0 0.0
      %1968 = vmatpush1.msra.mxu0 0.0
      %1969 = vmatprep.subr.mxu0 0.0
      %1970 = vmatpush1.msra.mxu0 0.0
      %1971 = vmatprep.subr.mxu0 0.0
      %1972 = vmatpush1.msra.mxu0 0.0
      %1973 = vmatprep.subr.mxu0 0.0
      %1974 = vmatpush1.msra.mxu0 0.0
      %1975 = vmatprep.subr.mxu0 0.0
      %1976 = vmatpush1.msra.mxu0 0.0
      %1977 = vmatprep.subr.mxu0 0.0
      %1978 = vmatpush1.msra.mxu0 0.0
      %1979 = vmatprep.subr.mxu0 0.0
      %1980 = vmatpush1.msra.mxu0 0.0
      %1981 = vmatprep.subr.mxu0 0.0
      %1982 = vmatpush1.msra.mxu0 0.0
      %1983 = vmatprep.subr.mxu0 0.0
      %1984 = vmatpush1.msra.mxu0 0.0
      %1985 = vmatprep.subr.mxu0 0.0
      %1986 = vmatpush1.msra.mxu0 0.0
      %1987 = vmatprep.subr.mxu0 0.0
      %1988 = vmatpush1.msra.mxu0 0.0
      %1989 = vmatprep.subr.mxu0 0.0
      %1990 = vmatpush1.msra.mxu0 0.0
      %1991 = vmatprep.subr.mxu0 0.0
      %1992 = vmatpush1.msra.mxu0 0.0
      %1993 = vmatprep.subr.mxu0 0.0
      %1994 = vmatpush1.msra.mxu0 0.0
      %1995 = vmatprep.subr.mxu0 0.0
      %1996 = vmatpush1.msra.mxu0 0.0
      %1997 = vmatprep.subr.mxu0 0.0
      %1998 = vmatpush1.msra.mxu0 0.0
      %1999 = vmatprep.subr.mxu0 0.0
      %2000 = vmatpush1.msra.mxu0 0.0
      %2001 = vmatprep.subr.mxu0 0.0
      %2002 = vmatpush1.msra.mxu0 0.0
      %2003 = vmatprep.mubr.f32.mxu0 0.0
      %2004 = vmatmul.mubr.f32.gmra.mrb[0].mxu0 %v1934
      %v2005 = vpop.f32.mrb[0].mxu0
      %v2006 = vadd.f32 0.0, %v2005
      %v2007 = vpop.f32.mrb[0].mxu0
      %2008 = vmatprep.mubr.f32.mxu0 0.0
      %2009 = vmatmul.mubr.f32.gmra.mrb[0].mxu0 %v1937
      %v2010 = vpop.f32.mrb[0].mxu0
      %v2011 = vadd.f32 0.0, %v2010
      %v2012 = vpop.f32.mrb[0].mxu0
      %2013 = vdwg.mxu0
      %2016 = vrot.lane.b32.xlu0 %v595, 120
      %v2017 = vpop.permute.xlu0 %2016
      %2018 = vrot.lane.b32.xlu0 %v600, 120
      %v2019 = vpop.permute.xlu0 %2018
      %v2023 = vsel %vm970, %v1829, 0
      %v2026 = vsel %vm970, %v1831, 0
      %2028 = vmatprep.subr.mxu0 0.0
      %2029 = vmatpush1.msra.mxu0 %v2017
      %2030 = vmatprep.subr.mxu0 0.0
      %2031 = vmatpush1.msra.mxu0 %v2019
      %2032 = vmatprep.subr.mxu0 0.0
      %2033 = vmatpush1.msra.mxu0 0.0
      %2034 = vmatprep.subr.mxu0 0.0
      %2035 = vmatpush1.msra.mxu0 0.0
      %2036 = vmatprep.subr.mxu0 0.0
      %2037 = vmatpush1.msra.mxu0 0.0
      %2038 = vmatprep.subr.mxu0 0.0
      %2039 = vmatpush1.msra.mxu0 0.0
      %2040 = vmatprep.subr.mxu0 0.0
      %2041 = vmatpush1.msra.mxu0 0.0
      %2042 = vmatprep.subr.mxu0 0.0
      %2043 = vmatpush1.msra.mxu0 0.0
      %2044 = vmatprep.subr.mxu0 0.0
      %2045 = vmatpush1.msra.mxu0 0.0
      %2046 = vmatprep.subr.mxu0 0.0
      %2047 = vmatpush1.msra.mxu0 0.0
      %2048 = vmatprep.subr.mxu0 0.0
      %2049 = vmatpush1.msra.mxu0 0.0
      %2050 = vmatprep.subr.mxu0 0.0
      %2051 = vmatpush1.msra.mxu0 0.0
      %2052 = vmatprep.subr.mxu0 0.0
      %2053 = vmatpush1.msra.mxu0 0.0
      %2054 = vmatprep.subr.mxu0 0.0
      %2055 = vmatpush1.msra.mxu0 0.0
      %2056 = vmatprep.subr.mxu0 0.0
      %2057 = vmatpush1.msra.mxu0 0.0
      %2058 = vmatprep.subr.mxu0 0.0
      %2059 = vmatpush1.msra.mxu0 0.0
      %2060 = vmatprep.subr.mxu0 0.0
      %2061 = vmatpush1.msra.mxu0 0.0
      %2062 = vmatprep.subr.mxu0 0.0
      %2063 = vmatpush1.msra.mxu0 0.0
      %2064 = vmatprep.subr.mxu0 0.0
      %2065 = vmatpush1.msra.mxu0 0.0
      %2066 = vmatprep.subr.mxu0 0.0
      %2067 = vmatpush1.msra.mxu0 0.0
      %2068 = vmatprep.subr.mxu0 0.0
      %2069 = vmatpush1.msra.mxu0 0.0
      %2070 = vmatprep.subr.mxu0 0.0
      %2071 = vmatpush1.msra.mxu0 0.0
      %2072 = vmatprep.subr.mxu0 0.0
      %2073 = vmatpush1.msra.mxu0 0.0
      %2074 = vmatprep.subr.mxu0 0.0
      %2075 = vmatpush1.msra.mxu0 0.0
      %2076 = vmatprep.subr.mxu0 0.0
      %2077 = vmatpush1.msra.mxu0 0.0
      %2078 = vmatprep.subr.mxu0 0.0
      %2079 = vmatpush1.msra.mxu0 0.0
      %2080 = vmatprep.subr.mxu0 0.0
      %2081 = vmatpush1.msra.mxu0 0.0
      %2082 = vmatprep.subr.mxu0 0.0
      %2083 = vmatpush1.msra.mxu0 0.0
      %2084 = vmatprep.subr.mxu0 0.0
      %2085 = vmatpush1.msra.mxu0 0.0
      %2086 = vmatprep.subr.mxu0 0.0
      %2087 = vmatpush1.msra.mxu0 0.0
      %2088 = vmatprep.subr.mxu0 0.0
      %2089 = vmatpush1.msra.mxu0 0.0
      %2090 = vmatprep.subr.mxu0 0.0
      %2091 = vmatpush1.msra.mxu0 0.0
      %2092 = vmatprep.mubr.f32.mxu0 0.0
      %2093 = vmatmul.mubr.f32.gmra.mrb[0].mxu0 %v2023
      %v2094 = vpop.f32.mrb[0].mxu0
      %v2095 = vadd.f32 0.0, %v2094
      %v2096 = vpop.f32.mrb[0].mxu0
      %2097 = vmatprep.mubr.f32.mxu0 0.0
      %2098 = vmatmul.mubr.f32.gmra.mrb[0].mxu0 %v2026
      %v2099 = vpop.f32.mrb[0].mxu0
      %v2100 = vadd.f32 0.0, %v2099
      %v2101 = vpop.f32.mrb[0].mxu0
      %2102 = vdwg.mxu0
      %2105 = vrot.lane.b32.xlu0 %v605, 120
      %v2106 = vpop.permute.xlu0 %2105
      %2107 = vrot.lane.b32.xlu0 %v610, 120
      %v2108 = vpop.permute.xlu0 %2107
      %v2112 = vsel %vm970, %v1833, 0
      %v2115 = vsel %vm970, %v1835, 0
      %2117 = vmatprep.subr.mxu0 0.0
      %2118 = vmatpush1.msra.mxu0 %v2106
      %2119 = vmatprep.subr.mxu0 0.0
      %2120 = vmatpush1.msra.mxu0 %v2108
      %2121 = vmatprep.subr.mxu0 0.0
      %2122 = vmatpush1.msra.mxu0 0.0
      %2123 = vmatprep.subr.mxu0 0.0
      %2124 = vmatpush1.msra.mxu0 0.0
      %2125 = vmatprep.subr.mxu0 0.0
      %2126 = vmatpush1.msra.mxu0 0.0
      %2127 = vmatprep.subr.mxu0 0.0
      %2128 = vmatpush1.msra.mxu0 0.0
      %2129 = vmatprep.subr.mxu0 0.0
      %2130 = vmatpush1.msra.mxu0 0.0
      %2131 = vmatprep.subr.mxu0 0.0
      %2132 = vmatpush1.msra.mxu0 0.0
      %2133 = vmatprep.subr.mxu0 0.0
      %2134 = vmatpush1.msra.mxu0 0.0
      %2135 = vmatprep.subr.mxu0 0.0
      %2136 = vmatpush1.msra.mxu0 0.0
      %2137 = vmatprep.subr.mxu0 0.0
      %2138 = vmatpush1.msra.mxu0 0.0
      %2139 = vmatprep.subr.mxu0 0.0
      %2140 = vmatpush1.msra.mxu0 0.0
      %2141 = vmatprep.subr.mxu0 0.0
      %2142 = vmatpush1.msra.mxu0 0.0
      %2143 = vmatprep.subr.mxu0 0.0
      %2144 = vmatpush1.msra.mxu0 0.0
      %2145 = vmatprep.subr.mxu0 0.0
      %2146 = vmatpush1.msra.mxu0 0.0
      %2147 = vmatprep.subr.mxu0 0.0
      %2148 = vmatpush1.msra.mxu0 0.0
      %2149 = vmatprep.subr.mxu0 0.0
      %2150 = vmatpush1.msra.mxu0 0.0
      %2151 = vmatprep.subr.mxu0 0.0
      %2152 = vmatpush1.msra.mxu0 0.0
      %2153 = vmatprep.subr.mxu0 0.0
      %2154 = vmatpush1.msra.mxu0 0.0
      %2155 = vmatprep.subr.mxu0 0.0
      %2156 = vmatpush1.msra.mxu0 0.0
      %2157 = vmatprep.subr.mxu0 0.0
      %2158 = vmatpush1.msra.mxu0 0.0
      %2159 = vmatprep.subr.mxu0 0.0
      %2160 = vmatpush1.msra.mxu0 0.0
      %2161 = vmatprep.subr.mxu0 0.0
      %2162 = vmatpush1.msra.mxu0 0.0
      %2163 = vmatprep.subr.mxu0 0.0
      %2164 = vmatpush1.msra.mxu0 0.0
      %2165 = vmatprep.subr.mxu0 0.0
      %2166 = vmatpush1.msra.mxu0 0.0
      %2167 = vmatprep.subr.mxu0 0.0
      %2168 = vmatpush1.msra.mxu0 0.0
      %2169 = vmatprep.subr.mxu0 0.0
      %2170 = vmatpush1.msra.mxu0 0.0
      %2171 = vmatprep.subr.mxu0 0.0
      %2172 = vmatpush1.msra.mxu0 0.0
      %2173 = vmatprep.subr.mxu0 0.0
      %2174 = vmatpush1.msra.mxu0 0.0
      %2175 = vmatprep.subr.mxu0 0.0
      %2176 = vmatpush1.msra.mxu0 0.0
      %2177 = vmatprep.subr.mxu0 0.0
      %2178 = vmatpush1.msra.mxu0 0.0
      %2179 = vmatprep.subr.mxu0 0.0
      %2180 = vmatpush1.msra.mxu0 0.0
      %2181 = vmatprep.mubr.f32.mxu0 0.0
      %2182 = vmatmul.mubr.f32.gmra.mrb[0].mxu0 %v2112
      %v2183 = vpop.f32.mrb[0].mxu0
      %v2184 = vadd.f32 0.0, %v2183
      %v2185 = vpop.f32.mrb[0].mxu0
      %2186 = vmatprep.mubr.f32.mxu0 0.0
      %2187 = vmatmul.mubr.f32.gmra.mrb[0].mxu0 %v2115
      %v2188 = vpop.f32.mrb[0].mxu0
      %v2189 = vadd.f32 0.0, %v2188
      %v2190 = vpop.f32.mrb[0].mxu0
      %2191 = vdwg.mxu0
      %v2192 = vld [vmem:[%s3 + $0x8] sm:$0xff]
      %v2194 = vsel %vm621, %v1917, 0
      %v2197 = vsel %vm621, %v1922, 0
      %v2200 = vsel %vm621, %v2006, 0
      %v2203 = vsel %vm621, %v2011, 0
      %v2206 = vsel %vm621, %v2095, 0
      %v2209 = vsel %vm621, %v2100, 0
      %v2212 = vsel %vm621, %v2184, 0
      %v2215 = vsel %vm621, %v2189, 0
      %2217 = vmatprep.subr.mxu0 0.0
      %2218 = vmatpush1.msra.mxu0 %v2192
      %2219 = vmatprep.subr.mxu0 0.0
      %2220 = vmatpush1.msra.mxu0 0.0
      %2221 = vmatprep.subr.mxu0 0.0
      %2222 = vmatpush1.msra.mxu0 0.0
      %2223 = vmatprep.subr.mxu0 0.0
      %2224 = vmatpush1.msra.mxu0 0.0
      %2225 = vmatprep.subr.mxu0 0.0
      %2226 = vmatpush1.msra.mxu0 0.0
      %2227 = vmatprep.subr.mxu0 0.0
      %2228 = vmatpush1.msra.mxu0 0.0
      %2229 = vmatprep.subr.mxu0 0.0
      %2230 = vmatpush1.msra.mxu0 0.0
      %2231 = vmatprep.subr.mxu0 0.0
      %2232 = vmatpush1.msra.mxu0 0.0
      %2233 = vmatprep.subr.mxu0 0.0
      %2234 = vmatpush1.msra.mxu0 0.0
      %2235 = vmatprep.subr.mxu0 0.0
      %2236 = vmatpush1.msra.mxu0 0.0
      %2237 = vmatprep.subr.mxu0 0.0
      %2238 = vmatpush1.msra.mxu0 0.0
      %2239 = vmatprep.subr.mxu0 0.0
      %2240 = vmatpush1.msra.mxu0 0.0
      %2241 = vmatprep.subr.mxu0 0.0
      %2242 = vmatpush1.msra.mxu0 0.0
      %2243 = vmatprep.subr.mxu0 0.0
      %2244 = vmatpush1.msra.mxu0 0.0
      %2245 = vmatprep.subr.mxu0 0.0
      %2246 = vmatpush1.msra.mxu0 0.0
      %2247 = vmatprep.subr.mxu0 0.0
      %2248 = vmatpush1.msra.mxu0 0.0
      %2249 = vmatprep.subr.mxu0 0.0
      %2250 = vmatpush1.msra.mxu0 0.0
      %2251 = vmatprep.subr.mxu0 0.0
      %2252 = vmatpush1.msra.mxu0 0.0
      %2253 = vmatprep.subr.mxu0 0.0
      %2254 = vmatpush1.msra.mxu0 0.0
      %2255 = vmatprep.subr.mxu0 0.0
      %2256 = vmatpush1.msra.mxu0 0.0
      %2257 = vmatprep.subr.mxu0 0.0
      %2258 = vmatpush1.msra.mxu0 0.0
      %2259 = vmatprep.subr.mxu0 0.0
      %2260 = vmatpush1.msra.mxu0 0.0
      %2261 = vmatprep.subr.mxu0 0.0
      %2262 = vmatpush1.msra.mxu0 0.0
      %2263 = vmatprep.subr.mxu0 0.0
      %2264 = vmatpush1.msra.mxu0 0.0
      %2265 = vmatprep.subr.mxu0 0.0
      %2266 = vmatpush1.msra.mxu0 0.0
      %2267 = vmatprep.subr.mxu0 0.0
      %2268 = vmatpush1.msra.mxu0 0.0
      %2269 = vmatprep.subr.mxu0 0.0
      %2270 = vmatpush1.msra.mxu0 0.0
      %2271 = vmatprep.subr.mxu0 0.0
      %2272 = vmatpush1.msra.mxu0 0.0
      %2273 = vmatprep.subr.mxu0 0.0
      %2274 = vmatpush1.msra.mxu0 0.0
      %2275 = vmatprep.subr.mxu0 0.0
      %2276 = vmatpush1.msra.mxu0 0.0
      %2277 = vmatprep.subr.mxu0 0.0
      %2278 = vmatpush1.msra.mxu0 0.0
      %2279 = vmatprep.subr.mxu0 0.0
      %2280 = vmatpush1.msra.mxu0 0.0
      %2281 = vmatprep.mubr.f32.mxu0 0.0
      %2282 = vmatmul.mubr.f32.gmra.mrb[0].mxu0 %v2194
      %v2283 = vpop.f32.mrb[0].mxu0
      %v2284 = vadd.f32 0.0, %v2283
      %v2285 = vpop.f32.mrb[0].mxu0
      %2286 = vmatprep.mubr.f32.mxu0 0.0
      %2287 = vmatmul.mubr.f32.gmra.mrb[0].mxu0 %v2197
      %v2288 = vpop.f32.mrb[0].mxu0
      %v2289 = vadd.f32 0.0, %v2288
      %v2290 = vpop.f32.mrb[0].mxu0
      %2291 = vmatprep.mubr.f32.mxu0 0.0
      %2292 = vmatmul.mubr.f32.gmra.mrb[0].mxu0 %v2200
      %v2293 = vpop.f32.mrb[0].mxu0
      %v2294 = vadd.f32 0.0, %v2293
      %v2295 = vpop.f32.mrb[0].mxu0
      %2296 = vmatprep.mubr.f32.mxu0 0.0
      %2297 = vmatmul.mubr.f32.gmra.mrb[0].mxu0 %v2203
      %v2298 = vpop.f32.mrb[0].mxu0
      %v2299 = vadd.f32 0.0, %v2298
      %v2300 = vpop.f32.mrb[0].mxu0
      %2301 = vmatprep.mubr.f32.mxu0 0.0
      %2302 = vmatmul.mubr.f32.gmra.mrb[0].mxu0 %v2206
      %v2303 = vpop.f32.mrb[0].mxu0
      %v2304 = vadd.f32 0.0, %v2303
      %v2305 = vpop.f32.mrb[0].mxu0
      %2306 = vmatprep.mubr.f32.mxu0 0.0
      %2307 = vmatmul.mubr.f32.gmra.mrb[0].mxu0 %v2209
      %v2308 = vpop.f32.mrb[0].mxu0
      %v2309 = vadd.f32 0.0, %v2308
      %v2310 = vpop.f32.mrb[0].mxu0
      %2311 = vmatprep.mubr.f32.mxu0 0.0
      %2312 = vmatmul.mubr.f32.gmra.mrb[0].mxu0 %v2212
      %v2313 = vpop.f32.mrb[0].mxu0
      %v2314 = vadd.f32 0.0, %v2313
      %v2315 = vpop.f32.mrb[0].mxu0
      %2316 = vmatprep.mubr.f32.mxu0 0.0
      %2317 = vmatmul.mubr.f32.gmra.mrb[0].mxu0 %v2215
      %v2318 = vpop.f32.mrb[0].mxu0
      %v2319 = vadd.f32 0.0, %v2318
      %v2320 = vpop.f32.mrb[0].mxu0
      %2321 = vdwg.mxu0
      %v2323 = vsel %vm621, %v1132, 0
      %v2326 = vsel %vm621, %v1137, 0
      %v2329 = vsel %vm621, %v1213, 0
      %v2332 = vsel %vm621, %v1218, 0
      %v2335 = vsel %vm621, %v1294, 0
      %v2338 = vsel %vm621, %v1299, 0
      %v2341 = vsel %vm621, %v1375, 0
      %v2344 = vsel %vm621, %v1380, 0
      %2346 = vmatprep.subr.mxu0 0.0
      %2347 = vmatpush1.msra.mxu0 %v1383
      %2348 = vmatprep.subr.mxu0 0.0
      %2349 = vmatpush1.msra.mxu0 0.0
      %2350 = vmatprep.subr.mxu0 0.0
      %2351 = vmatpush1.msra.mxu0 0.0
      %2352 = vmatprep.subr.mxu0 0.0
      %2353 = vmatpush1.msra.mxu0 0.0
      %2354 = vmatprep.subr.mxu0 0.0
      %2355 = vmatpush1.msra.mxu0 0.0
      %2356 = vmatprep.subr.mxu0 0.0
      %2357 = vmatpush1.msra.mxu0 0.0
      %2358 = vmatprep.subr.mxu0 0.0
      %2359 = vmatpush1.msra.mxu0 0.0
      %2360 = vmatprep.subr.mxu0 0.0
      %2361 = vmatpush1.msra.mxu0 0.0
      %2362 = vmatprep.subr.mxu0 0.0
      %2363 = vmatpush1.msra.mxu0 0.0
      %2364 = vmatprep.subr.mxu0 0.0
      %2365 = vmatpush1.msra.mxu0 0.0
      %2366 = vmatprep.subr.mxu0 0.0
      %2367 = vmatpush1.msra.mxu0 0.0
      %2368 = vmatprep.subr.mxu0 0.0
      %2369 = vmatpush1.msra.mxu0 0.0
      %2370 = vmatprep.subr.mxu0 0.0
      %2371 = vmatpush1.msra.mxu0 0.0
      %2372 = vmatprep.subr.mxu0 0.0
      %2373 = vmatpush1.msra.mxu0 0.0
      %2374 = vmatprep.subr.mxu0 0.0
      %2375 = vmatpush1.msra.mxu0 0.0
      %2376 = vmatprep.subr.mxu0 0.0
      %2377 = vmatpush1.msra.mxu0 0.0
      %2378 = vmatprep.subr.mxu0 0.0
      %2379 = vmatpush1.msra.mxu0 0.0
      %2380 = vmatprep.subr.mxu0 0.0
      %2381 = vmatpush1.msra.mxu0 0.0
      %2382 = vmatprep.subr.mxu0 0.0
      %2383 = vmatpush1.msra.mxu0 0.0
      %2384 = vmatprep.subr.mxu0 0.0
      %2385 = vmatpush1.msra.mxu0 0.0
      %2386 = vmatprep.subr.mxu0 0.0
      %2387 = vmatpush1.msra.mxu0 0.0
      %2388 = vmatprep.subr.mxu0 0.0
      %2389 = vmatpush1.msra.mxu0 0.0
      %2390 = vmatprep.subr.mxu0 0.0
      %2391 = vmatpush1.msra.mxu0 0.0
      %2392 = vmatprep.subr.mxu0 0.0
      %2393 = vmatpush1.msra.mxu0 0.0
      %2394 = vmatprep.subr.mxu0 0.0
      %2395 = vmatpush1.msra.mxu0 0.0
      %2396 = vmatprep.subr.mxu0 0.0
      %2397 = vmatpush1.msra.mxu0 0.0
      %2398 = vmatprep.subr.mxu0 0.0
      %2399 = vmatpush1.msra.mxu0 0.0
      %2400 = vmatprep.subr.mxu0 0.0
      %2401 = vmatpush1.msra.mxu0 0.0
      %2402 = vmatprep.subr.mxu0 0.0
      %2403 = vmatpush1.msra.mxu0 0.0
      %2404 = vmatprep.subr.mxu0 0.0
      %2405 = vmatpush1.msra.mxu0 0.0
      %2406 = vmatprep.subr.mxu0 0.0
      %2407 = vmatpush1.msra.mxu0 0.0
      %2408 = vmatprep.subr.mxu0 0.0
      %2409 = vmatpush1.msra.mxu0 0.0
      %2410 = vmatprep.mubr.f32.mxu0 0.0
      %2411 = vmatmul.mubr.f32.gmra.mrb[0].mxu0 %v2323
      %v2412 = vpop.f32.mrb[0].mxu0
      %v2413 = vadd.f32 %v2284, %v2412
      %v2414 = vpop.f32.mrb[0].mxu0
      %2415 = vmatprep.mubr.f32.mxu0 0.0
      %2416 = vmatmul.mubr.f32.gmra.mrb[0].mxu0 %v2326
      %v2417 = vpop.f32.mrb[0].mxu0
      %v2418 = vadd.f32 %v2289, %v2417
      %v2419 = vpop.f32.mrb[0].mxu0
      %2420 = vmatprep.mubr.f32.mxu0 0.0
      %2421 = vmatmul.mubr.f32.gmra.mrb[0].mxu0 %v2329
      %v2422 = vpop.f32.mrb[0].mxu0
      %v2423 = vadd.f32 %v2294, %v2422
      %v2424 = vpop.f32.mrb[0].mxu0
      %2425 = vmatprep.mubr.f32.mxu0 0.0
      %2426 = vmatmul.mubr.f32.gmra.mrb[0].mxu0 %v2332
      %v2427 = vpop.f32.mrb[0].mxu0
      %v2428 = vadd.f32 %v2299, %v2427
      %v2429 = vpop.f32.mrb[0].mxu0
      %2430 = vmatprep.mubr.f32.mxu0 0.0
      %2431 = vmatmul.mubr.f32.gmra.mrb[0].mxu0 %v2335
      %v2432 = vpop.f32.mrb[0].mxu0
      %v2433 = vadd.f32 %v2304, %v2432
      %v2434 = vpop.f32.mrb[0].mxu0
      %2435 = vmatprep.mubr.f32.mxu0 0.0
      %2436 = vmatmul.mubr.f32.gmra.mrb[0].mxu0 %v2338
      %v2437 = vpop.f32.mrb[0].mxu0
      %v2438 = vadd.f32 %v2309, %v2437
      %v2439 = vpop.f32.mrb[0].mxu0
      %2440 = vmatprep.mubr.f32.mxu0 0.0
      %2441 = vmatmul.mubr.f32.gmra.mrb[0].mxu0 %v2341
      %v2442 = vpop.f32.mrb[0].mxu0
      %v2443 = vadd.f32 %v2314, %v2442
      %v2444 = vpop.f32.mrb[0].mxu0
      %2445 = vmatprep.mubr.f32.mxu0 0.0
      %2446 = vmatmul.mubr.f32.gmra.mrb[0].mxu0 %v2344
      %v2447 = vpop.f32.mrb[0].mxu0
      %v2448 = vadd.f32 %v2319, %v2447
      %v2449 = vpop.f32.mrb[0].mxu0
      %2450 = vdwg.mxu0
      %2451 = vrot.lane.b32.xlu0 %v613, 112
      %v2452 = vpop.permute.xlu0 %2451
      %2453 = vrot.lane.b32.xlu0 %v614, 112
      %v2454 = vpop.permute.xlu0 %2453
      %2455 = vrot.lane.b32.xlu0 %v457, 112
      %v2456 = vpop.permute.xlu0 %2455
      %2457 = vrot.lane.b32.xlu0 %v462, 112
      %v2458 = vpop.permute.xlu0 %2457
      %v2459 = vsel %vm621, %v2452, 0
      %v2461 = vsel %vm621, %v2454, 0
      %v2463 = vsel %vm621, %v2456, 0
      %v2465 = vsel %vm621, %v2458, 0
      %2467 = vmatprep.subr.mxu0 0.0
      %2468 = vmatpush1.xpose.msra.mxu0 %v2463
      %2469 = vmatprep.subr.mxu0 0.0
      %2470 = vmatpush1.xpose.msra.mxu0 %v2465
      %2471 = vmatprep.subr.mxu0 0.0
      %2472 = vmatpush1.xpose.msra.mxu0 0.0
      %2473 = vmatprep.subr.mxu0 0.0
      %2474 = vmatpush1.xpose.msra.mxu0 0.0
      %2475 = vmatprep.subr.mxu0 0.0
      %2476 = vmatpush1.xpose.msra.mxu0 0.0
      %2477 = vmatprep.subr.mxu0 0.0
      %2478 = vmatpush1.xpose.msra.mxu0 0.0
      %2479 = vmatprep.subr.mxu0 0.0
      %2480 = vmatpush1.xpose.msra.mxu0 0.0
      %2481 = vmatprep.subr.mxu0 0.0
      %2482 = vmatpush1.xpose.msra.mxu0 0.0
      %2483 = vmatprep.subr.mxu0 0.0
      %2484 = vmatpush1.xpose.msra.mxu0 0.0
      %2485 = vmatprep.subr.mxu0 0.0
      %2486 = vmatpush1.xpose.msra.mxu0 0.0
      %2487 = vmatprep.subr.mxu0 0.0
      %2488 = vmatpush1.xpose.msra.mxu0 0.0
      %2489 = vmatprep.subr.mxu0 0.0
      %2490 = vmatpush1.xpose.msra.mxu0 0.0
      %2491 = vmatprep.subr.mxu0 0.0
      %2492 = vmatpush1.xpose.msra.mxu0 0.0
      %2493 = vmatprep.subr.mxu0 0.0
      %2494 = vmatpush1.xpose.msra.mxu0 0.0
      %2495 = vmatprep.subr.mxu0 0.0
      %2496 = vmatpush1.xpose.msra.mxu0 0.0
      %2497 = vmatprep.subr.mxu0 0.0
      %2498 = vmatpush1.xpose.msra.mxu0 0.0
      %2499 = vmatprep.subr.mxu0 0.0
      %2500 = vmatpush1.xpose.msra.mxu0 0.0
      %2501 = vmatprep.subr.mxu0 0.0
      %2502 = vmatpush1.xpose.msra.mxu0 0.0
      %2503 = vmatprep.subr.mxu0 0.0
      %2504 = vmatpush1.xpose.msra.mxu0 0.0
      %2505 = vmatprep.subr.mxu0 0.0
      %2506 = vmatpush1.xpose.msra.mxu0 0.0
      %2507 = vmatprep.subr.mxu0 0.0
      %2508 = vmatpush1.xpose.msra.mxu0 0.0
      %2509 = vmatprep.subr.mxu0 0.0
      %2510 = vmatpush1.xpose.msra.mxu0 0.0
      %2511 = vmatprep.subr.mxu0 0.0
      %2512 = vmatpush1.xpose.msra.mxu0 0.0
      %2513 = vmatprep.subr.mxu0 0.0
      %2514 = vmatpush1.xpose.msra.mxu0 0.0
      %2515 = vmatprep.subr.mxu0 0.0
      %2516 = vmatpush1.xpose.msra.mxu0 0.0
      %2517 = vmatprep.subr.mxu0 0.0
      %2518 = vmatpush1.xpose.msra.mxu0 0.0
      %2519 = vmatprep.subr.mxu0 0.0
      %2520 = vmatpush1.xpose.msra.mxu0 0.0
      %2521 = vmatprep.subr.mxu0 0.0
      %2522 = vmatpush1.xpose.msra.mxu0 0.0
      %2523 = vmatprep.subr.mxu0 0.0
      %2524 = vmatpush1.xpose.msra.mxu0 0.0
      %2525 = vmatprep.subr.mxu0 0.0
      %2526 = vmatpush1.xpose.msra.mxu0 0.0
      %2527 = vmatprep.subr.mxu0 0.0
      %2528 = vmatpush1.xpose.msra.mxu0 0.0
      %2529 = vmatprep.subr.mxu0 0.0
      %2530 = vmatpush1.xpose.msra.mxu0 0.0
      %2531 = vmatprep.mubr.f32.mxu0 0.0
      %2532 = vmatmul.mubr.f32.gmra.mrb[0].mxu0 %v2459
      %v2533 = vpop.f32.mrb[0].mxu0
      %v2534 = vadd.f32 0.0, %v2533
      %v2535 = vpop.f32.mrb[0].mxu0
      %2536 = vmatprep.mubr.f32.mxu0 0.0
      %2537 = vmatmul.mubr.f32.gmra.mrb[0].mxu0 %v2461
      %v2538 = vpop.f32.mrb[0].mxu0
      %v2539 = vadd.f32 0.0, %v2538
      %v2540 = vpop.f32.mrb[0].mxu0
      %2541 = vdwg.mxu0
      %2542 = vrot.lane.b32.xlu0 %v615, 112
      %v2543 = vpop.permute.xlu0 %2542
      %2544 = vrot.lane.b32.xlu0 %v616, 112
      %v2545 = vpop.permute.xlu0 %2544
      %2546 = vrot.lane.b32.xlu0 %v467, 112
      %v2547 = vpop.permute.xlu0 %2546
      %2548 = vrot.lane.b32.xlu0 %v472, 112
      %v2549 = vpop.permute.xlu0 %2548
      %v2550 = vsel %vm621, %v2543, 0
      %v2552 = vsel %vm621, %v2545, 0
      %v2554 = vsel %vm621, %v2547, 0
      %v2556 = vsel %vm621, %v2549, 0
      %2558 = vmatprep.subr.mxu0 0.0
      %2559 = vmatpush1.xpose.msra.mxu0 %v2554
      %2560 = vmatprep.subr.mxu0 0.0
      %2561 = vmatpush1.xpose.msra.mxu0 %v2556
      %2562 = vmatprep.subr.mxu0 0.0
      %2563 = vmatpush1.xpose.msra.mxu0 0.0
      %2564 = vmatprep.subr.mxu0 0.0
      %2565 = vmatpush1.xpose.msra.mxu0 0.0
      %2566 = vmatprep.subr.mxu0 0.0
      %2567 = vmatpush1.xpose.msra.mxu0 0.0
      %2568 = vmatprep.subr.mxu0 0.0
      %2569 = vmatpush1.xpose.msra.mxu0 0.0
      %2570 = vmatprep.subr.mxu0 0.0
      %2571 = vmatpush1.xpose.msra.mxu0 0.0
      %2572 = vmatprep.subr.mxu0 0.0
      %2573 = vmatpush1.xpose.msra.mxu0 0.0
      %2574 = vmatprep.subr.mxu0 0.0
      %2575 = vmatpush1.xpose.msra.mxu0 0.0
      %2576 = vmatprep.subr.mxu0 0.0
      %2577 = vmatpush1.xpose.msra.mxu0 0.0
      %2578 = vmatprep.subr.mxu0 0.0
      %2579 = vmatpush1.xpose.msra.mxu0 0.0
      %2580 = vmatprep.subr.mxu0 0.0
      %2581 = vmatpush1.xpose.msra.mxu0 0.0
      %2582 = vmatprep.subr.mxu0 0.0
      %2583 = vmatpush1.xpose.msra.mxu0 0.0
      %2584 = vmatprep.subr.mxu0 0.0
      %2585 = vmatpush1.xpose.msra.mxu0 0.0
      %2586 = vmatprep.subr.mxu0 0.0
      %2587 = vmatpush1.xpose.msra.mxu0 0.0
      %2588 = vmatprep.subr.mxu0 0.0
      %2589 = vmatpush1.xpose.msra.mxu0 0.0
      %2590 = vmatprep.subr.mxu0 0.0
      %2591 = vmatpush1.xpose.msra.mxu0 0.0
      %2592 = vmatprep.subr.mxu0 0.0
      %2593 = vmatpush1.xpose.msra.mxu0 0.0
      %2594 = vmatprep.subr.mxu0 0.0
      %2595 = vmatpush1.xpose.msra.mxu0 0.0
      %2596 = vmatprep.subr.mxu0 0.0
      %2597 = vmatpush1.xpose.msra.mxu0 0.0
      %2598 = vmatprep.subr.mxu0 0.0
      %2599 = vmatpush1.xpose.msra.mxu0 0.0
      %2600 = vmatprep.subr.mxu0 0.0
      %2601 = vmatpush1.xpose.msra.mxu0 0.0
      %2602 = vmatprep.subr.mxu0 0.0
      %2603 = vmatpush1.xpose.msra.mxu0 0.0
      %2604 = vmatprep.subr.mxu0 0.0
      %2605 = vmatpush1.xpose.msra.mxu0 0.0
      %2606 = vmatprep.subr.mxu0 0.0
      %2607 = vmatpush1.xpose.msra.mxu0 0.0
      %2608 = vmatprep.subr.mxu0 0.0
      %2609 = vmatpush1.xpose.msra.mxu0 0.0
      %2610 = vmatprep.subr.mxu0 0.0
      %2611 = vmatpush1.xpose.msra.mxu0 0.0
      %2612 = vmatprep.subr.mxu0 0.0
      %2613 = vmatpush1.xpose.msra.mxu0 0.0
      %2614 = vmatprep.subr.mxu0 0.0
      %2615 = vmatpush1.xpose.msra.mxu0 0.0
      %2616 = vmatprep.subr.mxu0 0.0
      %2617 = vmatpush1.xpose.msra.mxu0 0.0
      %2618 = vmatprep.subr.mxu0 0.0
      %2619 = vmatpush1.xpose.msra.mxu0 0.0
      %2620 = vmatprep.subr.mxu0 0.0
      %2621 = vmatpush1.xpose.msra.mxu0 0.0
      %2622 = vmatprep.mubr.f32.mxu0 0.0
      %2623 = vmatmul.mubr.f32.gmra.mrb[0].mxu0 %v2550
      %v2624 = vpop.f32.mrb[0].mxu0
      %v2625 = vadd.f32 0.0, %v2624
      %v2626 = vpop.f32.mrb[0].mxu0
      %2627 = vmatprep.mubr.f32.mxu0 0.0
      %2628 = vmatmul.mubr.f32.gmra.mrb[0].mxu0 %v2552
      %v2629 = vpop.f32.mrb[0].mxu0
      %v2630 = vadd.f32 0.0, %v2629
      %v2631 = vpop.f32.mrb[0].mxu0
      %2632 = vdwg.mxu0
      %2633 = vrot.lane.b32.xlu0 %v617, 112
      %v2634 = vpop.permute.xlu0 %2633
      %2635 = vrot.lane.b32.xlu0 %v618, 112
      %v2636 = vpop.permute.xlu0 %2635
      %2637 = vrot.lane.b32.xlu0 %v477, 112
      %v2638 = vpop.permute.xlu0 %2637
      %2639 = vrot.lane.b32.xlu0 %v482, 112
      %v2640 = vpop.permute.xlu0 %2639
      %v2641 = vsel %vm621, %v2634, 0
      %v2643 = vsel %vm621, %v2636, 0
      %v2645 = vsel %vm621, %v2638, 0
      %v2647 = vsel %vm621, %v2640, 0
      %2649 = vmatprep.subr.mxu0 0.0
      %2650 = vmatpush1.xpose.msra.mxu0 %v2645
      %2651 = vmatprep.subr.mxu0 0.0
      %2652 = vmatpush1.xpose.msra.mxu0 %v2647
      %2653 = vmatprep.subr.mxu0 0.0
      %2654 = vmatpush1.xpose.msra.mxu0 0.0
      %2655 = vmatprep.subr.mxu0 0.0
      %2656 = vmatpush1.xpose.msra.mxu0 0.0
      %2657 = vmatprep.subr.mxu0 0.0
      %2658 = vmatpush1.xpose.msra.mxu0 0.0
      %2659 = vmatprep.subr.mxu0 0.0
      %2660 = vmatpush1.xpose.msra.mxu0 0.0
      %2661 = vmatprep.subr.mxu0 0.0
      %2662 = vmatpush1.xpose.msra.mxu0 0.0
      %2663 = vmatprep.subr.mxu0 0.0
      %2664 = vmatpush1.xpose.msra.mxu0 0.0
      %2665 = vmatprep.subr.mxu0 0.0
      %2666 = vmatpush1.xpose.msra.mxu0 0.0
      %2667 = vmatprep.subr.mxu0 0.0
      %2668 = vmatpush1.xpose.msra.mxu0 0.0
      %2669 = vmatprep.subr.mxu0 0.0
      %2670 = vmatpush1.xpose.msra.mxu0 0.0
      %2671 = vmatprep.subr.mxu0 0.0
      %2672 = vmatpush1.xpose.msra.mxu0 0.0
      %2673 = vmatprep.subr.mxu0 0.0
      %2674 = vmatpush1.xpose.msra.mxu0 0.0
      %2675 = vmatprep.subr.mxu0 0.0
      %2676 = vmatpush1.xpose.msra.mxu0 0.0
      %2677 = vmatprep.subr.mxu0 0.0
      %2678 = vmatpush1.xpose.msra.mxu0 0.0
      %2679 = vmatprep.subr.mxu0 0.0
      %2680 = vmatpush1.xpose.msra.mxu0 0.0
      %2681 = vmatprep.subr.mxu0 0.0
      %2682 = vmatpush1.xpose.msra.mxu0 0.0
      %2683 = vmatprep.subr.mxu0 0.0
      %2684 = vmatpush1.xpose.msra.mxu0 0.0
      %2685 = vmatprep.subr.mxu0 0.0
      %2686 = vmatpush1.xpose.msra.mxu0 0.0
      %2687 = vmatprep.subr.mxu0 0.0
      %2688 = vmatpush1.xpose.msra.mxu0 0.0
      %2689 = vmatprep.subr.mxu0 0.0
      %2690 = vmatpush1.xpose.msra.mxu0 0.0
      %2691 = vmatprep.subr.mxu0 0.0
      %2692 = vmatpush1.xpose.msra.mxu0 0.0
      %2693 = vmatprep.subr.mxu0 0.0
      %2694 = vmatpush1.xpose.msra.mxu0 0.0
      %2695 = vmatprep.subr.mxu0 0.0
      %2696 = vmatpush1.xpose.msra.mxu0 0.0
      %2697 = vmatprep.subr.mxu0 0.0
      %2698 = vmatpush1.xpose.msra.mxu0 0.0
      %2699 = vmatprep.subr.mxu0 0.0
      %2700 = vmatpush1.xpose.msra.mxu0 0.0
      %2701 = vmatprep.subr.mxu0 0.0
      %2702 = vmatpush1.xpose.msra.mxu0 0.0
      %2703 = vmatprep.subr.mxu0 0.0
      %2704 = vmatpush1.xpose.msra.mxu0 0.0
      %2705 = vmatprep.subr.mxu0 0.0
      %2706 = vmatpush1.xpose.msra.mxu0 0.0
      %2707 = vmatprep.subr.mxu0 0.0
      %2708 = vmatpush1.xpose.msra.mxu0 0.0
      %2709 = vmatprep.subr.mxu0 0.0
      %2710 = vmatpush1.xpose.msra.mxu0 0.0
      %2711 = vmatprep.subr.mxu0 0.0
      %2712 = vmatpush1.xpose.msra.mxu0 0.0
      %2713 = vmatprep.mubr.f32.mxu0 0.0
      %2714 = vmatmul.mubr.f32.gmra.mrb[0].mxu0 %v2641
      %v2715 = vpop.f32.mrb[0].mxu0
      %v2716 = vadd.f32 0.0, %v2715
      %v2717 = vpop.f32.mrb[0].mxu0
      %2718 = vmatprep.mubr.f32.mxu0 0.0
      %2719 = vmatmul.mubr.f32.gmra.mrb[0].mxu0 %v2643
      %v2720 = vpop.f32.mrb[0].mxu0
      %v2721 = vadd.f32 0.0, %v2720
      %v2722 = vpop.f32.mrb[0].mxu0
      %2723 = vdwg.mxu0
      %2724 = vrot.lane.b32.xlu0 %v619, 112
      %v2725 = vpop.permute.xlu0 %2724
      %2726 = vrot.lane.b32.xlu0 %v620, 112
      %v2727 = vpop.permute.xlu0 %2726
      %2728 = vrot.lane.b32.xlu0 %v487, 112
      %v2729 = vpop.permute.xlu0 %2728
      %2730 = vrot.lane.b32.xlu0 %v492, 112
      %v2731 = vpop.permute.xlu0 %2730
      %v2732 = vsel %vm621, %v2725, 0
      %v2734 = vsel %vm621, %v2727, 0
      %v2736 = vsel %vm621, %v2729, 0
      %v2738 = vsel %vm621, %v2731, 0
      %2740 = vmatprep.subr.mxu0 0.0
      %2741 = vmatpush1.xpose.msra.mxu0 %v2736
      %2742 = vmatprep.subr.mxu0 0.0
      %2743 = vmatpush1.xpose.msra.mxu0 %v2738
      %2744 = vmatprep.subr.mxu0 0.0
      %2745 = vmatpush1.xpose.msra.mxu0 0.0
      %2746 = vmatprep.subr.mxu0 0.0
      %2747 = vmatpush1.xpose.msra.mxu0 0.0
      %2748 = vmatprep.subr.mxu0 0.0
      %2749 = vmatpush1.xpose.msra.mxu0 0.0
      %2750 = vmatprep.subr.mxu0 0.0
      %2751 = vmatpush1.xpose.msra.mxu0 0.0
      %2752 = vmatprep.subr.mxu0 0.0
      %2753 = vmatpush1.xpose.msra.mxu0 0.0
      %2754 = vmatprep.subr.mxu0 0.0
      %2755 = vmatpush1.xpose.msra.mxu0 0.0
      %2756 = vmatprep.subr.mxu0 0.0
      %2757 = vmatpush1.xpose.msra.mxu0 0.0
      %2758 = vmatprep.subr.mxu0 0.0
      %2759 = vmatpush1.xpose.msra.mxu0 0.0
      %2760 = vmatprep.subr.mxu0 0.0
      %2761 = vmatpush1.xpose.msra.mxu0 0.0
      %2762 = vmatprep.subr.mxu0 0.0
      %2763 = vmatpush1.xpose.msra.mxu0 0.0
      %2764 = vmatprep.subr.mxu0 0.0
      %2765 = vmatpush1.xpose.msra.mxu0 0.0
      %2766 = vmatprep.subr.mxu0 0.0
      %2767 = vmatpush1.xpose.msra.mxu0 0.0
      %2768 = vmatprep.subr.mxu0 0.0
      %2769 = vmatpush1.xpose.msra.mxu0 0.0
      %2770 = vmatprep.subr.mxu0 0.0
      %2771 = vmatpush1.xpose.msra.mxu0 0.0
      %2772 = vmatprep.subr.mxu0 0.0
      %2773 = vmatpush1.xpose.msra.mxu0 0.0
      %2774 = vmatprep.subr.mxu0 0.0
      %2775 = vmatpush1.xpose.msra.mxu0 0.0
      %2776 = vmatprep.subr.mxu0 0.0
      %2777 = vmatpush1.xpose.msra.mxu0 0.0
      %2778 = vmatprep.subr.mxu0 0.0
      %2779 = vmatpush1.xpose.msra.mxu0 0.0
      %2780 = vmatprep.subr.mxu0 0.0
      %2781 = vmatpush1.xpose.msra.mxu0 0.0
      %2782 = vmatprep.subr.mxu0 0.0
      %2783 = vmatpush1.xpose.msra.mxu0 0.0
      %2784 = vmatprep.subr.mxu0 0.0
      %2785 = vmatpush1.xpose.msra.mxu0 0.0
      %2786 = vmatprep.subr.mxu0 0.0
      %2787 = vmatpush1.xpose.msra.mxu0 0.0
      %2788 = vmatprep.subr.mxu0 0.0
      %2789 = vmatpush1.xpose.msra.mxu0 0.0
      %2790 = vmatprep.subr.mxu0 0.0
      %2791 = vmatpush1.xpose.msra.mxu0 0.0
      %2792 = vmatprep.subr.mxu0 0.0
      %2793 = vmatpush1.xpose.msra.mxu0 0.0
      %2794 = vmatprep.subr.mxu0 0.0
      %2795 = vmatpush1.xpose.msra.mxu0 0.0
      %2796 = vmatprep.subr.mxu0 0.0
      %2797 = vmatpush1.xpose.msra.mxu0 0.0
      %2798 = vmatprep.subr.mxu0 0.0
      %2799 = vmatpush1.xpose.msra.mxu0 0.0
      %2800 = vmatprep.subr.mxu0 0.0
      %2801 = vmatpush1.xpose.msra.mxu0 0.0
      %2802 = vmatprep.subr.mxu0 0.0
      %2803 = vmatpush1.xpose.msra.mxu0 0.0
      %2804 = vmatprep.mubr.f32.mxu0 0.0
      %2805 = vmatmul.mubr.f32.gmra.mrb[0].mxu0 %v2732
      %v2806 = vpop.f32.mrb[0].mxu0
      %v2807 = vadd.f32 0.0, %v2806
      %v2808 = vpop.f32.mrb[0].mxu0
      %2809 = vmatprep.mubr.f32.mxu0 0.0
      %2810 = vmatmul.mubr.f32.gmra.mrb[0].mxu0 %v2734
      %v2811 = vpop.f32.mrb[0].mxu0
      %v2812 = vadd.f32 0.0, %v2811
      %v2813 = vpop.f32.mrb[0].mxu0
      %2814 = vdwg.mxu0
      %v2815 = vsel %vm970, %v2534, -inf
      %2816 = vmax.xlane.f32.xlu0 %v2815
      %v2817 = vpop.xlane.xlu0 %2816
      %v2818 = vsel %vm970, %v2539, -inf
      %2819 = vmax.xlane.f32.xlu0 %v2818
      %v2820 = vpop.xlane.xlu0 %2819
      %v2821 = vsel %vm970, %v2625, -inf
      %2822 = vmax.xlane.f32.xlu0 %v2821
      %v2823 = vpop.xlane.xlu0 %2822
      %v2824 = vsel %vm970, %v2630, -inf
      %2825 = vmax.xlane.f32.xlu0 %v2824
      %v2826 = vpop.xlane.xlu0 %2825
      %v2827 = vsel %vm970, %v2716, -inf
      %2828 = vmax.xlane.f32.xlu0 %v2827
      %v2829 = vpop.xlane.xlu0 %2828
      %v2830 = vsel %vm970, %v2721, -inf
      %2831 = vmax.xlane.f32.xlu0 %v2830
      %v2832 = vpop.xlane.xlu0 %2831
      %v2833 = vsel %vm970, %v2807, -inf
      %2834 = vmax.xlane.f32.xlu0 %v2833
      %v2835 = vpop.xlane.xlu0 %2834
      %v2836 = vsel %vm970, %v2812, -inf
      %2837 = vmax.xlane.f32.xlu0 %v2836
      %v2838 = vpop.xlane.xlu0 %2837
      %v2839 = vsub.f32 %v2534, %v2817
      %v2840 = vsub.f32 %v2539, %v2820
      %v2841 = vsub.f32 %v2625, %v2823
      %v2842 = vsub.f32 %v2630, %v2826
      %v2843 = vsub.f32 %v2716, %v2829
      %v2844 = vsub.f32 %v2721, %v2832
      %v2845 = vsub.f32 %v2807, %v2835
      %v2846 = vsub.f32 %v2812, %v2838
      %v2847 = vmul.f32 %v2839, 1.442695
      %v2848 = vpow.pop %v2847
      %v2849 = vmul.f32 %v2840, 1.442695
      %v2850 = vpow.pop %v2849
      %v2851 = vmul.f32 %v2841, 1.442695
      %v2852 = vpow.pop %v2851
      %v2853 = vmul.f32 %v2842, 1.442695
      %v2854 = vpow.pop %v2853
      %v2855 = vmul.f32 %v2843, 1.442695
      %v2856 = vpow.pop %v2855
      %v2857 = vmul.f32 %v2844, 1.442695
      %v2858 = vpow.pop %v2857
      %v2859 = vmul.f32 %v2845, 1.442695
      %v2860 = vpow.pop %v2859
      %v2861 = vmul.f32 %v2846, 1.442695
      %v2862 = vpow.pop %v2861
      %v2863 = vsel %vm970, %v2848, 0.0
      %2864 = vadd.xlane.f32.xlu0 %v2863
      %v2865 = vpop.xlane.xlu0 %2864
      %v2866 = vsel %vm970, %v2850, 0.0
      %2867 = vadd.xlane.f32.xlu0 %v2866
      %v2868 = vpop.xlane.xlu0 %2867
      %v2869 = vsel %vm970, %v2852, 0.0
      %2870 = vadd.xlane.f32.xlu0 %v2869
      %v2871 = vpop.xlane.xlu0 %2870
      %v2872 = vsel %vm970, %v2854, 0.0
      %2873 = vadd.xlane.f32.xlu0 %v2872
      %v2874 = vpop.xlane.xlu0 %2873
      %v2875 = vsel %vm970, %v2856, 0.0
      %2876 = vadd.xlane.f32.xlu0 %v2875
      %v2877 = vpop.xlane.xlu0 %2876
      %v2878 = vsel %vm970, %v2858, 0.0
      %2879 = vadd.xlane.f32.xlu0 %v2878
      %v2880 = vpop.xlane.xlu0 %2879
      %v2881 = vsel %vm970, %v2860, 0.0
      %2882 = vadd.xlane.f32.xlu0 %v2881
      %v2883 = vpop.xlane.xlu0 %2882
      %v2884 = vsel %vm970, %v2862, 0.0
      %2885 = vadd.xlane.f32.xlu0 %v2884
      %v2886 = vpop.xlane.xlu0 %2885
      %v2887 = vrcp.pop %v2865
      %v2888 = vmul.f32 %v2848, %v2887
      %v2889 = vrcp.pop %v2868
      %v2890 = vmul.f32 %v2850, %v2889
      %v2891 = vrcp.pop %v2871
      %v2892 = vmul.f32 %v2852, %v2891
      %v2893 = vrcp.pop %v2874
      %v2894 = vmul.f32 %v2854, %v2893
      %v2895 = vrcp.pop %v2877
      %v2896 = vmul.f32 %v2856, %v2895
      %v2897 = vrcp.pop %v2880
      %v2898 = vmul.f32 %v2858, %v2897
      %v2899 = vrcp.pop %v2883
      %v2900 = vmul.f32 %v2860, %v2899
      %v2901 = vrcp.pop %v2886
      %v2902 = vmul.f32 %v2862, %v2901
      %2903 = vrot.lane.b32.xlu0 %v575, 112
      %v2904 = vpop.permute.xlu0 %2903
      %2905 = vrot.lane.b32.xlu0 %v580, 112
      %v2906 = vpop.permute.xlu0 %2905
      %v2910 = vsel %vm970, %v2888, 0
      %v2913 = vsel %vm970, %v2890, 0
      %2915 = vmatprep.subr.mxu0 0.0
      %2916 = vmatpush1.msra.mxu0 %v2904
      %2917 = vmatprep.subr.mxu0 0.0
      %2918 = vmatpush1.msra.mxu0 %v2906
      %2919 = vmatprep.subr.mxu0 0.0
      %2920 = vmatpush1.msra.mxu0 0.0
      %2921 = vmatprep.subr.mxu0 0.0
      %2922 = vmatpush1.msra.mxu0 0.0
      %2923 = vmatprep.subr.mxu0 0.0
      %2924 = vmatpush1.msra.mxu0 0.0
      %2925 = vmatprep.subr.mxu0 0.0
      %2926 = vmatpush1.msra.mxu0 0.0
      %2927 = vmatprep.subr.mxu0 0.0
      %2928 = vmatpush1.msra.mxu0 0.0
      %2929 = vmatprep.subr.mxu0 0.0
      %2930 = vmatpush1.msra.mxu0 0.0
      %2931 = vmatprep.subr.mxu0 0.0
      %2932 = vmatpush1.msra.mxu0 0.0
      %2933 = vmatprep.subr.mxu0 0.0
      %2934 = vmatpush1.msra.mxu0 0.0
      %2935 = vmatprep.subr.mxu0 0.0
      %2936 = vmatpush1.msra.mxu0 0.0
      %2937 = vmatprep.subr.mxu0 0.0
      %2938 = vmatpush1.msra.mxu0 0.0
      %2939 = vmatprep.subr.mxu0 0.0
      %2940 = vmatpush1.msra.mxu0 0.0
      %2941 = vmatprep.subr.mxu0 0.0
      %2942 = vmatpush1.msra.mxu0 0.0
      %2943 = vmatprep.subr.mxu0 0.0
      %2944 = vmatpush1.msra.mxu0 0.0
      %2945 = vmatprep.subr.mxu0 0.0
      %2946 = vmatpush1.msra.mxu0 0.0
      %2947 = vmatprep.subr.mxu0 0.0
      %2948 = vmatpush1.msra.mxu0 0.0
      %2949 = vmatprep.subr.mxu0 0.0
      %2950 = vmatpush1.msra.mxu0 0.0
      %2951 = vmatprep.subr.mxu0 0.0
      %2952 = vmatpush1.msra.mxu0 0.0
      %2953 = vmatprep.subr.mxu0 0.0
      %2954 = vmatpush1.msra.mxu0 0.0
      %2955 = vmatprep.subr.mxu0 0.0
      %2956 = vmatpush1.msra.mxu0 0.0
      %2957 = vmatprep.subr.mxu0 0.0
      %2958 = vmatpush1.msra.mxu0 0.0
      %2959 = vmatprep.subr.mxu0 0.0
      %2960 = vmatpush1.msra.mxu0 0.0
      %2961 = vmatprep.subr.mxu0 0.0
      %2962 = vmatpush1.msra.mxu0 0.0
      %2963 = vmatprep.subr.mxu0 0.0
      %2964 = vmatpush1.msra.mxu0 0.0
      %2965 = vmatprep.subr.mxu0 0.0
      %2966 = vmatpush1.msra.mxu0 0.0
      %2967 = vmatprep.subr.mxu0 0.0
      %2968 = vmatpush1.msra.mxu0 0.0
      %2969 = vmatprep.subr.mxu0 0.0
      %2970 = vmatpush1.msra.mxu0 0.0
      %2971 = vmatprep.subr.mxu0 0.0
      %2972 = vmatpush1.msra.mxu0 0.0
      %2973 = vmatprep.subr.mxu0 0.0
      %2974 = vmatpush1.msra.mxu0 0.0
      %2975 = vmatprep.subr.mxu0 0.0
      %2976 = vmatpush1.msra.mxu0 0.0
      %2977 = vmatprep.subr.mxu0 0.0
      %2978 = vmatpush1.msra.mxu0 0.0
      %2979 = vmatprep.mubr.f32.mxu0 0.0
      %2980 = vmatmul.mubr.f32.gmra.mrb[0].mxu0 %v2910
      %v2981 = vpop.f32.mrb[0].mxu0
      %v2982 = vadd.f32 0.0, %v2981
      %v2983 = vpop.f32.mrb[0].mxu0
      %2984 = vmatprep.mubr.f32.mxu0 0.0
      %2985 = vmatmul.mubr.f32.gmra.mrb[0].mxu0 %v2913
      %v2986 = vpop.f32.mrb[0].mxu0
      %v2987 = vadd.f32 0.0, %v2986
      %v2988 = vpop.f32.mrb[0].mxu0
      %2989 = vdwg.mxu0
      %2990 = vrot.lane.b32.xlu0 %v585, 112
      %v2991 = vpop.permute.xlu0 %2990
      %2992 = vrot.lane.b32.xlu0 %v590, 112
      %v2993 = vpop.permute.xlu0 %2992
      %v2997 = vsel %vm970, %v2892, 0
      %v3000 = vsel %vm970, %v2894, 0
      %3002 = vmatprep.subr.mxu0 0.0
      %3003 = vmatpush1.msra.mxu0 %v2991
      %3004 = vmatprep.subr.mxu0 0.0
      %3005 = vmatpush1.msra.mxu0 %v2993
      %3006 = vmatprep.subr.mxu0 0.0
      %3007 = vmatpush1.msra.mxu0 0.0
      %3008 = vmatprep.subr.mxu0 0.0
      %3009 = vmatpush1.msra.mxu0 0.0
      %3010 = vmatprep.subr.mxu0 0.0
      %3011 = vmatpush1.msra.mxu0 0.0
      %3012 = vmatprep.subr.mxu0 0.0
      %3013 = vmatpush1.msra.mxu0 0.0
      %3014 = vmatprep.subr.mxu0 0.0
      %3015 = vmatpush1.msra.mxu0 0.0
      %3016 = vmatprep.subr.mxu0 0.0
      %3017 = vmatpush1.msra.mxu0 0.0
      %3018 = vmatprep.subr.mxu0 0.0
      %3019 = vmatpush1.msra.mxu0 0.0
      %3020 = vmatprep.subr.mxu0 0.0
      %3021 = vmatpush1.msra.mxu0 0.0
      %3022 = vmatprep.subr.mxu0 0.0
      %3023 = vmatpush1.msra.mxu0 0.0
      %3024 = vmatprep.subr.mxu0 0.0
      %3025 = vmatpush1.msra.mxu0 0.0
      %3026 = vmatprep.subr.mxu0 0.0
      %3027 = vmatpush1.msra.mxu0 0.0
      %3028 = vmatprep.subr.mxu0 0.0
      %3029 = vmatpush1.msra.mxu0 0.0
      %3030 = vmatprep.subr.mxu0 0.0
      %3031 = vmatpush1.msra.mxu0 0.0
      %3032 = vmatprep.subr.mxu0 0.0
      %3033 = vmatpush1.msra.mxu0 0.0
      %3034 = vmatprep.subr.mxu0 0.0
      %3035 = vmatpush1.msra.mxu0 0.0
      %3036 = vmatprep.subr.mxu0 0.0
      %3037 = vmatpush1.msra.mxu0 0.0
      %3038 = vmatprep.subr.mxu0 0.0
      %3039 = vmatpush1.msra.mxu0 0.0
      %3040 = vmatprep.subr.mxu0 0.0
      %3041 = vmatpush1.msra.mxu0 0.0
      %3042 = vmatprep.subr.mxu0 0.0
      %3043 = vmatpush1.msra.mxu0 0.0
      %3044 = vmatprep.subr.mxu0 0.0
      %3045 = vmatpush1.msra.mxu0 0.0
      %3046 = vmatprep.subr.mxu0 0.0
      %3047 = vmatpush1.msra.mxu0 0.0
      %3048 = vmatprep.subr.mxu0 0.0
      %3049 = vmatpush1.msra.mxu0 0.0
      %3050 = vmatprep.subr.mxu0 0.0
      %3051 = vmatpush1.msra.mxu0 0.0
      %3052 = vmatprep.subr.mxu0 0.0
      %3053 = vmatpush1.msra.mxu0 0.0
      %3054 = vmatprep.subr.mxu0 0.0
      %3055 = vmatpush1.msra.mxu0 0.0
      %3056 = vmatprep.subr.mxu0 0.0
      %3057 = vmatpush1.msra.mxu0 0.0
      %3058 = vmatprep.subr.mxu0 0.0
      %3059 = vmatpush1.msra.mxu0 0.0
      %3060 = vmatprep.subr.mxu0 0.0
      %3061 = vmatpush1.msra.mxu0 0.0
      %3062 = vmatprep.subr.mxu0 0.0
      %3063 = vmatpush1.msra.mxu0 0.0
      %3064 = vmatprep.subr.mxu0 0.0
      %3065 = vmatpush1.msra.mxu0 0.0
      %3066 = vmatprep.mubr.f32.mxu0 0.0
      %3067 = vmatmul.mubr.f32.gmra.mrb[0].mxu0 %v2997
      %v3068 = vpop.f32.mrb[0].mxu0
      %v3069 = vadd.f32 0.0, %v3068
      %v3070 = vpop.f32.mrb[0].mxu0
      %3071 = vmatprep.mubr.f32.mxu0 0.0
      %3072 = vmatmul.mubr.f32.gmra.mrb[0].mxu0 %v3000
      %v3073 = vpop.f32.mrb[0].mxu0
      %v3074 = vadd.f32 0.0, %v3073
      %v3075 = vpop.f32.mrb[0].mxu0
      %3076 = vdwg.mxu0
      %3077 = vrot.lane.b32.xlu0 %v595, 112
      %v3078 = vpop.permute.xlu0 %3077
      %3079 = vrot.lane.b32.xlu0 %v600, 112
      %v3080 = vpop.permute.xlu0 %3079
      %v3084 = vsel %vm970, %v2896, 0
      %v3087 = vsel %vm970, %v2898, 0
      %3089 = vmatprep.subr.mxu0 0.0
      %3090 = vmatpush1.msra.mxu0 %v3078
      %3091 = vmatprep.subr.mxu0 0.0
      %3092 = vmatpush1.msra.mxu0 %v3080
      %3093 = vmatprep.subr.mxu0 0.0
      %3094 = vmatpush1.msra.mxu0 0.0
      %3095 = vmatprep.subr.mxu0 0.0
      %3096 = vmatpush1.msra.mxu0 0.0
      %3097 = vmatprep.subr.mxu0 0.0
      %3098 = vmatpush1.msra.mxu0 0.0
      %3099 = vmatprep.subr.mxu0 0.0
      %3100 = vmatpush1.msra.mxu0 0.0
      %3101 = vmatprep.subr.mxu0 0.0
      %3102 = vmatpush1.msra.mxu0 0.0
      %3103 = vmatprep.subr.mxu0 0.0
      %3104 = vmatpush1.msra.mxu0 0.0
      %3105 = vmatprep.subr.mxu0 0.0
      %3106 = vmatpush1.msra.mxu0 0.0
      %3107 = vmatprep.subr.mxu0 0.0
      %3108 = vmatpush1.msra.mxu0 0.0
      %3109 = vmatprep.subr.mxu0 0.0
      %3110 = vmatpush1.msra.mxu0 0.0
      %3111 = vmatprep.subr.mxu0 0.0
      %3112 = vmatpush1.msra.mxu0 0.0
      %3113 = vmatprep.subr.mxu0 0.0
      %3114 = vmatpush1.msra.mxu0 0.0
      %3115 = vmatprep.subr.mxu0 0.0
      %3116 = vmatpush1.msra.mxu0 0.0
      %3117 = vmatprep.subr.mxu0 0.0
      %3118 = vmatpush1.msra.mxu0 0.0
      %3119 = vmatprep.subr.mxu0 0.0
      %3120 = vmatpush1.msra.mxu0 0.0
      %3121 = vmatprep.subr.mxu0 0.0
      %3122 = vmatpush1.msra.mxu0 0.0
      %3123 = vmatprep.subr.mxu0 0.0
      %3124 = vmatpush1.msra.mxu0 0.0
      %3125 = vmatprep.subr.mxu0 0.0
      %3126 = vmatpush1.msra.mxu0 0.0
      %3127 = vmatprep.subr.mxu0 0.0
      %3128 = vmatpush1.msra.mxu0 0.0
      %3129 = vmatprep.subr.mxu0 0.0
      %3130 = vmatpush1.msra.mxu0 0.0
      %3131 = vmatprep.subr.mxu0 0.0
      %3132 = vmatpush1.msra.mxu0 0.0
      %3133 = vmatprep.subr.mxu0 0.0
      %3134 = vmatpush1.msra.mxu0 0.0
      %3135 = vmatprep.subr.mxu0 0.0
      %3136 = vmatpush1.msra.mxu0 0.0
      %3137 = vmatprep.subr.mxu0 0.0
      %3138 = vmatpush1.msra.mxu0 0.0
      %3139 = vmatprep.subr.mxu0 0.0
      %3140 = vmatpush1.msra.mxu0 0.0
      %3141 = vmatprep.subr.mxu0 0.0
      %3142 = vmatpush1.msra.mxu0 0.0
      %3143 = vmatprep.subr.mxu0 0.0
      %3144 = vmatpush1.msra.mxu0 0.0
      %3145 = vmatprep.subr.mxu0 0.0
      %3146 = vmatpush1.msra.mxu0 0.0
      %3147 = vmatprep.subr.mxu0 0.0
      %3148 = vmatpush1.msra.mxu0 0.0
      %3149 = vmatprep.subr.mxu0 0.0
      %3150 = vmatpush1.msra.mxu0 0.0
      %3151 = vmatprep.subr.mxu0 0.0
      %3152 = vmatpush1.msra.mxu0 0.0
      %3153 = vmatprep.mubr.f32.mxu0 0.0
      %3154 = vmatmul.mubr.f32.gmra.mrb[0].mxu0 %v3084
      %v3155 = vpop.f32.mrb[0].mxu0
      %v3156 = vadd.f32 0.0, %v3155
      %v3157 = vpop.f32.mrb[0].mxu0
      %3158 = vmatprep.mubr.f32.mxu0 0.0
      %3159 = vmatmul.mubr.f32.gmra.mrb[0].mxu0 %v3087
      %v3160 = vpop.f32.mrb[0].mxu0
      %v3161 = vadd.f32 0.0, %v3160
      %v3162 = vpop.f32.mrb[0].mxu0
      %3163 = vdwg.mxu0
      %3164 = vrot.lane.b32.xlu0 %v605, 112
      %v3165 = vpop.permute.xlu0 %3164
      %3166 = vrot.lane.b32.xlu0 %v610, 112
      %v3167 = vpop.permute.xlu0 %3166
      %v3171 = vsel %vm970, %v2900, 0
      %v3174 = vsel %vm970, %v2902, 0
      %3176 = vmatprep.subr.mxu0 0.0
      %3177 = vmatpush1.msra.mxu0 %v3165
      %3178 = vmatprep.subr.mxu0 0.0
      %3179 = vmatpush1.msra.mxu0 %v3167
      %3180 = vmatprep.subr.mxu0 0.0
      %3181 = vmatpush1.msra.mxu0 0.0
      %3182 = vmatprep.subr.mxu0 0.0
      %3183 = vmatpush1.msra.mxu0 0.0
      %3184 = vmatprep.subr.mxu0 0.0
      %3185 = vmatpush1.msra.mxu0 0.0
      %3186 = vmatprep.subr.mxu0 0.0
      %3187 = vmatpush1.msra.mxu0 0.0
      %3188 = vmatprep.subr.mxu0 0.0
      %3189 = vmatpush1.msra.mxu0 0.0
      %3190 = vmatprep.subr.mxu0 0.0
      %3191 = vmatpush1.msra.mxu0 0.0
      %3192 = vmatprep.subr.mxu0 0.0
      %3193 = vmatpush1.msra.mxu0 0.0
      %3194 = vmatprep.subr.mxu0 0.0
      %3195 = vmatpush1.msra.mxu0 0.0
      %3196 = vmatprep.subr.mxu0 0.0
      %3197 = vmatpush1.msra.mxu0 0.0
      %3198 = vmatprep.subr.mxu0 0.0
      %3199 = vmatpush1.msra.mxu0 0.0
      %3200 = vmatprep.subr.mxu0 0.0
      %3201 = vmatpush1.msra.mxu0 0.0
      %3202 = vmatprep.subr.mxu0 0.0
      %3203 = vmatpush1.msra.mxu0 0.0
      %3204 = vmatprep.subr.mxu0 0.0
      %3205 = vmatpush1.msra.mxu0 0.0
      %3206 = vmatprep.subr.mxu0 0.0
      %3207 = vmatpush1.msra.mxu0 0.0
      %3208 = vmatprep.subr.mxu0 0.0
      %3209 = vmatpush1.msra.mxu0 0.0
      %3210 = vmatprep.subr.mxu0 0.0
      %3211 = vmatpush1.msra.mxu0 0.0
      %3212 = vmatprep.subr.mxu0 0.0
      %3213 = vmatpush1.msra.mxu0 0.0
      %3214 = vmatprep.subr.mxu0 0.0
      %3215 = vmatpush1.msra.mxu0 0.0
      %3216 = vmatprep.subr.mxu0 0.0
      %3217 = vmatpush1.msra.mxu0 0.0
      %3218 = vmatprep.subr.mxu0 0.0
      %3219 = vmatpush1.msra.mxu0 0.0
      %3220 = vmatprep.subr.mxu0 0.0
      %3221 = vmatpush1.msra.mxu0 0.0
      %3222 = vmatprep.subr.mxu0 0.0
      %3223 = vmatpush1.msra.mxu0 0.0
      %3224 = vmatprep.subr.mxu0 0.0
      %3225 = vmatpush1.msra.mxu0 0.0
      %3226 = vmatprep.subr.mxu0 0.0
      %3227 = vmatpush1.msra.mxu0 0.0
      %3228 = vmatprep.subr.mxu0 0.0
      %3229 = vmatpush1.msra.mxu0 0.0
      %3230 = vmatprep.subr.mxu0 0.0
      %3231 = vmatpush1.msra.mxu0 0.0
      %3232 = vmatprep.subr.mxu0 0.0
      %3233 = vmatpush1.msra.mxu0 0.0
      %3234 = vmatprep.subr.mxu0 0.0
      %3235 = vmatpush1.msra.mxu0 0.0
      %3236 = vmatprep.subr.mxu0 0.0
      %3237 = vmatpush1.msra.mxu0 0.0
      %3238 = vmatprep.subr.mxu0 0.0
      %3239 = vmatpush1.msra.mxu0 0.0
      %3240 = vmatprep.mubr.f32.mxu0 0.0
      %3241 = vmatmul.mubr.f32.gmra.mrb[0].mxu0 %v3171
      %v3242 = vpop.f32.mrb[0].mxu0
      %v3243 = vadd.f32 0.0, %v3242
      %v3244 = vpop.f32.mrb[0].mxu0
      %3245 = vmatprep.mubr.f32.mxu0 0.0
      %3246 = vmatmul.mubr.f32.gmra.mrb[0].mxu0 %v3174
      %v3247 = vpop.f32.mrb[0].mxu0
      %v3248 = vadd.f32 0.0, %v3247
      %v3249 = vpop.f32.mrb[0].mxu0
      %3250 = vdwg.mxu0
      %v3251 = vld [vmem:[%s3 + $0x10] sm:$0xff]
      %v3253 = vsel %vm621, %v2982, 0
      %v3256 = vsel %vm621, %v2987, 0
      %v3259 = vsel %vm621, %v3069, 0
      %v3262 = vsel %vm621, %v3074, 0
      %v3265 = vsel %vm621, %v3156, 0
      %v3268 = vsel %vm621, %v3161, 0
      %v3271 = vsel %vm621, %v3243, 0
      %v3274 = vsel %vm621, %v3248, 0
      %3276 = vmatprep.subr.mxu0 0.0
      %3277 = vmatpush1.msra.mxu0 %v3251
      %3278 = vmatprep.subr.mxu0 0.0
      %3279 = vmatpush1.msra.mxu0 0.0
      %3280 = vmatprep.subr.mxu0 0.0
      %3281 = vmatpush1.msra.mxu0 0.0
      %3282 = vmatprep.subr.mxu0 0.0
      %3283 = vmatpush1.msra.mxu0 0.0
      %3284 = vmatprep.subr.mxu0 0.0
      %3285 = vmatpush1.msra.mxu0 0.0
      %3286 = vmatprep.subr.mxu0 0.0
      %3287 = vmatpush1.msra.mxu0 0.0
      %3288 = vmatprep.subr.mxu0 0.0
      %3289 = vmatpush1.msra.mxu0 0.0
      %3290 = vmatprep.subr.mxu0 0.0
      %3291 = vmatpush1.msra.mxu0 0.0
      %3292 = vmatprep.subr.mxu0 0.0
      %3293 = vmatpush1.msra.mxu0 0.0
      %3294 = vmatprep.subr.mxu0 0.0
      %3295 = vmatpush1.msra.mxu0 0.0
      %3296 = vmatprep.subr.mxu0 0.0
      %3297 = vmatpush1.msra.mxu0 0.0
      %3298 = vmatprep.subr.mxu0 0.0
      %3299 = vmatpush1.msra.mxu0 0.0
      %3300 = vmatprep.subr.mxu0 0.0
      %3301 = vmatpush1.msra.mxu0 0.0
      %3302 = vmatprep.subr.mxu0 0.0
      %3303 = vmatpush1.msra.mxu0 0.0
      %3304 = vmatprep.subr.mxu0 0.0
      %3305 = vmatpush1.msra.mxu0 0.0
      %3306 = vmatprep.subr.mxu0 0.0
      %3307 = vmatpush1.msra.mxu0 0.0
      %3308 = vmatprep.subr.mxu0 0.0
      %3309 = vmatpush1.msra.mxu0 0.0
      %3310 = vmatprep.subr.mxu0 0.0
      %3311 = vmatpush1.msra.mxu0 0.0
      %3312 = vmatprep.subr.mxu0 0.0
      %3313 = vmatpush1.msra.mxu0 0.0
      %3314 = vmatprep.subr.mxu0 0.0
      %3315 = vmatpush1.msra.mxu0 0.0
      %3316 = vmatprep.subr.mxu0 0.0
      %3317 = vmatpush1.msra.mxu0 0.0
      %3318 = vmatprep.subr.mxu0 0.0
      %3319 = vmatpush1.msra.mxu0 0.0
      %3320 = vmatprep.subr.mxu0 0.0
      %3321 = vmatpush1.msra.mxu0 0.0
      %3322 = vmatprep.subr.mxu0 0.0
      %3323 = vmatpush1.msra.mxu0 0.0
      %3324 = vmatprep.subr.mxu0 0.0
      %3325 = vmatpush1.msra.mxu0 0.0
      %3326 = vmatprep.subr.mxu0 0.0
      %3327 = vmatpush1.msra.mxu0 0.0
      %3328 = vmatprep.subr.mxu0 0.0
      %3329 = vmatpush1.msra.mxu0 0.0
      %3330 = vmatprep.subr.mxu0 0.0
      %3331 = vmatpush1.msra.mxu0 0.0
      %3332 = vmatprep.subr.mxu0 0.0
      %3333 = vmatpush1.msra.mxu0 0.0
      %3334 = vmatprep.subr.mxu0 0.0
      %3335 = vmatpush1.msra.mxu0 0.0
      %3336 = vmatprep.subr.mxu0 0.0
      %3337 = vmatpush1.msra.mxu0 0.0
      %3338 = vmatprep.subr.mxu0 0.0
      %3339 = vmatpush1.msra.mxu0 0.0
      %3340 = vmatprep.mubr.f32.mxu0 0.0
      %3341 = vmatmul.mubr.f32.gmra.mrb[0].mxu0 %v3253
      %v3342 = vpop.f32.mrb[0].mxu0
      %v3343 = vadd.f32 0.0, %v3342
      %v3344 = vpop.f32.mrb[0].mxu0
      %3345 = vmatprep.mubr.f32.mxu0 0.0
      %3346 = vmatmul.mubr.f32.gmra.mrb[0].mxu0 %v3256
      %v3347 = vpop.f32.mrb[0].mxu0
      %v3348 = vadd.f32 0.0, %v3347
      %v3349 = vpop.f32.mrb[0].mxu0
      %3350 = vmatprep.mubr.f32.mxu0 0.0
      %3351 = vmatmul.mubr.f32.gmra.mrb[0].mxu0 %v3259
      %v3352 = vpop.f32.mrb[0].mxu0
      %v3353 = vadd.f32 0.0, %v3352
      %v3354 = vpop.f32.mrb[0].mxu0
      %3355 = vmatprep.mubr.f32.mxu0 0.0
      %3356 = vmatmul.mubr.f32.gmra.mrb[0].mxu0 %v3262
      %v3357 = vpop.f32.mrb[0].mxu0
      %v3358 = vadd.f32 0.0, %v3357
      %v3359 = vpop.f32.mrb[0].mxu0
      %3360 = vmatprep.mubr.f32.mxu0 0.0
      %3361 = vmatmul.mubr.f32.gmra.mrb[0].mxu0 %v3265
      %v3362 = vpop.f32.mrb[0].mxu0
      %v3363 = vadd.f32 0.0, %v3362
      %v3364 = vpop.f32.mrb[0].mxu0
      %3365 = vmatprep.mubr.f32.mxu0 0.0
      %3366 = vmatmul.mubr.f32.gmra.mrb[0].mxu0 %v3268
      %v3367 = vpop.f32.mrb[0].mxu0
      %v3368 = vadd.f32 0.0, %v3367
      %v3369 = vpop.f32.mrb[0].mxu0
      %3370 = vmatprep.mubr.f32.mxu0 0.0
      %3371 = vmatmul.mubr.f32.gmra.mrb[0].mxu0 %v3271
      %v3372 = vpop.f32.mrb[0].mxu0
      %v3373 = vadd.f32 0.0, %v3372
      %v3374 = vpop.f32.mrb[0].mxu0
      %3375 = vmatprep.mubr.f32.mxu0 0.0
      %3376 = vmatmul.mubr.f32.gmra.mrb[0].mxu0 %v3274
      %v3377 = vpop.f32.mrb[0].mxu0
      %v3378 = vadd.f32 0.0, %v3377
      %v3379 = vpop.f32.mrb[0].mxu0
      %3380 = vdwg.mxu0
      %v3381 = vadd.f32 %v2413, %v3343
      %v3382 = vadd.f32 %v2418, %v3348
      %v3383 = vadd.f32 %v2423, %v3353
      %v3384 = vadd.f32 %v2428, %v3358
      %v3385 = vadd.f32 %v2433, %v3363
      %v3386 = vadd.f32 %v2438, %v3368
      %v3387 = vadd.f32 %v2443, %v3373
      %v3388 = vadd.f32 %v2448, %v3378
      %3389 = vrot.lane.b32.xlu0 %v613, 104
      %v3390 = vpop.permute.xlu0 %3389
      %3391 = vrot.lane.b32.xlu0 %v614, 104
      %v3392 = vpop.permute.xlu0 %3391
      %3393 = vrot.lane.b32.xlu0 %v457, 104
      %v3394 = vpop.permute.xlu0 %3393
      %3395 = vrot.lane.b32.xlu0 %v462, 104
      %v3396 = vpop.permute.xlu0 %3395
      %v3397 = vsel %vm621, %v3390, 0
      %v3399 = vsel %vm621, %v3392, 0
      %v3401 = vsel %vm621, %v3394, 0
      %v3403 = vsel %vm621, %v3396, 0
      %3405 = vmatprep.subr.mxu0 0.0
      %3406 = vmatpush1.xpose.msra.mxu0 %v3401
      %3407 = vmatprep.subr.mxu0 0.0
      %3408 = vmatpush1.xpose.msra.mxu0 %v3403
      %3409 = vmatprep.subr.mxu0 0.0
      %3410 = vmatpush1.xpose.msra.mxu0 0.0
      %3411 = vmatprep.subr.mxu0 0.0
      %3412 = vmatpush1.xpose.msra.mxu0 0.0
      %3413 = vmatprep.subr.mxu0 0.0
      %3414 = vmatpush1.xpose.msra.mxu0 0.0
      %3415 = vmatprep.subr.mxu0 0.0
      %3416 = vmatpush1.xpose.msra.mxu0 0.0
      %3417 = vmatprep.subr.mxu0 0.0
      %3418 = vmatpush1.xpose.msra.mxu0 0.0
      %3419 = vmatprep.subr.mxu0 0.0
      %3420 = vmatpush1.xpose.msra.mxu0 0.0
      %3421 = vmatprep.subr.mxu0 0.0
      %3422 = vmatpush1.xpose.msra.mxu0 0.0
      %3423 = vmatprep.subr.mxu0 0.0
      %3424 = vmatpush1.xpose.msra.mxu0 0.0
      %3425 = vmatprep.subr.mxu0 0.0
      %3426 = vmatpush1.xpose.msra.mxu0 0.0
      %3427 = vmatprep.subr.mxu0 0.0
      %3428 = vmatpush1.xpose.msra.mxu0 0.0
      %3429 = vmatprep.subr.mxu0 0.0
      %3430 = vmatpush1.xpose.msra.mxu0 0.0
      %3431 = vmatprep.subr.mxu0 0.0
      %3432 = vmatpush1.xpose.msra.mxu0 0.0
      %3433 = vmatprep.subr.mxu0 0.0
      %3434 = vmatpush1.xpose.msra.mxu0 0.0
      %3435 = vmatprep.subr.mxu0 0.0
      %3436 = vmatpush1.xpose.msra.mxu0 0.0
      %3437 = vmatprep.subr.mxu0 0.0
      %3438 = vmatpush1.xpose.msra.mxu0 0.0
      %3439 = vmatprep.subr.mxu0 0.0
      %3440 = vmatpush1.xpose.msra.mxu0 0.0
      %3441 = vmatprep.subr.mxu0 0.0
      %3442 = vmatpush1.xpose.msra.mxu0 0.0
      %3443 = vmatprep.subr.mxu0 0.0
      %3444 = vmatpush1.xpose.msra.mxu0 0.0
      %3445 = vmatprep.subr.mxu0 0.0
      %3446 = vmatpush1.xpose.msra.mxu0 0.0
      %3447 = vmatprep.subr.mxu0 0.0
      %3448 = vmatpush1.xpose.msra.mxu0 0.0
      %3449 = vmatprep.subr.mxu0 0.0
      %3450 = vmatpush1.xpose.msra.mxu0 0.0
      %3451 = vmatprep.subr.mxu0 0.0
      %3452 = vmatpush1.xpose.msra.mxu0 0.0
      %3453 = vmatprep.subr.mxu0 0.0
      %3454 = vmatpush1.xpose.msra.mxu0 0.0
      %3455 = vmatprep.subr.mxu0 0.0
      %3456 = vmatpush1.xpose.msra.mxu0 0.0
      %3457 = vmatprep.subr.mxu0 0.0
      %3458 = vmatpush1.xpose.msra.mxu0 0.0
      %3459 = vmatprep.subr.mxu0 0.0
      %3460 = vmatpush1.xpose.msra.mxu0 0.0
      %3461 = vmatprep.subr.mxu0 0.0
      %3462 = vmatpush1.xpose.msra.mxu0 0.0
      %3463 = vmatprep.subr.mxu0 0.0
      %3464 = vmatpush1.xpose.msra.mxu0 0.0
      %3465 = vmatprep.subr.mxu0 0.0
      %3466 = vmatpush1.xpose.msra.mxu0 0.0
      %3467 = vmatprep.subr.mxu0 0.0
      %3468 = vmatpush1.xpose.msra.mxu0 0.0
      %3469 = vmatprep.mubr.f32.mxu0 0.0
      %3470 = vmatmul.mubr.f32.gmra.mrb[0].mxu0 %v3397
      %v3471 = vpop.f32.mrb[0].mxu0
      %v3472 = vadd.f32 0.0, %v3471
      %v3473 = vpop.f32.mrb[0].mxu0
      %3474 = vmatprep.mubr.f32.mxu0 0.0
      %3475 = vmatmul.mubr.f32.gmra.mrb[0].mxu0 %v3399
      %v3476 = vpop.f32.mrb[0].mxu0
      %v3477 = vadd.f32 0.0, %v3476
      %v3478 = vpop.f32.mrb[0].mxu0
      %3479 = vdwg.mxu0
      %3480 = vrot.lane.b32.xlu0 %v615, 104
      %v3481 = vpop.permute.xlu0 %3480
      %3482 = vrot.lane.b32.xlu0 %v616, 104
      %v3483 = vpop.permute.xlu0 %3482
      %3484 = vrot.lane.b32.xlu0 %v467, 104
      %v3485 = vpop.permute.xlu0 %3484
      %3486 = vrot.lane.b32.xlu0 %v472, 104
      %v3487 = vpop.permute.xlu0 %3486
      %v3488 = vsel %vm621, %v3481, 0
      %v3490 = vsel %vm621, %v3483, 0
      %v3492 = vsel %vm621, %v3485, 0
      %v3494 = vsel %vm621, %v3487, 0
      %3496 = vmatprep.subr.mxu0 0.0
      %3497 = vmatpush1.xpose.msra.mxu0 %v3492
      %3498 = vmatprep.subr.mxu0 0.0
      %3499 = vmatpush1.xpose.msra.mxu0 %v3494
      %3500 = vmatprep.subr.mxu0 0.0
      %3501 = vmatpush1.xpose.msra.mxu0 0.0
      %3502 = vmatprep.subr.mxu0 0.0
      %3503 = vmatpush1.xpose.msra.mxu0 0.0
      %3504 = vmatprep.subr.mxu0 0.0
      %3505 = vmatpush1.xpose.msra.mxu0 0.0
      %3506 = vmatprep.subr.mxu0 0.0
      %3507 = vmatpush1.xpose.msra.mxu0 0.0
      %3508 = vmatprep.subr.mxu0 0.0
      %3509 = vmatpush1.xpose.msra.mxu0 0.0
      %3510 = vmatprep.subr.mxu0 0.0
      %3511 = vmatpush1.xpose.msra.mxu0 0.0
      %3512 = vmatprep.subr.mxu0 0.0
      %3513 = vmatpush1.xpose.msra.mxu0 0.0
      %3514 = vmatprep.subr.mxu0 0.0
      %3515 = vmatpush1.xpose.msra.mxu0 0.0
      %3516 = vmatprep.subr.mxu0 0.0
      %3517 = vmatpush1.xpose.msra.mxu0 0.0
      %3518 = vmatprep.subr.mxu0 0.0
      %3519 = vmatpush1.xpose.msra.mxu0 0.0
      %3520 = vmatprep.subr.mxu0 0.0
      %3521 = vmatpush1.xpose.msra.mxu0 0.0
      %3522 = vmatprep.subr.mxu0 0.0
      %3523 = vmatpush1.xpose.msra.mxu0 0.0
      %3524 = vmatprep.subr.mxu0 0.0
      %3525 = vmatpush1.xpose.msra.mxu0 0.0
      %3526 = vmatprep.subr.mxu0 0.0
      %3527 = vmatpush1.xpose.msra.mxu0 0.0
      %3528 = vmatprep.subr.mxu0 0.0
      %3529 = vmatpush1.xpose.msra.mxu0 0.0
      %3530 = vmatprep.subr.mxu0 0.0
      %3531 = vmatpush1.xpose.msra.mxu0 0.0
      %3532 = vmatprep.subr.mxu0 0.0
      %3533 = vmatpush1.xpose.msra.mxu0 0.0
      %3534 = vmatprep.subr.mxu0 0.0
      %3535 = vmatpush1.xpose.msra.mxu0 0.0
      %3536 = vmatprep.subr.mxu0 0.0
      %3537 = vmatpush1.xpose.msra.mxu0 0.0
      %3538 = vmatprep.subr.mxu0 0.0
      %3539 = vmatpush1.xpose.msra.mxu0 0.0
      %3540 = vmatprep.subr.mxu0 0.0
      %3541 = vmatpush1.xpose.msra.mxu0 0.0
      %3542 = vmatprep.subr.mxu0 0.0
      %3543 = vmatpush1.xpose.msra.mxu0 0.0
      %3544 = vmatprep.subr.mxu0 0.0
      %3545 = vmatpush1.xpose.msra.mxu0 0.0
      %3546 = vmatprep.subr.mxu0 0.0
      %3547 = vmatpush1.xpose.msra.mxu0 0.0
      %3548 = vmatprep.subr.mxu0 0.0
      %3549 = vmatpush1.xpose.msra.mxu0 0.0
      %3550 = vmatprep.subr.mxu0 0.0
      %3551 = vmatpush1.xpose.msra.mxu0 0.0
      %3552 = vmatprep.subr.mxu0 0.0
      %3553 = vmatpush1.xpose.msra.mxu0 0.0
      %3554 = vmatprep.subr.mxu0 0.0
      %3555 = vmatpush1.xpose.msra.mxu0 0.0
      %3556 = vmatprep.subr.mxu0 0.0
      %3557 = vmatpush1.xpose.msra.mxu0 0.0
      %3558 = vmatprep.subr.mxu0 0.0
      %3559 = vmatpush1.xpose.msra.mxu0 0.0
      %3560 = vmatprep.mubr.f32.mxu0 0.0
      %3561 = vmatmul.mubr.f32.gmra.mrb[0].mxu0 %v3488
      %v3562 = vpop.f32.mrb[0].mxu0
      %v3563 = vadd.f32 0.0, %v3562
      %v3564 = vpop.f32.mrb[0].mxu0
      %3565 = vmatprep.mubr.f32.mxu0 0.0
      %3566 = vmatmul.mubr.f32.gmra.mrb[0].mxu0 %v3490
      %v3567 = vpop.f32.mrb[0].mxu0
      %v3568 = vadd.f32 0.0, %v3567
      %v3569 = vpop.f32.mrb[0].mxu0
      %3570 = vdwg.mxu0
      %3571 = vrot.lane.b32.xlu0 %v617, 104
      %v3572 = vpop.permute.xlu0 %3571
      %3573 = vrot.lane.b32.xlu0 %v618, 104
      %v3574 = vpop.permute.xlu0 %3573
      %3575 = vrot.lane.b32.xlu0 %v477, 104
      %v3576 = vpop.permute.xlu0 %3575
      %3577 = vrot.lane.b32.xlu0 %v482, 104
      %v3578 = vpop.permute.xlu0 %3577
      %v3579 = vsel %vm621, %v3572, 0
      %v3581 = vsel %vm621, %v3574, 0
      %v3583 = vsel %vm621, %v3576, 0
      %v3585 = vsel %vm621, %v3578, 0
      %3587 = vmatprep.subr.mxu0 0.0
      %3588 = vmatpush1.xpose.msra.mxu0 %v3583
      %3589 = vmatprep.subr.mxu0 0.0
      %3590 = vmatpush1.xpose.msra.mxu0 %v3585
      %3591 = vmatprep.subr.mxu0 0.0
      %3592 = vmatpush1.xpose.msra.mxu0 0.0
      %3593 = vmatprep.subr.mxu0 0.0
      %3594 = vmatpush1.xpose.msra.mxu0 0.0
      %3595 = vmatprep.subr.mxu0 0.0
      %3596 = vmatpush1.xpose.msra.mxu0 0.0
      %3597 = vmatprep.subr.mxu0 0.0
      %3598 = vmatpush1.xpose.msra.mxu0 0.0
      %3599 = vmatprep.subr.mxu0 0.0
      %3600 = vmatpush1.xpose.msra.mxu0 0.0
      %3601 = vmatprep.subr.mxu0 0.0
      %3602 = vmatpush1.xpose.msra.mxu0 0.0
      %3603 = vmatprep.subr.mxu0 0.0
      %3604 = vmatpush1.xpose.msra.mxu0 0.0
      %3605 = vmatprep.subr.mxu0 0.0
      %3606 = vmatpush1.xpose.msra.mxu0 0.0
      %3607 = vmatprep.subr.mxu0 0.0
      %3608 = vmatpush1.xpose.msra.mxu0 0.0
      %3609 = vmatprep.subr.mxu0 0.0
      %3610 = vmatpush1.xpose.msra.mxu0 0.0
      %3611 = vmatprep.subr.mxu0 0.0
      %3612 = vmatpush1.xpose.msra.mxu0 0.0
      %3613 = vmatprep.subr.mxu0 0.0
      %3614 = vmatpush1.xpose.msra.mxu0 0.0
      %3615 = vmatprep.subr.mxu0 0.0
      %3616 = vmatpush1.xpose.msra.mxu0 0.0
      %3617 = vmatprep.subr.mxu0 0.0
      %3618 = vmatpush1.xpose.msra.mxu0 0.0
      %3619 = vmatprep.subr.mxu0 0.0
      %3620 = vmatpush1.xpose.msra.mxu0 0.0
      %3621 = vmatprep.subr.mxu0 0.0
      %3622 = vmatpush1.xpose.msra.mxu0 0.0
      %3623 = vmatprep.subr.mxu0 0.0
      %3624 = vmatpush1.xpose.msra.mxu0 0.0
      %3625 = vmatprep.subr.mxu0 0.0
      %3626 = vmatpush1.xpose.msra.mxu0 0.0
      %3627 = vmatprep.subr.mxu0 0.0
      %3628 = vmatpush1.xpose.msra.mxu0 0.0
      %3629 = vmatprep.subr.mxu0 0.0
      %3630 = vmatpush1.xpose.msra.mxu0 0.0
      %3631 = vmatprep.subr.mxu0 0.0
      %3632 = vmatpush1.xpose.msra.mxu0 0.0
      %3633 = vmatprep.subr.mxu0 0.0
      %3634 = vmatpush1.xpose.msra.mxu0 0.0
      %3635 = vmatprep.subr.mxu0 0.0
      %3636 = vmatpush1.xpose.msra.mxu0 0.0
      %3637 = vmatprep.subr.mxu0 0.0
      %3638 = vmatpush1.xpose.msra.mxu0 0.0
      %3639 = vmatprep.subr.mxu0 0.0
      %3640 = vmatpush1.xpose.msra.mxu0 0.0
      %3641 = vmatprep.subr.mxu0 0.0
      %3642 = vmatpush1.xpose.msra.mxu0 0.0
      %3643 = vmatprep.subr.mxu0 0.0
      %3644 = vmatpush1.xpose.msra.mxu0 0.0
      %3645 = vmatprep.subr.mxu0 0.0
      %3646 = vmatpush1.xpose.msra.mxu0 0.0
      %3647 = vmatprep.subr.mxu0 0.0
      %3648 = vmatpush1.xpose.msra.mxu0 0.0
      %3649 = vmatprep.subr.mxu0 0.0
      %3650 = vmatpush1.xpose.msra.mxu0 0.0
      %3651 = vmatprep.mubr.f32.mxu0 0.0
      %3652 = vmatmul.mubr.f32.gmra.mrb[0].mxu0 %v3579
      %v3653 = vpop.f32.mrb[0].mxu0
      %v3654 = vadd.f32 0.0, %v3653
      %v3655 = vpop.f32.mrb[0].mxu0
      %3656 = vmatprep.mubr.f32.mxu0 0.0
      %3657 = vmatmul.mubr.f32.gmra.mrb[0].mxu0 %v3581
      %v3658 = vpop.f32.mrb[0].mxu0
      %v3659 = vadd.f32 0.0, %v3658
      %v3660 = vpop.f32.mrb[0].mxu0
      %3661 = vdwg.mxu0
      %3662 = vrot.lane.b32.xlu0 %v619, 104
      %v3663 = vpop.permute.xlu0 %3662
      %3664 = vrot.lane.b32.xlu0 %v620, 104
      %v3665 = vpop.permute.xlu0 %3664
      %3666 = vrot.lane.b32.xlu0 %v487, 104
      %v3667 = vpop.permute.xlu0 %3666
      %3668 = vrot.lane.b32.xlu0 %v492, 104
      %v3669 = vpop.permute.xlu0 %3668
      %v3670 = vsel %vm621, %v3663, 0
      %v3672 = vsel %vm621, %v3665, 0
      %v3674 = vsel %vm621, %v3667, 0
      %v3676 = vsel %vm621, %v3669, 0
      %3678 = vmatprep.subr.mxu0 0.0
      %3679 = vmatpush1.xpose.msra.mxu0 %v3674
      %3680 = vmatprep.subr.mxu0 0.0
      %3681 = vmatpush1.xpose.msra.mxu0 %v3676
      %3682 = vmatprep.subr.mxu0 0.0
      %3683 = vmatpush1.xpose.msra.mxu0 0.0
      %3684 = vmatprep.subr.mxu0 0.0
      %3685 = vmatpush1.xpose.msra.mxu0 0.0
      %3686 = vmatprep.subr.mxu0 0.0
      %3687 = vmatpush1.xpose.msra.mxu0 0.0
      %3688 = vmatprep.subr.mxu0 0.0
      %3689 = vmatpush1.xpose.msra.mxu0 0.0
      %3690 = vmatprep.subr.mxu0 0.0
      %3691 = vmatpush1.xpose.msra.mxu0 0.0
      %3692 = vmatprep.subr.mxu0 0.0
      %3693 = vmatpush1.xpose.msra.mxu0 0.0
      %3694 = vmatprep.subr.mxu0 0.0
      %3695 = vmatpush1.xpose.msra.mxu0 0.0
      %3696 = vmatprep.subr.mxu0 0.0
      %3697 = vmatpush1.xpose.msra.mxu0 0.0
      %3698 = vmatprep.subr.mxu0 0.0
      %3699 = vmatpush1.xpose.msra.mxu0 0.0
      %3700 = vmatprep.subr.mxu0 0.0
      %3701 = vmatpush1.xpose.msra.mxu0 0.0
      %3702 = vmatprep.subr.mxu0 0.0
      %3703 = vmatpush1.xpose.msra.mxu0 0.0
      %3704 = vmatprep.subr.mxu0 0.0
      %3705 = vmatpush1.xpose.msra.mxu0 0.0
      %3706 = vmatprep.subr.mxu0 0.0
      %3707 = vmatpush1.xpose.msra.mxu0 0.0
      %3708 = vmatprep.subr.mxu0 0.0
      %3709 = vmatpush1.xpose.msra.mxu0 0.0
      %3710 = vmatprep.subr.mxu0 0.0
      %3711 = vmatpush1.xpose.msra.mxu0 0.0
      %3712 = vmatprep.subr.mxu0 0.0
      %3713 = vmatpush1.xpose.msra.mxu0 0.0
      %3714 = vmatprep.subr.mxu0 0.0
      %3715 = vmatpush1.xpose.msra.mxu0 0.0
      %3716 = vmatprep.subr.mxu0 0.0
      %3717 = vmatpush1.xpose.msra.mxu0 0.0
      %3718 = vmatprep.subr.mxu0 0.0
      %3719 = vmatpush1.xpose.msra.mxu0 0.0
      %3720 = vmatprep.subr.mxu0 0.0
      %3721 = vmatpush1.xpose.msra.mxu0 0.0
      %3722 = vmatprep.subr.mxu0 0.0
      %3723 = vmatpush1.xpose.msra.mxu0 0.0
      %3724 = vmatprep.subr.mxu0 0.0
      %3725 = vmatpush1.xpose.msra.mxu0 0.0
      %3726 = vmatprep.subr.mxu0 0.0
      %3727 = vmatpush1.xpose.msra.mxu0 0.0
      %3728 = vmatprep.subr.mxu0 0.0
      %3729 = vmatpush1.xpose.msra.mxu0 0.0
      %3730 = vmatprep.subr.mxu0 0.0
      %3731 = vmatpush1.xpose.msra.mxu0 0.0
      %3732 = vmatprep.subr.mxu0 0.0
      %3733 = vmatpush1.xpose.msra.mxu0 0.0
      %3734 = vmatprep.subr.mxu0 0.0
      %3735 = vmatpush1.xpose.msra.mxu0 0.0
      %3736 = vmatprep.subr.mxu0 0.0
      %3737 = vmatpush1.xpose.msra.mxu0 0.0
      %3738 = vmatprep.subr.mxu0 0.0
      %3739 = vmatpush1.xpose.msra.mxu0 0.0
      %3740 = vmatprep.subr.mxu0 0.0
      %3741 = vmatpush1.xpose.msra.mxu0 0.0
      %3742 = vmatprep.mubr.f32.mxu0 0.0
      %3743 = vmatmul.mubr.f32.gmra.mrb[0].mxu0 %v3670
      %v3744 = vpop.f32.mrb[0].mxu0
      %v3745 = vadd.f32 0.0, %v3744
      %v3746 = vpop.f32.mrb[0].mxu0
      %3747 = vmatprep.mubr.f32.mxu0 0.0
      %3748 = vmatmul.mubr.f32.gmra.mrb[0].mxu0 %v3672
      %v3749 = vpop.f32.mrb[0].mxu0
      %v3750 = vadd.f32 0.0, %v3749
      %v3751 = vpop.f32.mrb[0].mxu0
      %3752 = vdwg.mxu0
      %v3753 = vsel %vm970, %v3472, -inf
      %3754 = vmax.xlane.f32.xlu0 %v3753
      %v3755 = vpop.xlane.xlu0 %3754
      %v3756 = vsel %vm970, %v3477, -inf
      %3757 = vmax.xlane.f32.xlu0 %v3756
      %v3758 = vpop.xlane.xlu0 %3757
      %v3759 = vsel %vm970, %v3563, -inf
      %3760 = vmax.xlane.f32.xlu0 %v3759
      %v3761 = vpop.xlane.xlu0 %3760
      %v3762 = vsel %vm970, %v3568, -inf
      %3763 = vmax.xlane.f32.xlu0 %v3762
      %v3764 = vpop.xlane.xlu0 %3763
      %v3765 = vsel %vm970, %v3654, -inf
      %3766 = vmax.xlane.f32.xlu0 %v3765
      %v3767 = vpop.xlane.xlu0 %3766
      %v3768 = vsel %vm970, %v3659, -inf
      %3769 = vmax.xlane.f32.xlu0 %v3768
      %v3770 = vpop.xlane.xlu0 %3769
      %v3771 = vsel %vm970, %v3745, -inf
      %3772 = vmax.xlane.f32.xlu0 %v3771
      %v3773 = vpop.xlane.xlu0 %3772
      %v3774 = vsel %vm970, %v3750, -inf
      %3775 = vmax.xlane.f32.xlu0 %v3774
      %v3776 = vpop.xlane.xlu0 %3775
      %v3777 = vsub.f32 %v3472, %v3755
      %v3778 = vsub.f32 %v3477, %v3758
      %v3779 = vsub.f32 %v3563, %v3761
      %v3780 = vsub.f32 %v3568, %v3764
      %v3781 = vsub.f32 %v3654, %v3767
      %v3782 = vsub.f32 %v3659, %v3770
      %v3783 = vsub.f32 %v3745, %v3773
      %v3784 = vsub.f32 %v3750, %v3776
      %v3785 = vmul.f32 %v3777, 1.442695
      %v3786 = vpow.pop %v3785
      %v3787 = vmul.f32 %v3778, 1.442695
      %v3788 = vpow.pop %v3787
      %v3789 = vmul.f32 %v3779, 1.442695
      %v3790 = vpow.pop %v3789
      %v3791 = vmul.f32 %v3780, 1.442695
      %v3792 = vpow.pop %v3791
      %v3793 = vmul.f32 %v3781, 1.442695
      %v3794 = vpow.pop %v3793
      %v3795 = vmul.f32 %v3782, 1.442695
      %v3796 = vpow.pop %v3795
      %v3797 = vmul.f32 %v3783, 1.442695
      %v3798 = vpow.pop %v3797
      %v3799 = vmul.f32 %v3784, 1.442695
      %v3800 = vpow.pop %v3799
      %v3801 = vsel %vm970, %v3786, 0.0
      %3802 = vadd.xlane.f32.xlu0 %v3801
      %v3803 = vpop.xlane.xlu0 %3802
      %v3804 = vsel %vm970, %v3788, 0.0
      %3805 = vadd.xlane.f32.xlu0 %v3804
      %v3806 = vpop.xlane.xlu0 %3805
      %v3807 = vsel %vm970, %v3790, 0.0
      %3808 = vadd.xlane.f32.xlu0 %v3807
      %v3809 = vpop.xlane.xlu0 %3808
      %v3810 = vsel %vm970, %v3792, 0.0
      %3811 = vadd.xlane.f32.xlu0 %v3810
      %v3812 = vpop.xlane.xlu0 %3811
      %v3813 = vsel %vm970, %v3794, 0.0
      %3814 = vadd.xlane.f32.xlu0 %v3813
      %v3815 = vpop.xlane.xlu0 %3814
      %v3816 = vsel %vm970, %v3796, 0.0
      %3817 = vadd.xlane.f32.xlu0 %v3816
      %v3818 = vpop.xlane.xlu0 %3817
      %v3819 = vsel %vm970, %v3798, 0.0
      %3820 = vadd.xlane.f32.xlu0 %v3819
      %v3821 = vpop.xlane.xlu0 %3820
      %v3822 = vsel %vm970, %v3800, 0.0
      %3823 = vadd.xlane.f32.xlu0 %v3822
      %v3824 = vpop.xlane.xlu0 %3823
      %v3825 = vrcp.pop %v3803
      %v3826 = vmul.f32 %v3786, %v3825
      %v3827 = vrcp.pop %v3806
      %v3828 = vmul.f32 %v3788, %v3827
      %v3829 = vrcp.pop %v3809
      %v3830 = vmul.f32 %v3790, %v3829
      %v3831 = vrcp.pop %v3812
      %v3832 = vmul.f32 %v3792, %v3831
      %v3833 = vrcp.pop %v3815
      %v3834 = vmul.f32 %v3794, %v3833
      %v3835 = vrcp.pop %v3818
      %v3836 = vmul.f32 %v3796, %v3835
      %v3837 = vrcp.pop %v3821
      %v3838 = vmul.f32 %v3798, %v3837
      %v3839 = vrcp.pop %v3824
      %v3840 = vmul.f32 %v3800, %v3839
      %3841 = vrot.lane.b32.xlu0 %v575, 104
      %v3842 = vpop.permute.xlu0 %3841
      %3843 = vrot.lane.b32.xlu0 %v580, 104
      %v3844 = vpop.permute.xlu0 %3843
      %v3848 = vsel %vm970, %v3826, 0
      %v3851 = vsel %vm970, %v3828, 0
      %3853 = vmatprep.subr.mxu0 0.0
      %3854 = vmatpush1.msra.mxu0 %v3842
      %3855 = vmatprep.subr.mxu0 0.0
      %3856 = vmatpush1.msra.mxu0 %v3844
      %3857 = vmatprep.subr.mxu0 0.0
      %3858 = vmatpush1.msra.mxu0 0.0
      %3859 = vmatprep.subr.mxu0 0.0
      %3860 = vmatpush1.msra.mxu0 0.0
      %3861 = vmatprep.subr.mxu0 0.0
      %3862 = vmatpush1.msra.mxu0 0.0
      %3863 = vmatprep.subr.mxu0 0.0
      %3864 = vmatpush1.msra.mxu0 0.0
      %3865 = vmatprep.subr.mxu0 0.0
      %3866 = vmatpush1.msra.mxu0 0.0
      %3867 = vmatprep.subr.mxu0 0.0
      %3868 = vmatpush1.msra.mxu0 0.0
      %3869 = vmatprep.subr.mxu0 0.0
      %3870 = vmatpush1.msra.mxu0 0.0
      %3871 = vmatprep.subr.mxu0 0.0
      %3872 = vmatpush1.msra.mxu0 0.0
      %3873 = vmatprep.subr.mxu0 0.0
      %3874 = vmatpush1.msra.mxu0 0.0
      %3875 = vmatprep.subr.mxu0 0.0
      %3876 = vmatpush1.msra.mxu0 0.0
      %3877 = vmatprep.subr.mxu0 0.0
      %3878 = vmatpush1.msra.mxu0 0.0
      %3879 = vmatprep.subr.mxu0 0.0
      %3880 = vmatpush1.msra.mxu0 0.0
      %3881 = vmatprep.subr.mxu0 0.0
      %3882 = vmatpush1.msra.mxu0 0.0
      %3883 = vmatprep.subr.mxu0 0.0
      %3884 = vmatpush1.msra.mxu0 0.0
      %3885 = vmatprep.subr.mxu0 0.0
      %3886 = vmatpush1.msra.mxu0 0.0
      %3887 = vmatprep.subr.mxu0 0.0
      %3888 = vmatpush1.msra.mxu0 0.0
      %3889 = vmatprep.subr.mxu0 0.0
      %3890 = vmatpush1.msra.mxu0 0.0
      %3891 = vmatprep.subr.mxu0 0.0
      %3892 = vmatpush1.msra.mxu0 0.0
      %3893 = vmatprep.subr.mxu0 0.0
      %3894 = vmatpush1.msra.mxu0 0.0
      %3895 = vmatprep.subr.mxu0 0.0
      %3896 = vmatpush1.msra.mxu0 0.0
      %3897 = vmatprep.subr.mxu0 0.0
      %3898 = vmatpush1.msra.mxu0 0.0
      %3899 = vmatprep.subr.mxu0 0.0
      %3900 = vmatpush1.msra.mxu0 0.0
      %3901 = vmatprep.subr.mxu0 0.0
      %3902 = vmatpush1.msra.mxu0 0.0
      %3903 = vmatprep.subr.mxu0 0.0
      %3904 = vmatpush1.msra.mxu0 0.0
      %3905 = vmatprep.subr.mxu0 0.0
      %3906 = vmatpush1.msra.mxu0 0.0
      %3907 = vmatprep.subr.mxu0 0.0
      %3908 = vmatpush1.msra.mxu0 0.0
      %3909 = vmatprep.subr.mxu0 0.0
      %3910 = vmatpush1.msra.mxu0 0.0
      %3911 = vmatprep.subr.mxu0 0.0
      %3912 = vmatpush1.msra.mxu0 0.0
      %3913 = vmatprep.subr.mxu0 0.0
      %3914 = vmatpush1.msra.mxu0 0.0
      %3915 = vmatprep.subr.mxu0 0.0
      %3916 = vmatpush1.msra.mxu0 0.0
      %3917 = vmatprep.mubr.f32.mxu0 0.0
      %3918 = vmatmul.mubr.f32.gmra.mrb[0].mxu0 %v3848
      %v3919 = vpop.f32.mrb[0].mxu0
      %v3920 = vadd.f32 0.0, %v3919
      %v3921 = vpop.f32.mrb[0].mxu0
      %3922 = vmatprep.mubr.f32.mxu0 0.0
      %3923 = vmatmul.mubr.f32.gmra.mrb[0].mxu0 %v3851
      %v3924 = vpop.f32.mrb[0].mxu0
      %v3925 = vadd.f32 0.0, %v3924
      %v3926 = vpop.f32.mrb[0].mxu0
      %3927 = vdwg.mxu0
      %3928 = vrot.lane.b32.xlu0 %v585, 104
      %v3929 = vpop.permute.xlu0 %3928
      %3930 = vrot.lane.b32.xlu0 %v590, 104
      %v3931 = vpop.permute.xlu0 %3930
      %v3935 = vsel %vm970, %v3830, 0
      %v3938 = vsel %vm970, %v3832, 0
      %3940 = vmatprep.subr.mxu0 0.0
      %3941 = vmatpush1.msra.mxu0 %v3929
      %3942 = vmatprep.subr.mxu0 0.0
      %3943 = vmatpush1.msra.mxu0 %v3931
      %3944 = vmatprep.subr.mxu0 0.0
      %3945 = vmatpush1.msra.mxu0 0.0
      %3946 = vmatprep.subr.mxu0 0.0
      %3947 = vmatpush1.msra.mxu0 0.0
      %3948 = vmatprep.subr.mxu0 0.0
      %3949 = vmatpush1.msra.mxu0 0.0
      %3950 = vmatprep.subr.mxu0 0.0
      %3951 = vmatpush1.msra.mxu0 0.0
      %3952 = vmatprep.subr.mxu0 0.0
      %3953 = vmatpush1.msra.mxu0 0.0
      %3954 = vmatprep.subr.mxu0 0.0
      %3955 = vmatpush1.msra.mxu0 0.0
      %3956 = vmatprep.subr.mxu0 0.0
      %3957 = vmatpush1.msra.mxu0 0.0
      %3958 = vmatprep.subr.mxu0 0.0
      %3959 = vmatpush1.msra.mxu0 0.0
      %3960 = vmatprep.subr.mxu0 0.0
      %3961 = vmatpush1.msra.mxu0 0.0
      %3962 = vmatprep.subr.mxu0 0.0
      %3963 = vmatpush1.msra.mxu0 0.0
      %3964 = vmatprep.subr.mxu0 0.0
      %3965 = vmatpush1.msra.mxu0 0.0
      %3966 = vmatprep.subr.mxu0 0.0
      %3967 = vmatpush1.msra.mxu0 0.0
      %3968 = vmatprep.subr.mxu0 0.0
      %3969 = vmatpush1.msra.mxu0 0.0
      %3970 = vmatprep.subr.mxu0 0.0
      %3971 = vmatpush1.msra.mxu0 0.0
      %3972 = vmatprep.subr.mxu0 0.0
      %3973 = vmatpush1.msra.mxu0 0.0
      %3974 = vmatprep.subr.mxu0 0.0
      %3975 = vmatpush1.msra.mxu0 0.0
      %3976 = vmatprep.subr.mxu0 0.0
      %3977 = vmatpush1.msra.mxu0 0.0
      %3978 = vmatprep.subr.mxu0 0.0
      %3979 = vmatpush1.msra.mxu0 0.0
      %3980 = vmatprep.subr.mxu0 0.0
      %3981 = vmatpush1.msra.mxu0 0.0
      %3982 = vmatprep.subr.mxu0 0.0
      %3983 = vmatpush1.msra.mxu0 0.0
      %3984 = vmatprep.subr.mxu0 0.0
      %3985 = vmatpush1.msra.mxu0 0.0
      %3986 = vmatprep.subr.mxu0 0.0
      %3987 = vmatpush1.msra.mxu0 0.0
      %3988 = vmatprep.subr.mxu0 0.0
      %3989 = vmatpush1.msra.mxu0 0.0
      %3990 = vmatprep.subr.mxu0 0.0
      %3991 = vmatpush1.msra.mxu0 0.0
      %3992 = vmatprep.subr.mxu0 0.0
      %3993 = vmatpush1.msra.mxu0 0.0
      %3994 = vmatprep.subr.mxu0 0.0
      %3995 = vmatpush1.msra.mxu0 0.0
      %3996 = vmatprep.subr.mxu0 0.0
      %3997 = vmatpush1.msra.mxu0 0.0
      %3998 = vmatprep.subr.mxu0 0.0
      %3999 = vmatpush1.msra.mxu0 0.0
      %4000 = vmatprep.subr.mxu0 0.0
      %4001 = vmatpush1.msra.mxu0 0.0
      %4002 = vmatprep.subr.mxu0 0.0
      %4003 = vmatpush1.msra.mxu0 0.0
      %4004 = vmatprep.mubr.f32.mxu0 0.0
      %4005 = vmatmul.mubr.f32.gmra.mrb[0].mxu0 %v3935
      %v4006 = vpop.f32.mrb[0].mxu0
      %v4007 = vadd.f32 0.0, %v4006
      %v4008 = vpop.f32.mrb[0].mxu0
      %4009 = vmatprep.mubr.f32.mxu0 0.0
      %4010 = vmatmul.mubr.f32.gmra.mrb[0].mxu0 %v3938
      %v4011 = vpop.f32.mrb[0].mxu0
      %v4012 = vadd.f32 0.0, %v4011
      %v4013 = vpop.f32.mrb[0].mxu0
      %4014 = vdwg.mxu0
      %4015 = vrot.lane.b32.xlu0 %v595, 104
      %v4016 = vpop.permute.xlu0 %4015
      %4017 = vrot.lane.b32.xlu0 %v600, 104
      %v4018 = vpop.permute.xlu0 %4017
      %v4022 = vsel %vm970, %v3834, 0
      %v4025 = vsel %vm970, %v3836, 0
      %4027 = vmatprep.subr.mxu0 0.0
      %4028 = vmatpush1.msra.mxu0 %v4016
      %4029 = vmatprep.subr.mxu0 0.0
      %4030 = vmatpush1.msra.mxu0 %v4018
      %4031 = vmatprep.subr.mxu0 0.0
      %4032 = vmatpush1.msra.mxu0 0.0
      %4033 = vmatprep.subr.mxu0 0.0
      %4034 = vmatpush1.msra.mxu0 0.0
      %4035 = vmatprep.subr.mxu0 0.0
      %4036 = vmatpush1.msra.mxu0 0.0
      %4037 = vmatprep.subr.mxu0 0.0
      %4038 = vmatpush1.msra.mxu0 0.0
      %4039 = vmatprep.subr.mxu0 0.0
      %4040 = vmatpush1.msra.mxu0 0.0
      %4041 = vmatprep.subr.mxu0 0.0
      %4042 = vmatpush1.msra.mxu0 0.0
      %4043 = vmatprep.subr.mxu0 0.0
      %4044 = vmatpush1.msra.mxu0 0.0
      %4045 = vmatprep.subr.mxu0 0.0
      %4046 = vmatpush1.msra.mxu0 0.0
      %4047 = vmatprep.subr.mxu0 0.0
      %4048 = vmatpush1.msra.mxu0 0.0
      %4049 = vmatprep.subr.mxu0 0.0
      %4050 = vmatpush1.msra.mxu0 0.0
      %4051 = vmatprep.subr.mxu0 0.0
      %4052 = vmatpush1.msra.mxu0 0.0
      %4053 = vmatprep.subr.mxu0 0.0
      %4054 = vmatpush1.msra.mxu0 0.0
      %4055 = vmatprep.subr.mxu0 0.0
      %4056 = vmatpush1.msra.mxu0 0.0
      %4057 = vmatprep.subr.mxu0 0.0
      %4058 = vmatpush1.msra.mxu0 0.0
      %4059 = vmatprep.subr.mxu0 0.0
      %4060 = vmatpush1.msra.mxu0 0.0
      %4061 = vmatprep.subr.mxu0 0.0
      %4062 = vmatpush1.msra.mxu0 0.0
      %4063 = vmatprep.subr.mxu0 0.0
      %4064 = vmatpush1.msra.mxu0 0.0
      %4065 = vmatprep.subr.mxu0 0.0
      %4066 = vmatpush1.msra.mxu0 0.0
      %4067 = vmatprep.subr.mxu0 0.0
      %4068 = vmatpush1.msra.mxu0 0.0
      %4069 = vmatprep.subr.mxu0 0.0
      %4070 = vmatpush1.msra.mxu0 0.0
      %4071 = vmatprep.subr.mxu0 0.0
      %4072 = vmatpush1.msra.mxu0 0.0
      %4073 = vmatprep.subr.mxu0 0.0
      %4074 = vmatpush1.msra.mxu0 0.0
      %4075 = vmatprep.subr.mxu0 0.0
      %4076 = vmatpush1.msra.mxu0 0.0
      %4077 = vmatprep.subr.mxu0 0.0
      %4078 = vmatpush1.msra.mxu0 0.0
      %4079 = vmatprep.subr.mxu0 0.0
      %4080 = vmatpush1.msra.mxu0 0.0
      %4081 = vmatprep.subr.mxu0 0.0
      %4082 = vmatpush1.msra.mxu0 0.0
      %4083 = vmatprep.subr.mxu0 0.0
      %4084 = vmatpush1.msra.mxu0 0.0
      %4085 = vmatprep.subr.mxu0 0.0
      %4086 = vmatpush1.msra.mxu0 0.0
      %4087 = vmatprep.subr.mxu0 0.0
      %4088 = vmatpush1.msra.mxu0 0.0
      %4089 = vmatprep.subr.mxu0 0.0
      %4090 = vmatpush1.msra.mxu0 0.0
      %4091 = vmatprep.mubr.f32.mxu0 0.0
      %4092 = vmatmul.mubr.f32.gmra.mrb[0].mxu0 %v4022
      %v4093 = vpop.f32.mrb[0].mxu0
      %v4094 = vadd.f32 0.0, %v4093
      %v4095 = vpop.f32.mrb[0].mxu0
      %4096 = vmatprep.mubr.f32.mxu0 0.0
      %4097 = vmatmul.mubr.f32.gmra.mrb[0].mxu0 %v4025
      %v4098 = vpop.f32.mrb[0].mxu0
      %v4099 = vadd.f32 0.0, %v4098
      %v4100 = vpop.f32.mrb[0].mxu0
      %4101 = vdwg.mxu0
      %4102 = vrot.lane.b32.xlu0 %v605, 104
      %v4103 = vpop.permute.xlu0 %4102
      %4104 = vrot.lane.b32.xlu0 %v610, 104
      %v4105 = vpop.permute.xlu0 %4104
      %v4109 = vsel %vm970, %v3838, 0
      %v4112 = vsel %vm970, %v3840, 0
      %4114 = vmatprep.subr.mxu0 0.0
      %4115 = vmatpush1.msra.mxu0 %v4103
      %4116 = vmatprep.subr.mxu0 0.0
      %4117 = vmatpush1.msra.mxu0 %v4105
      %4118 = vmatprep.subr.mxu0 0.0
      %4119 = vmatpush1.msra.mxu0 0.0
      %4120 = vmatprep.subr.mxu0 0.0
      %4121 = vmatpush1.msra.mxu0 0.0
      %4122 = vmatprep.subr.mxu0 0.0
      %4123 = vmatpush1.msra.mxu0 0.0
      %4124 = vmatprep.subr.mxu0 0.0
      %4125 = vmatpush1.msra.mxu0 0.0
      %4126 = vmatprep.subr.mxu0 0.0
      %4127 = vmatpush1.msra.mxu0 0.0
      %4128 = vmatprep.subr.mxu0 0.0
      %4129 = vmatpush1.msra.mxu0 0.0
      %4130 = vmatprep.subr.mxu0 0.0
      %4131 = vmatpush1.msra.mxu0 0.0
      %4132 = vmatprep.subr.mxu0 0.0
      %4133 = vmatpush1.msra.mxu0 0.0
      %4134 = vmatprep.subr.mxu0 0.0
      %4135 = vmatpush1.msra.mxu0 0.0
      %4136 = vmatprep.subr.mxu0 0.0
      %4137 = vmatpush1.msra.mxu0 0.0
      %4138 = vmatprep.subr.mxu0 0.0
      %4139 = vmatpush1.msra.mxu0 0.0
      %4140 = vmatprep.subr.mxu0 0.0
      %4141 = vmatpush1.msra.mxu0 0.0
      %4142 = vmatprep.subr.mxu0 0.0
      %4143 = vmatpush1.msra.mxu0 0.0
      %4144 = vmatprep.subr.mxu0 0.0
      %4145 = vmatpush1.msra.mxu0 0.0
      %4146 = vmatprep.subr.mxu0 0.0
      %4147 = vmatpush1.msra.mxu0 0.0
      %4148 = vmatprep.subr.mxu0 0.0
      %4149 = vmatpush1.msra.mxu0 0.0
      %4150 = vmatprep.subr.mxu0 0.0
      %4151 = vmatpush1.msra.mxu0 0.0
      %4152 = vmatprep.subr.mxu0 0.0
      %4153 = vmatpush1.msra.mxu0 0.0
      %4154 = vmatprep.subr.mxu0 0.0
      %4155 = vmatpush1.msra.mxu0 0.0
      %4156 = vmatprep.subr.mxu0 0.0
      %4157 = vmatpush1.msra.mxu0 0.0
      %4158 = vmatprep.subr.mxu0 0.0
      %4159 = vmatpush1.msra.mxu0 0.0
      %4160 = vmatprep.subr.mxu0 0.0
      %4161 = vmatpush1.msra.mxu0 0.0
      %4162 = vmatprep.subr.mxu0 0.0
      %4163 = vmatpush1.msra.mxu0 0.0
      %4164 = vmatprep.subr.mxu0 0.0
      %4165 = vmatpush1.msra.mxu0 0.0
      %4166 = vmatprep.subr.mxu0 0.0
      %4167 = vmatpush1.msra.mxu0 0.0
      %4168 = vmatprep.subr.mxu0 0.0
      %4169 = vmatpush1.msra.mxu0 0.0
      %4170 = vmatprep.subr.mxu0 0.0
      %4171 = vmatpush1.msra.mxu0 0.0
      %4172 = vmatprep.subr.mxu0 0.0
      %4173 = vmatpush1.msra.mxu0 0.0
      %4174 = vmatprep.subr.mxu0 0.0
      %4175 = vmatpush1.msra.mxu0 0.0
      %4176 = vmatprep.subr.mxu0 0.0
      %4177 = vmatpush1.msra.mxu0 0.0
      %4178 = vmatprep.mubr.f32.mxu0 0.0
      %4179 = vmatmul.mubr.f32.gmra.mrb[0].mxu0 %v4109
      %v4180 = vpop.f32.mrb[0].mxu0
      %v4181 = vadd.f32 0.0, %v4180
      %v4182 = vpop.f32.mrb[0].mxu0
      %4183 = vmatprep.mubr.f32.mxu0 0.0
      %4184 = vmatmul.mubr.f32.gmra.mrb[0].mxu0 %v4112
      %v4185 = vpop.f32.mrb[0].mxu0
      %v4186 = vadd.f32 0.0, %v4185
      %v4187 = vpop.f32.mrb[0].mxu0
      %4188 = vdwg.mxu0
      %v4189 = vld [vmem:[%s3 + $0x18] sm:$0xff]
      %v4191 = vsel %vm621, %v3920, 0
      %v4194 = vsel %vm621, %v3925, 0
      %v4197 = vsel %vm621, %v4007, 0
      %v4200 = vsel %vm621, %v4012, 0
      %v4203 = vsel %vm621, %v4094, 0
      %v4206 = vsel %vm621, %v4099, 0
      %v4209 = vsel %vm621, %v4181, 0
      %v4212 = vsel %vm621, %v4186, 0
      %4214 = vmatprep.subr.mxu0 0.0
      %4215 = vmatpush1.msra.mxu0 %v4189
      %4216 = vmatprep.subr.mxu0 0.0
      %4217 = vmatpush1.msra.mxu0 0.0
      %4218 = vmatprep.subr.mxu0 0.0
      %4219 = vmatpush1.msra.mxu0 0.0
      %4220 = vmatprep.subr.mxu0 0.0
      %4221 = vmatpush1.msra.mxu0 0.0
      %4222 = vmatprep.subr.mxu0 0.0
      %4223 = vmatpush1.msra.mxu0 0.0
      %4224 = vmatprep.subr.mxu0 0.0
      %4225 = vmatpush1.msra.mxu0 0.0
      %4226 = vmatprep.subr.mxu0 0.0
      %4227 = vmatpush1.msra.mxu0 0.0
      %4228 = vmatprep.subr.mxu0 0.0
      %4229 = vmatpush1.msra.mxu0 0.0
      %4230 = vmatprep.subr.mxu0 0.0
      %4231 = vmatpush1.msra.mxu0 0.0
      %4232 = vmatprep.subr.mxu0 0.0
      %4233 = vmatpush1.msra.mxu0 0.0
      %4234 = vmatprep.subr.mxu0 0.0
      %4235 = vmatpush1.msra.mxu0 0.0
      %4236 = vmatprep.subr.mxu0 0.0
      %4237 = vmatpush1.msra.mxu0 0.0
      %4238 = vmatprep.subr.mxu0 0.0
      %4239 = vmatpush1.msra.mxu0 0.0
      %4240 = vmatprep.subr.mxu0 0.0
      %4241 = vmatpush1.msra.mxu0 0.0
      %4242 = vmatprep.subr.mxu0 0.0
      %4243 = vmatpush1.msra.mxu0 0.0
      %4244 = vmatprep.subr.mxu0 0.0
      %4245 = vmatpush1.msra.mxu0 0.0
      %4246 = vmatprep.subr.mxu0 0.0
      %4247 = vmatpush1.msra.mxu0 0.0
      %4248 = vmatprep.subr.mxu0 0.0
      %4249 = vmatpush1.msra.mxu0 0.0
      %4250 = vmatprep.subr.mxu0 0.0
      %4251 = vmatpush1.msra.mxu0 0.0
      %4252 = vmatprep.subr.mxu0 0.0
      %4253 = vmatpush1.msra.mxu0 0.0
      %4254 = vmatprep.subr.mxu0 0.0
      %4255 = vmatpush1.msra.mxu0 0.0
      %4256 = vmatprep.subr.mxu0 0.0
      %4257 = vmatpush1.msra.mxu0 0.0
      %4258 = vmatprep.subr.mxu0 0.0
      %4259 = vmatpush1.msra.mxu0 0.0
      %4260 = vmatprep.subr.mxu0 0.0
      %4261 = vmatpush1.msra.mxu0 0.0
      %4262 = vmatprep.subr.mxu0 0.0
      %4263 = vmatpush1.msra.mxu0 0.0
      %4264 = vmatprep.subr.mxu0 0.0
      %4265 = vmatpush1.msra.mxu0 0.0
      %4266 = vmatprep.subr.mxu0 0.0
      %4267 = vmatpush1.msra.mxu0 0.0
      %4268 = vmatprep.subr.mxu0 0.0
      %4269 = vmatpush1.msra.mxu0 0.0
      %4270 = vmatprep.subr.mxu0 0.0
      %4271 = vmatpush1.msra.mxu0 0.0
      %4272 = vmatprep.subr.mxu0 0.0
      %4273 = vmatpush1.msra.mxu0 0.0
      %4274 = vmatprep.subr.mxu0 0.0
      %4275 = vmatpush1.msra.mxu0 0.0
      %4276 = vmatprep.subr.mxu0 0.0
      %4277 = vmatpush1.msra.mxu0 0.0
      %4278 = vmatprep.mubr.f32.mxu0 0.0
      %4279 = vmatmul.mubr.f32.gmra.mrb[0].mxu0 %v4191
      %v4280 = vpop.f32.mrb[0].mxu0
      %v4281 = vadd.f32 0.0, %v4280
      %v4282 = vpop.f32.mrb[0].mxu0
      %4283 = vmatprep.mubr.f32.mxu0 0.0
      %4284 = vmatmul.mubr.f32.gmra.mrb[0].mxu0 %v4194
      %v4285 = vpop.f32.mrb[0].mxu0
      %v4286 = vadd.f32 0.0, %v4285
      %v4287 = vpop.f32.mrb[0].mxu0
      %4288 = vmatprep.mubr.f32.mxu0 0.0
      %4289 = vmatmul.mubr.f32.gmra.mrb[0].mxu0 %v4197
      %v4290 = vpop.f32.mrb[0].mxu0
      %v4291 = vadd.f32 0.0, %v4290
      %v4292 = vpop.f32.mrb[0].mxu0
      %4293 = vmatprep.mubr.f32.mxu0 0.0
      %4294 = vmatmul.mubr.f32.gmra.mrb[0].mxu0 %v4200
      %v4295 = vpop.f32.mrb[0].mxu0
      %v4296 = vadd.f32 0.0, %v4295
      %v4297 = vpop.f32.mrb[0].mxu0
      %4298 = vmatprep.mubr.f32.mxu0 0.0
      %4299 = vmatmul.mubr.f32.gmra.mrb[0].mxu0 %v4203
      %v4300 = vpop.f32.mrb[0].mxu0
      %v4301 = vadd.f32 0.0, %v4300
      %v4302 = vpop.f32.mrb[0].mxu0
      %4303 = vmatprep.mubr.f32.mxu0 0.0
      %4304 = vmatmul.mubr.f32.gmra.mrb[0].mxu0 %v4206
      %v4305 = vpop.f32.mrb[0].mxu0
      %v4306 = vadd.f32 0.0, %v4305
      %v4307 = vpop.f32.mrb[0].mxu0
      %4308 = vmatprep.mubr.f32.mxu0 0.0
      %4309 = vmatmul.mubr.f32.gmra.mrb[0].mxu0 %v4209
      %v4310 = vpop.f32.mrb[0].mxu0
      %v4311 = vadd.f32 0.0, %v4310
      %v4312 = vpop.f32.mrb[0].mxu0
      %4313 = vmatprep.mubr.f32.mxu0 0.0
      %4314 = vmatmul.mubr.f32.gmra.mrb[0].mxu0 %v4212
      %v4315 = vpop.f32.mrb[0].mxu0
      %v4316 = vadd.f32 0.0, %v4315
      %v4317 = vpop.f32.mrb[0].mxu0
      %4318 = vdwg.mxu0
      %v4319 = vadd.f32 %v3381, %v4281
      %v4320 = vadd.f32 %v3382, %v4286
      %v4321 = vadd.f32 %v3383, %v4291
      %v4322 = vadd.f32 %v3384, %v4296
      %v4323 = vadd.f32 %v3385, %v4301
      %v4324 = vadd.f32 %v3386, %v4306
      %v4325 = vadd.f32 %v3387, %v4311
      %v4326 = vadd.f32 %v3388, %v4316
      %v4327 = vld [vmem:[%s4] sm:$0x1]
      %v4329 = vlaneseq
      %v4330 = vshrl.u32 %v4329, 7
      %v4331 = vsub.s32 0, %v4330
      %v4332 = vrot.slane %v4327, %v4331
      %v4334 = vadd.f32 %v4319, %v4332
      %v4335 = vadd.f32 %v4320, %v4332
      %v4336 = vadd.f32 %v4321, %v4332
      %v4337 = vadd.f32 %v4322, %v4332
      %v4338 = vadd.f32 %v4323, %v4332
      %v4339 = vadd.f32 %v4324, %v4332
      %v4340 = vadd.f32 %v4325, %v4332
      %v4341 = vadd.f32 %v4326, %v4332
      %4342 = vst.msk [vmem:[%s226] sm:$0xff] %vm247, %v4334
      %4343 = vst.msk [vmem:[%s226 + $0x8] sm:$0xff] %vm247, %v4335
      %4344 = vst.msk [vmem:[%s226 + $0x10] sm:$0xff] %vm247, %v4336
      %4345 = vst.msk [vmem:[%s226 + $0x18] sm:$0xff] %vm247, %v4337
      %4346 = vst.msk [vmem:[%s226 + $0x20] sm:$0xff] %vm247, %v4338
      %4347 = vst.msk [vmem:[%s226 + $0x28] sm:$0xff] %vm247, %v4339
      %4348 = vst.msk [vmem:[%s226 + $0x30] sm:$0xff] %vm247, %v4340
      %4349 = vst.msk [vmem:[%s226 + $0x38] sm:$0xff] %vm247, %v4341
      %s4350 = smul.u32 8, %s16
      %p4351 = scmp.lt.s32.totalorder %s4350, 15
      %s4352 = scalar_select %p4351, %s4350, 15
      %s4353 = smul.addr %s4352, 8
      %s4354 = scalar_lea.vmem %s5, %s4353
      // Predicated region
      $region41: #{tpu_custom_call.1} parent=39 // pred_check
        %p4355 = pneg %p144
      $region42: #{tpu_custom_call.1} parent=39 // pred_check_branch
        %4357 = sbr.rel (%p4355) target = $region44
      $region43: #{tpu_custom_call.1} parent=39 // pred_region
        %s4358 = smul.u32 8, %s16
      $region44: #{tpu_custom_call.1} parent=39 // pred_fallthru
        _
    $region40: #{tpu_custom_call.1} parent=5 // pred_fallthru
      _
    %p4359 = scmp.le.s32.totalorder 2, %s11
    // Predicated region
    $region45: #{tpu_custom_call.1} parent=5 // pred_check
      %p4360 = pneg %p4359
    $region46: #{tpu_custom_call.1} parent=5 // pred_check_branch
      %4362 = sbr.rel (%p4360) target = $region48
    $region47: #{tpu_custom_call.1} parent=5 // pred_region
      %s4363 = ssub.s32 %s11, 2
      // Predicated region
      $region49: #{tpu_custom_call.1} parent=47 // pred_check
        %p4364 = pneg %p150
      $region50: #{tpu_custom_call.1} parent=47 // pred_check_branch
        %4366 = sbr.rel (%p4364) target = $region52
      $region51: #{tpu_custom_call.1} parent=47 // pred_region
        %s4367 = smul.u32 8, %s17
        %p4368 = scmp.lt.s32.totalorder %s4367, 15
        %s4369 = scalar_select %p4368, %s4367, 15
        %s4370 = smul.addr %s4369, 8
        %s4371 = scalar_lea.vmem %s5, %s4370
      $region52: #{tpu_custom_call.1} parent=47 // pred_fallthru
        _
    $region48: #{tpu_custom_call.1} parent=5 // pred_fallthru
      _
  $region6: #{tpu_custom_call.1} parent=0 // loop_footer
    %s15 = sadd.s32 1, %s11
  $region7: #{tpu_custom_call.1} parent=0 // loop_footer_branch
    %10 = sbr.rel target = $region3
  $region8: #{tpu_custom_call.1} parent=0 // loop_exit
    _

</llo_original>
